<compile_context>
chip_gen: v7x
topology: tpu7x:2x2x1
jax: 0.10.0
libtpu: 0.0.40
codegen_flags: <defaults>
</compile_context>

<pallas_src>
import math
import jax
import jax.numpy as jnp
from jax.experimental import pallas as pl
from jax.experimental.pallas import tpu as pltpu

H_dim = 128
Z_dim = 100
m_size = 50


def _round_up(n, m):
    return (n + m - 1) // m * m


def _generator_kernel(x_ref, w1_ref, b1_ref, w2_ref, b2_ref, out_ref):
    # Layer 1: (tm, Z=100) f32 -> bf16 MXU operand; f32 accumulation on the MXU.
    x = x_ref[...].astype(jnp.bfloat16)
    h = jnp.dot(x, w1_ref[...], preferred_element_type=jnp.float32)
    # f32 bias-add + ReLU (v5e-safe; HBM-bound kernel, so the bf16 VALU path on
    # v6e/v7x would be an in-the-noise win).
    h = jnp.maximum(h + b1_ref[...], 0.0)
    # Layer 2: (tm, 128) bf16 @ (128, X=200) bf16 -> f32 accumulation on the MXU.
    y = jnp.dot(h.astype(jnp.bfloat16), w2_ref[...],
                preferred_element_type=jnp.float32)
    y = y + b2_ref[...]
    # sigmoid(y) = 1 / (1 + exp(-y)); exp + approx reciprocal both go to the EUP slot.
    sig = pl.reciprocal(1.0 + jnp.exp(-y), approx=True)
    # bf16 store: halves the dominant HBM traffic term.
    out_ref[...] = sig.astype(out_ref.dtype)


def _choose_tm(B, tile_m):
    """Pick a batch tile: big (HBM-roofline friendly), sublane-aligned, and giving
    >= 2 grid steps for large B so v7x's two TensorCores both get work."""
    tm = min(tile_m, _round_up(B, 16))
    if tm >= B and B >= 512:
        tm = pl.cdiv(B, 2)
    return max(16, _round_up(tm, 16))


def generator_forward(x, w1, b1, w2, b2, *, tile_m=1024):
    """Fused Linear(Z->H) -> ReLU -> Linear(H->X) -> Sigmoid.

    x:  (B, Z) f32   -- consumed directly, no wrapper-side pad/cast pass
    w1: (Z, H) bf16, b1: (1, H) f32
    w2: (H, X) bf16, b2: (1, X) f32
    Returns (B, X) bf16.
    """
    B, Z = x.shape
    Zw, H = w1.shape
    Hw, X = w2.shape
    assert Z == Zw and H == Hw and b1.shape == (1, H) and b2.shape == (1, X)

    tm = _choose_tm(B, tile_m)
    # cdiv grid: no round-up-to-tile batch padding; a partial last block (if any)
    # only computes rows whose stores Pallas drops.
    grid = (pl.cdiv(B, tm),)

    cost = pl.CostEstimate(
        flops=2 * B * (Z * H + H * X),
        transcendentals=B * X,
        bytes_accessed=(x.size * x.dtype.itemsize
                        + w1.size * 2 + b1.size * 4
                        + w2.size * 2 + b2.size * 4
                        + B * X * 2),
    )

    return pl.pallas_call(
        _generator_kernel,
        out_shape=jax.ShapeDtypeStruct((B, X), jnp.bfloat16),
        grid=grid,
        in_specs=[
            pl.BlockSpec((tm, Z), lambda i: (i, 0)),   # per-step activation tile
            pl.BlockSpec((Zw, H), lambda i: (0, 0)),   # weights/biases: constant
            pl.BlockSpec((1, H), lambda i: (0, 0)),    #   index -> DMA'd once and
            pl.BlockSpec((Hw, X), lambda i: (0, 0)),   #   VMEM-resident across steps
            pl.BlockSpec((1, X), lambda i: (0, 0)),
        ],
        out_specs=pl.BlockSpec((tm, X), lambda i: (i, 0)),
        compiler_params=pltpu.CompilerParams(
            dimension_semantics=("parallel",)),        # megacore split on v7x
        cost_estimate=cost,
    )(x, w1, b1, w2, b2)


def init_generator_params(key, X_dim):
    """PyTorch nn.Linear default init: U(-1/sqrt(fan_in), 1/sqrt(fan_in)).

    Returns (f32 reference params, kernel params with bf16 weights). Weights are
    stored [in_features, out_features] (transposed vs PyTorch)."""
    k1, k2, k3, k4 = jax.random.split(key, 4)
    bound1 = 1.0 / math.sqrt(Z_dim)
    bound2 = 1.0 / math.sqrt(H_dim)
    w1 = jax.random.uniform(k1, (Z_dim, H_dim), jnp.float32, -bound1, bound1)
    b1 = jax.random.uniform(k2, (1, H_dim), jnp.float32, -bound1, bound1)
    w2 = jax.random.uniform(k3, (H_dim, X_dim), jnp.float32, -bound2, bound2)
    b2 = jax.random.uniform(k4, (1, X_dim), jnp.float32, -bound2, bound2)
    kernel_params = (w1.astype(jnp.bfloat16), b1, w2.astype(jnp.bfloat16), b2)
    return (w1, b1, w2, b2), kernel_params


def reference_forward(x, w1, b1, w2, b2):
    h = jnp.maximum(x @ w1 + b1, 0.0)
    return jax.nn.sigmoid(h @ w2 + b2)


if __name__ == "__main__":
    # Batched latent vectors so the MXU + batch grid are exercised: B=4096 with
    # tile_m=1024 gives grid=4 (even, >=2: both v7x TensorCores busy), ~85% of
    # HBM roofline per the measured tile-size data; still tiny in absolute size.
    B = 4096
    X_dim = 2 * m_size * 2  # 200, as consumed by the module's get_part_of_output

    key = jax.random.PRNGKey(0)
    kx, kp = jax.random.split(key)
    x = jax.random.normal(kx, (B, Z_dim), dtype=jnp.float32)
    (w1, b1, w2, b2), (w1k, b1k, w2k, b2k) = init_generator_params(kp, X_dim)

    out = generator_forward(x, w1k, b1k, w2k, b2k, tile_m=1024)
    out = jax.block_until_ready(out)
    assert out.shape == (B, X_dim), out.shape
    assert out.dtype == jnp.bfloat16, out.dtype

    ref = reference_forward(x, w1, b1, w2, b2)
    # bf16 matmul operands + bf16 output + approx reciprocal -> relaxed tolerance
    # vs the f32 reference (sigmoid outputs live in [0,1]).
    err = float(jnp.max(jnp.abs(out.astype(jnp.float32) - ref)))
    assert err < 3e-2, err

    print("KERNEL_OK")
</pallas_src>

<mosaic_0001>
module attributes {stable_mosaic.version = 11 : i64} {
  func.func @_generator_kernel(%arg0: i32, %arg1: memref<1024x100xf32, #tpu.memory_space<vmem>>, %arg2: memref<100x128xbf16, #tpu.memory_space<vmem>>, %arg3: memref<1x128xf32, #tpu.memory_space<vmem>>, %arg4: memref<128x200xbf16, #tpu.memory_space<vmem>>, %arg5: memref<1x200xf32, #tpu.memory_space<vmem>>, %arg6: memref<1024x200xbf16, #tpu.memory_space<vmem>>) attributes {dimension_semantics = [#tpu.dimension_semantics<parallel>], iteration_bounds = array<i64: 4>, scalar_prefetch = 0 : i64, scratch_operands = 0 : i64, tpu.core_type = #tpu.core_type<tc>, window_params = [{transform_indices = @transform_0, window_bounds = array<i64: 1024, 100>}, {pipeline_mode = #tpu.pipeline_mode<synchronous>, transform_indices = @transform_1, window_bounds = array<i64: 100, 128>}, {pipeline_mode = #tpu.pipeline_mode<synchronous>, transform_indices = @transform_2, window_bounds = array<i64: 1, 128>}, {pipeline_mode = #tpu.pipeline_mode<synchronous>, transform_indices = @transform_3, window_bounds = array<i64: 128, 200>}, {pipeline_mode = #tpu.pipeline_mode<synchronous>, transform_indices = @transform_4, window_bounds = array<i64: 1, 200>}, {transform_indices = @transform_5, window_bounds = array<i64: 1024, 200>}]} {
    %c0 = arith.constant 0 : index
    %c0_0 = arith.constant 0 : index
    %0 = vector.load %arg1[%c0, %c0_0] : memref<1024x100xf32, #tpu.memory_space<vmem>>, vector<1024x100xf32>
    %1 = arith.truncf %0 : vector<1024x100xf32> to vector<1024x100xbf16>
    %c0_1 = arith.constant 0 : index
    %c0_2 = arith.constant 0 : index
    %2 = vector.load %arg2[%c0_1, %c0_2] : memref<100x128xbf16, #tpu.memory_space<vmem>>, vector<100x128xbf16>
    %cst = arith.constant dense<0.000000e+00> : vector<1024x128xf32>
    %3 = tpu.matmul %1, %2, %cst {dimension_numbers = #tpu.dot_dimension_numbers<[1], [0], [0], [1], [0, 0, 1, 1], [], []>} : vector<1024x100xbf16>, vector<100x128xbf16>, vector<1024x128xf32> -> vector<1024x128xf32>
    %c0_3 = arith.constant 0 : index
    %c0_4 = arith.constant 0 : index
    %4 = vector.load %arg3[%c0_3, %c0_4] : memref<1x128xf32, #tpu.memory_space<vmem>>, vector<1x128xf32>
    %5 = vector.broadcast %4 : vector<1x128xf32> to vector<1024x128xf32>
    %6 = arith.addf %3, %5 : vector<1024x128xf32>
    %cst_5 = arith.constant 0.000000e+00 : f32
    %7 = vector.broadcast %cst_5 : f32 to vector<1024x128xf32>
    %8 = arith.maximumf %6, %7 : vector<1024x128xf32>
    %9 = arith.truncf %8 : vector<1024x128xf32> to vector<1024x128xbf16>
    %c0_6 = arith.constant 0 : index
    %c0_7 = arith.constant 0 : index
    %10 = vector.load %arg4[%c0_6, %c0_7] : memref<128x200xbf16, #tpu.memory_space<vmem>>, vector<128x200xbf16>
    %cst_8 = arith.constant dense<0.000000e+00> : vector<1024x200xf32>
    %11 = tpu.matmul %9, %10, %cst_8 {dimension_numbers = #tpu.dot_dimension_numbers<[1], [0], [0], [1], [0, 0, 1, 1], [], []>} : vector<1024x128xbf16>, vector<128x200xbf16>, vector<1024x200xf32> -> vector<1024x200xf32>
    %c0_9 = arith.constant 0 : index
    %c0_10 = arith.constant 0 : index
    %12 = vector.load %arg5[%c0_9, %c0_10] : memref<1x200xf32, #tpu.memory_space<vmem>>, vector<1x200xf32>
    %13 = vector.broadcast %12 : vector<1x200xf32> to vector<1024x200xf32>
    %14 = arith.addf %11, %13 : vector<1024x200xf32>
    %cst_11 = arith.constant 0.000000e+00 : f32
    %15 = vector.broadcast %cst_11 : f32 to vector<1024x200xf32>
    %16 = arith.subf %15, %14 : vector<1024x200xf32>
    %17 = math.exp %16 : vector<1024x200xf32>
    %cst_12 = arith.constant 1.000000e+00 : f32
    %18 = vector.broadcast %cst_12 : f32 to vector<1024x200xf32>
    %19 = arith.addf %18, %17 : vector<1024x200xf32>
    %20 = tpu.reciprocal %19 {approx = true} : vector<1024x200xf32> -> vector<1024x200xf32>
    %21 = arith.truncf %20 : vector<1024x200xf32> to vector<1024x200xbf16>
    %c0_13 = arith.constant 0 : index
    %c0_14 = arith.constant 0 : index
    %22 = vector.load %arg6[%c0_13, %c0_14] : memref<1024x200xbf16, #tpu.memory_space<vmem>>, vector<1024x200xbf16>
    tpu.vector_store %arg6[%c0_13, %c0_14], %21 {strides = array<i32>} : memref<1024x200xbf16, #tpu.memory_space<vmem>>, vector<1024x200xbf16>,
    return
  }
  func.func @transform_0(%arg0: i32) -> (i32, i32) {
    %c0_i32 = arith.constant 0 : i32
    %c0_i32_0 = arith.constant 0 : i32
    return %arg0, %c0_i32 : i32, i32
  }
  func.func @transform_1(%arg0: i32) -> (i32, i32) {
    %c0_i32 = arith.constant 0 : i32
    %c0_i32_0 = arith.constant 0 : i32
    %c0_i32_1 = arith.constant 0 : i32
    return %c0_i32, %c0_i32_0 : i32, i32
  }
  func.func @transform_2(%arg0: i32) -> (i32, i32) {
    %c0_i32 = arith.constant 0 : i32
    %c0_i32_0 = arith.constant 0 : i32
    %c0_i32_1 = arith.constant 0 : i32
    return %c0_i32, %c0_i32_0 : i32, i32
  }
  func.func @transform_3(%arg0: i32) -> (i32, i32) {
    %c0_i32 = arith.constant 0 : i32
    %c0_i32_0 = arith.constant 0 : i32
    %c0_i32_1 = arith.constant 0 : i32
    return %c0_i32, %c0_i32_0 : i32, i32
  }
  func.func @transform_4(%arg0: i32) -> (i32, i32) {
    %c0_i32 = arith.constant 0 : i32
    %c0_i32_0 = arith.constant 0 : i32
    %c0_i32_1 = arith.constant 0 : i32
    return %c0_i32, %c0_i32_0 : i32, i32
  }
  func.func @transform_5(%arg0: i32) -> (i32, i32) {
    %c0_i32 = arith.constant 0 : i32
    %c0_i32_0 = arith.constant 0 : i32
    return %arg0, %c0_i32 : i32, i32
  }
}

</mosaic_0001>

<llo_original>
// kernel: tpu_custom_call.1
$region0: #{tpu_custom_call.1}
  #allocation0 [shape = 'u32[]', space=smem, size = 0x4, offset = 0x4, fixed_abs, tag = 'smem constant byte address 0x4 - core index']
  #allocation1 [shape = 'u32[144,128]{1,0:T(1,128)}', space=vmem, size = 0x12000, scoped, tag = 'internal scratch']
  %s0 = inlined_call_operand.vmem [shape: f32[4096,100], index: 0, kind: input, shape index: {}]
  %s1 = inlined_call_operand.vmem [shape: bf16[100,128], index: 1, kind: input, shape index: {}]
  %s2 = inlined_call_operand.vmem [shape: f32[1,128], index: 2, kind: input, shape index: {}]
  %s3 = inlined_call_operand.vmem [shape: bf16[128,200], index: 3, kind: input, shape index: {}]
  %s4 = inlined_call_operand.vmem [shape: f32[1,200], index: 4, kind: input, shape index: {}]
  %s5 = inlined_call_operand.vmem [shape: bf16[4096,200], index: 5, kind: output, shape index: {}]
  %s6 = sld [smem:[#allocation0]]
  $region53: #{tpu_custom_call.1} parent=0
    _
  %s8 = ssub.s32 1, %s6
  %s9 = scalar_select 0, %s8, %s6
  loop: start=0, step=1, limit=6
  $region2: #{tpu_custom_call.1} parent=0 // loop_pre_header
    _
  $region3: #{tpu_custom_call.1} parent=0 // loop_header
    %s11 = sphi 0, %s15
    %p12 = scmp.ge.s32.totalorder %s11, 6
    %s21 = sphi 0, %s23
    %s24 = sphi 0, %s21
    %s25 = sphi 0, %s24
    %s41 = sphi 0, %s25
    %s45 = sphi 0, %s45
    %s47 = sphi 0, %s45
    %s48 = sphi 0, %s47
    %s62 = sphi 0, %s48
    %s66 = sphi 0, %s66
    %s68 = sphi 0, %s66
    %s69 = sphi 0, %s68
    %s83 = sphi 0, %s69
    %s87 = sphi 0, %s87
    %s89 = sphi 0, %s87
    %s90 = sphi 0, %s89
    %s104 = sphi 0, %s90
    %s108 = sphi 0, %s108
    %s110 = sphi 0, %s108
    %s111 = sphi 0, %s110
    %s125 = sphi 0, %s111
    %s131 = sphi 0, %s133
    %s134 = sphi 0, %s131
    %s135 = sphi 0, %s134
    %s151 = sphi 0, %s135
  $region4: #{tpu_custom_call.1} parent=0 // loop_header_branch
    %14 = sbr.rel (%p12) target = $region8
  $region5: #{tpu_custom_call.1} parent=0 // loop_body
    %s16 = ssub.s32 %s11, 1
    %s17 = ssub.s32 %s11, 2
    %s18 = sadd.s32 %s11, 1
    %s19 = ssub.s32 %s11, %s18
    %p20 = scmp.eq.s32.totalorder %s19, 0
    %s22 = sadd.s32 %s21, 1
    %s23 = scalar_select %p20, %s21, %s22
    %p26 = pneg %p20
    %p27 = scmp.eq.s32.totalorder %s11, 3
    %p28 = por %p26, %p27
    %p29 = scmp.ne.s32.totalorder %s21, %s24
    %p30 = scmp.eq.s32.totalorder %s11, 0
    %p31 = por %p29, %p30
    %p32 = scmp.ne.s32.totalorder %s21, %s24
    %p33 = scmp.eq.s32.totalorder %s16, 3
    %p34 = por %p32, %p33
    %p35 = scmp.ne.s32.totalorder %s24, %s25
    %p36 = scmp.eq.s32.totalorder %s16, 0
    %p37 = por %p35, %p36
    %p38 = scmp.ne.s32.totalorder %s24, %s25
    %p39 = scmp.eq.s32.totalorder %s17, 3
    %p40 = por %p38, %p39
    %p42 = scmp.ne.s32.totalorder %s25, %s41
    %p43 = scmp.eq.s32.totalorder %s17, 0
    %p44 = por %p42, %p43
    %s46 = sadd.s32 %s45, 1
    %p49 = scmp.eq.s32.totalorder %s11, 3
    %p50 = scmp.ne.s32.totalorder %s45, %s47
    %p51 = scmp.eq.s32.totalorder %s11, 0
    %p52 = por %p50, %p51
    %p53 = scmp.ne.s32.totalorder %s45, %s47
    %p54 = scmp.eq.s32.totalorder %s16, 3
    %p55 = por %p53, %p54
    %p56 = scmp.ne.s32.totalorder %s47, %s48
    %p57 = scmp.eq.s32.totalorder %s16, 0
    %p58 = por %p56, %p57
    %p59 = scmp.ne.s32.totalorder %s47, %s48
    %p60 = scmp.eq.s32.totalorder %s17, 3
    %p61 = por %p59, %p60
    %p63 = scmp.ne.s32.totalorder %s48, %s62
    %p64 = scmp.eq.s32.totalorder %s17, 0
    %p65 = por %p63, %p64
    %s67 = sadd.s32 %s66, 1
    %p70 = scmp.eq.s32.totalorder %s11, 3
    %p71 = scmp.ne.s32.totalorder %s66, %s68
    %p72 = scmp.eq.s32.totalorder %s11, 0
    %p73 = por %p71, %p72
    %p74 = scmp.ne.s32.totalorder %s66, %s68
    %p75 = scmp.eq.s32.totalorder %s16, 3
    %p76 = por %p74, %p75
    %p77 = scmp.ne.s32.totalorder %s68, %s69
    %p78 = scmp.eq.s32.totalorder %s16, 0
    %p79 = por %p77, %p78
    %p80 = scmp.ne.s32.totalorder %s68, %s69
    %p81 = scmp.eq.s32.totalorder %s17, 3
    %p82 = por %p80, %p81
    %p84 = scmp.ne.s32.totalorder %s69, %s83
    %p85 = scmp.eq.s32.totalorder %s17, 0
    %p86 = por %p84, %p85
    %s88 = sadd.s32 %s87, 1
    %p91 = scmp.eq.s32.totalorder %s11, 3
    %p92 = scmp.ne.s32.totalorder %s87, %s89
    %p93 = scmp.eq.s32.totalorder %s11, 0
    %p94 = por %p92, %p93
    %p95 = scmp.ne.s32.totalorder %s87, %s89
    %p96 = scmp.eq.s32.totalorder %s16, 3
    %p97 = por %p95, %p96
    %p98 = scmp.ne.s32.totalorder %s89, %s90
    %p99 = scmp.eq.s32.totalorder %s16, 0
    %p100 = por %p98, %p99
    %p101 = scmp.ne.s32.totalorder %s89, %s90
    %p102 = scmp.eq.s32.totalorder %s17, 3
    %p103 = por %p101, %p102
    %p105 = scmp.ne.s32.totalorder %s90, %s104
    %p106 = scmp.eq.s32.totalorder %s17, 0
    %p107 = por %p105, %p106
    %s109 = sadd.s32 %s108, 1
    %p112 = scmp.eq.s32.totalorder %s11, 3
    %p113 = scmp.ne.s32.totalorder %s108, %s110
    %p114 = scmp.eq.s32.totalorder %s11, 0
    %p115 = por %p113, %p114
    %p116 = scmp.ne.s32.totalorder %s108, %s110
    %p117 = scmp.eq.s32.totalorder %s16, 3
    %p118 = por %p116, %p117
    %p119 = scmp.ne.s32.totalorder %s110, %s111
    %p120 = scmp.eq.s32.totalorder %s16, 0
    %p121 = por %p119, %p120
    %p122 = scmp.ne.s32.totalorder %s110, %s111
    %p123 = scmp.eq.s32.totalorder %s17, 3
    %p124 = por %p122, %p123
    %p126 = scmp.ne.s32.totalorder %s111, %s125
    %p127 = scmp.eq.s32.totalorder %s17, 0
    %p128 = por %p126, %p127
    %s129 = ssub.s32 %s11, %s18
    %p130 = scmp.eq.s32.totalorder %s129, 0
    %s132 = sadd.s32 %s131, 1
    %s133 = scalar_select %p130, %s131, %s132
    %p136 = pneg %p130
    %p137 = scmp.eq.s32.totalorder %s11, 3
    %p138 = por %p136, %p137
    %p139 = scmp.ne.s32.totalorder %s131, %s134
    %p140 = scmp.eq.s32.totalorder %s11, 0
    %p141 = por %p139, %p140
    %p142 = scmp.ne.s32.totalorder %s131, %s134
    %p143 = scmp.eq.s32.totalorder %s16, 3
    %p144 = por %p142, %p143
    %p145 = scmp.ne.s32.totalorder %s134, %s135
    %p146 = scmp.eq.s32.totalorder %s16, 0
    %p147 = por %p145, %p146
    %p148 = scmp.ne.s32.totalorder %s134, %s135
    %p149 = scmp.eq.s32.totalorder %s17, 3
    %p150 = por %p148, %p149
    %p152 = scmp.ne.s32.totalorder %s135, %s151
    %p153 = scmp.eq.s32.totalorder %s17, 0
    %p154 = por %p152, %p153
    %p155 = scmp.le.s32.totalorder 1, %s11
    %p156 = scmp.lt.s32.totalorder %s11, 5
    %p157 = pnand %p155, %p156
    %p158 = pneg %p157
    // Predicated region
    $region9: #{tpu_custom_call.1} parent=5 // pred_check
      _
    $region10: #{tpu_custom_call.1} parent=5 // pred_check_branch
      %160 = sbr.rel (%p157) target = $region12
    $region11: #{tpu_custom_call.1} parent=5 // pred_region
      %s161 = ssub.s32 %s11, 1
      // Predicated region
      $region13: #{tpu_custom_call.1} parent=11 // pred_check
        %p162 = pneg %p58
      $region14: #{tpu_custom_call.1} parent=11 // pred_check_branch
        %164 = sbr.rel (%p162) target = $region16
      $region15: #{tpu_custom_call.1} parent=11 // pred_region
        _
      $region16: #{tpu_custom_call.1} parent=11 // pred_fallthru
        _
      // Predicated region
      $region17: #{tpu_custom_call.1} parent=11 // pred_check
        %p165 = pneg %p79
      $region18: #{tpu_custom_call.1} parent=11 // pred_check_branch
        %167 = sbr.rel (%p165) target = $region20
      $region19: #{tpu_custom_call.1} parent=11 // pred_region
        _
      $region20: #{tpu_custom_call.1} parent=11 // pred_fallthru
        _
      // Predicated region
      $region21: #{tpu_custom_call.1} parent=11 // pred_check
        %p168 = pneg %p100
      $region22: #{tpu_custom_call.1} parent=11 // pred_check_branch
        %170 = sbr.rel (%p168) target = $region24
      $region23: #{tpu_custom_call.1} parent=11 // pred_region
        _
      $region24: #{tpu_custom_call.1} parent=11 // pred_fallthru
        _
      // Predicated region
      $region25: #{tpu_custom_call.1} parent=11 // pred_check
        %p171 = pneg %p121
      $region26: #{tpu_custom_call.1} parent=11 // pred_check_branch
        %173 = sbr.rel (%p171) target = $region28
      $region27: #{tpu_custom_call.1} parent=11 // pred_region
        _
      $region28: #{tpu_custom_call.1} parent=11 // pred_fallthru
        _
    $region12: #{tpu_custom_call.1} parent=5 // pred_fallthru
      _
    %p174 = scmp.lt.s32.totalorder %s11, 4
    // Predicated region
    $region29: #{tpu_custom_call.1} parent=5 // pred_check
      %p175 = pneg %p174
    $region30: #{tpu_custom_call.1} parent=5 // pred_check_branch
      %177 = sbr.rel (%p175) target = $region32
    $region31: #{tpu_custom_call.1} parent=5 // pred_region
      // Predicated region
      $region33: #{tpu_custom_call.1} parent=31 // pred_check
        %p178 = pneg %p31
      $region34: #{tpu_custom_call.1} parent=31 // pred_check_branch
        %180 = sbr.rel (%p178) target = $region36
      $region35: #{tpu_custom_call.1} parent=31 // pred_region
        %s181 = smul.u32 128, %s11
        %p182 = scmp.lt.s32.totalorder %s181, 511
        %s183 = scalar_select %p182, %s181, 511
        %s184 = smul.addr %s183, 8
        %s185 = scalar_lea.vmem %s0, %s184
        %s186 = smul.u32 128, %s11
      $region36: #{tpu_custom_call.1} parent=31 // pred_fallthru
        _
    $region32: #{tpu_custom_call.1} parent=5 // pred_fallthru
      _
    %p187 = scmp.le.s32.totalorder 1, %s11
    %p188 = scmp.lt.s32.totalorder %s11, 5
    %p189 = pnand %p187, %p188
    %p190 = pneg %p189
    // Predicated region
    $region37: #{tpu_custom_call.1} parent=5 // pred_check
      _
    $region38: #{tpu_custom_call.1} parent=5 // pred_check_branch
      %192 = sbr.rel (%p189) target = $region40
    $region39: #{tpu_custom_call.1} parent=5 // pred_region
      %s193 = ssub.s32 %s11, 1
      %s194 = smul.u32 128, %s16
      %p195 = scmp.lt.s32.totalorder %s194, 511
      %s196 = scalar_select %p195, %s194, 511
      %s197 = smul.addr %s196, 8
      %s198 = scalar_lea.vmem %s0, %s197
      %p199 = pneg %p37
      %p200 = pneg %p34
      %p201 = pneg %p58
      %p202 = pneg %p55
      %p203 = pneg %p79
      %p204 = pneg %p76
      %p205 = pneg %p100
      %p206 = pneg %p97
      %p207 = pneg %p121
      %p208 = pneg %p118
      %p209 = pneg %p147
      %p210 = pneg %p144
      %s211 = smul.u32 128, %s16
      %p212 = scmp.lt.s32.totalorder %s211, 511
      %s213 = scalar_select %p212, %s211, 511
      %s214 = smul.addr %s213, 2
      %s215 = smul.addr %s214, 4
      %s216 = scalar_lea.vmem %s5, %s215
      %s217 = smul.u32 128, %s16
      %p218 = scmp.lt.s32.totalorder %s217, 511
      %s219 = scalar_select %p218, %s217, 511
      %s220 = smul.addr %s219, 8
      %s221 = scalar_lea.vmem %s0, %s220
      %s222 = smul.u32 128, %s16
      %s223 = smul.u32 128, %s16
      %p224 = scmp.lt.s32.totalorder %s223, 511
      %s225 = scalar_select %p224, %s223, 511
      %s226 = smul.addr %s225, 2
      %s227 = smul.addr %s226, 4
      %s228 = scalar_lea.vmem %s5, %s227
      %s229 = smul.u32 128, %s16
      %v231 = vld [vmem:[%s221] sm:$0xff]
      %v232 = vld [vmem:[%s221 + $0x8] sm:$0xff]
      %v233 = vld [vmem:[%s221 + $0x10] sm:$0xff]
      %v234 = vld [vmem:[%s221 + $0x18] sm:$0xff]
      %v235 = vld [vmem:[%s221 + $0x20] sm:$0xff]
      %v236 = vld [vmem:[%s221 + $0x28] sm:$0xff]
      %v237 = vld [vmem:[%s221 + $0x30] sm:$0xff]
      %v238 = vld [vmem:[%s221 + $0x38] sm:$0xff]
      %v239 = vld [vmem:[%s221 + $0x40] sm:$0xff]
      %v240 = vld [vmem:[%s221 + $0x48] sm:$0xff]
      %v241 = vld [vmem:[%s221 + $0x50] sm:$0xff]
      %v242 = vld [vmem:[%s221 + $0x58] sm:$0xff]
      %v243 = vld [vmem:[%s221 + $0x60] sm:$0xff]
      %v244 = vld [vmem:[%s221 + $0x68] sm:$0xff]
      %v245 = vld [vmem:[%s221 + $0x70] sm:$0xff]
      %v246 = vld [vmem:[%s221 + $0x78] sm:$0xff]
      %v247 = vld [vmem:[%s221 + $0x80] sm:$0xff]
      %v248 = vld [vmem:[%s221 + $0x88] sm:$0xff]
      %v249 = vld [vmem:[%s221 + $0x90] sm:$0xff]
      %v250 = vld [vmem:[%s221 + $0x98] sm:$0xff]
      %v251 = vld [vmem:[%s221 + $0xa0] sm:$0xff]
      %v252 = vld [vmem:[%s221 + $0xa8] sm:$0xff]
      %v253 = vld [vmem:[%s221 + $0xb0] sm:$0xff]
      %v254 = vld [vmem:[%s221 + $0xb8] sm:$0xff]
      %v255 = vld [vmem:[%s221 + $0xc0] sm:$0xff]
      %v256 = vld [vmem:[%s221 + $0xc8] sm:$0xff]
      %v257 = vld [vmem:[%s221 + $0xd0] sm:$0xff]
      %v258 = vld [vmem:[%s221 + $0xd8] sm:$0xff]
      %v259 = vld [vmem:[%s221 + $0xe0] sm:$0xff]
      %v260 = vld [vmem:[%s221 + $0xe8] sm:$0xff]
      %v261 = vld [vmem:[%s221 + $0xf0] sm:$0xff]
      %v262 = vld [vmem:[%s221 + $0xf8] sm:$0xff]
      %v263 = vld [vmem:[%s221 + $0x100] sm:$0xff]
      %v264 = vld [vmem:[%s221 + $0x108] sm:$0xff]
      %v265 = vld [vmem:[%s221 + $0x110] sm:$0xff]
      %v266 = vld [vmem:[%s221 + $0x118] sm:$0xff]
      %v267 = vld [vmem:[%s221 + $0x120] sm:$0xff]
      %v268 = vld [vmem:[%s221 + $0x128] sm:$0xff]
      %v269 = vld [vmem:[%s221 + $0x130] sm:$0xff]
      %v270 = vld [vmem:[%s221 + $0x138] sm:$0xff]
      %v271 = vld [vmem:[%s221 + $0x140] sm:$0xff]
      %v272 = vld [vmem:[%s221 + $0x148] sm:$0xff]
      %v273 = vld [vmem:[%s221 + $0x150] sm:$0xff]
      %v274 = vld [vmem:[%s221 + $0x158] sm:$0xff]
      %v275 = vld [vmem:[%s221 + $0x160] sm:$0xff]
      %v276 = vld [vmem:[%s221 + $0x168] sm:$0xff]
      %v277 = vld [vmem:[%s221 + $0x170] sm:$0xff]
      %v278 = vld [vmem:[%s221 + $0x178] sm:$0xff]
      %v279 = vld [vmem:[%s221 + $0x180] sm:$0xff]
      %v280 = vld [vmem:[%s221 + $0x188] sm:$0xff]
      %v281 = vld [vmem:[%s221 + $0x190] sm:$0xff]
      %v282 = vld [vmem:[%s221 + $0x198] sm:$0xff]
      %v283 = vld [vmem:[%s221 + $0x1a0] sm:$0xff]
      %v284 = vld [vmem:[%s221 + $0x1a8] sm:$0xff]
      %v285 = vld [vmem:[%s221 + $0x1b0] sm:$0xff]
      %v286 = vld [vmem:[%s221 + $0x1b8] sm:$0xff]
      %v287 = vld [vmem:[%s221 + $0x1c0] sm:$0xff]
      %v288 = vld [vmem:[%s221 + $0x1c8] sm:$0xff]
      %v289 = vld [vmem:[%s221 + $0x1d0] sm:$0xff]
      %v290 = vld [vmem:[%s221 + $0x1d8] sm:$0xff]
      %v291 = vld [vmem:[%s221 + $0x1e0] sm:$0xff]
      %v292 = vld [vmem:[%s221 + $0x1e8] sm:$0xff]
      %v293 = vld [vmem:[%s221 + $0x1f0] sm:$0xff]
      %v294 = vld [vmem:[%s221 + $0x1f8] sm:$0xff]
      %v295 = vld [vmem:[%s221 + $0x200] sm:$0xff]
      %v296 = vld [vmem:[%s221 + $0x208] sm:$0xff]
      %v297 = vld [vmem:[%s221 + $0x210] sm:$0xff]
      %v298 = vld [vmem:[%s221 + $0x218] sm:$0xff]
      %v299 = vld [vmem:[%s221 + $0x220] sm:$0xff]
      %v300 = vld [vmem:[%s221 + $0x228] sm:$0xff]
      %v301 = vld [vmem:[%s221 + $0x230] sm:$0xff]
      %v302 = vld [vmem:[%s221 + $0x238] sm:$0xff]
      %v303 = vld [vmem:[%s221 + $0x240] sm:$0xff]
      %v304 = vld [vmem:[%s221 + $0x248] sm:$0xff]
      %v305 = vld [vmem:[%s221 + $0x250] sm:$0xff]
      %v306 = vld [vmem:[%s221 + $0x258] sm:$0xff]
      %v307 = vld [vmem:[%s221 + $0x260] sm:$0xff]
      %v308 = vld [vmem:[%s221 + $0x268] sm:$0xff]
      %v309 = vld [vmem:[%s221 + $0x270] sm:$0xff]
      %v310 = vld [vmem:[%s221 + $0x278] sm:$0xff]
      %v311 = vld [vmem:[%s221 + $0x280] sm:$0xff]
      %v312 = vld [vmem:[%s221 + $0x288] sm:$0xff]
      %v313 = vld [vmem:[%s221 + $0x290] sm:$0xff]
      %v314 = vld [vmem:[%s221 + $0x298] sm:$0xff]
      %v315 = vld [vmem:[%s221 + $0x2a0] sm:$0xff]
      %v316 = vld [vmem:[%s221 + $0x2a8] sm:$0xff]
      %v317 = vld [vmem:[%s221 + $0x2b0] sm:$0xff]
      %v318 = vld [vmem:[%s221 + $0x2b8] sm:$0xff]
      %v319 = vld [vmem:[%s221 + $0x2c0] sm:$0xff]
      %v320 = vld [vmem:[%s221 + $0x2c8] sm:$0xff]
      %v321 = vld [vmem:[%s221 + $0x2d0] sm:$0xff]
      %v322 = vld [vmem:[%s221 + $0x2d8] sm:$0xff]
      %v323 = vld [vmem:[%s221 + $0x2e0] sm:$0xff]
      %v324 = vld [vmem:[%s221 + $0x2e8] sm:$0xff]
      %v325 = vld [vmem:[%s221 + $0x2f0] sm:$0xff]
      %v326 = vld [vmem:[%s221 + $0x2f8] sm:$0xff]
      %v327 = vld [vmem:[%s221 + $0x300] sm:$0xff]
      %v328 = vld [vmem:[%s221 + $0x308] sm:$0xff]
      %v329 = vld [vmem:[%s221 + $0x310] sm:$0xff]
      %v330 = vld [vmem:[%s221 + $0x318] sm:$0xff]
      %v331 = vld [vmem:[%s221 + $0x320] sm:$0xff]
      %v332 = vld [vmem:[%s221 + $0x328] sm:$0xff]
      %v333 = vld [vmem:[%s221 + $0x330] sm:$0xff]
      %v334 = vld [vmem:[%s221 + $0x338] sm:$0xff]
      %v335 = vld [vmem:[%s221 + $0x340] sm:$0xff]
      %v336 = vld [vmem:[%s221 + $0x348] sm:$0xff]
      %v337 = vld [vmem:[%s221 + $0x350] sm:$0xff]
      %v338 = vld [vmem:[%s221 + $0x358] sm:$0xff]
      %v339 = vld [vmem:[%s221 + $0x360] sm:$0xff]
      %v340 = vld [vmem:[%s221 + $0x368] sm:$0xff]
      %v341 = vld [vmem:[%s221 + $0x370] sm:$0xff]
      %v342 = vld [vmem:[%s221 + $0x378] sm:$0xff]
      %v343 = vld [vmem:[%s221 + $0x380] sm:$0xff]
      %v344 = vld [vmem:[%s221 + $0x388] sm:$0xff]
      %v345 = vld [vmem:[%s221 + $0x390] sm:$0xff]
      %v346 = vld [vmem:[%s221 + $0x398] sm:$0xff]
      %v347 = vld [vmem:[%s221 + $0x3a0] sm:$0xff]
      %v348 = vld [vmem:[%s221 + $0x3a8] sm:$0xff]
      %v349 = vld [vmem:[%s221 + $0x3b0] sm:$0xff]
      %v350 = vld [vmem:[%s221 + $0x3b8] sm:$0xff]
      %v351 = vld [vmem:[%s221 + $0x3c0] sm:$0xff]
      %v352 = vld [vmem:[%s221 + $0x3c8] sm:$0xff]
      %v353 = vld [vmem:[%s221 + $0x3d0] sm:$0xff]
      %v354 = vld [vmem:[%s221 + $0x3d8] sm:$0xff]
      %v355 = vld [vmem:[%s221 + $0x3e0] sm:$0xff]
      %v356 = vld [vmem:[%s221 + $0x3e8] sm:$0xff]
      %v357 = vld [vmem:[%s221 + $0x3f0] sm:$0xff]
      %v358 = vld [vmem:[%s221 + $0x3f8] sm:$0xff]
      %v359 = vpack.c.bf16 %v232, %v231
      %v360 = vpack.c.bf16 %v234, %v233
      %v361 = vpack.c.bf16 %v236, %v235
      %v362 = vpack.c.bf16 %v238, %v237
      %v363 = vpack.c.bf16 %v240, %v239
      %v364 = vpack.c.bf16 %v242, %v241
      %v365 = vpack.c.bf16 %v244, %v243
      %v366 = vpack.c.bf16 %v246, %v245
      %v367 = vpack.c.bf16 %v248, %v247
      %v368 = vpack.c.bf16 %v250, %v249
      %v369 = vpack.c.bf16 %v252, %v251
      %v370 = vpack.c.bf16 %v254, %v253
      %v371 = vpack.c.bf16 %v256, %v255
      %v372 = vpack.c.bf16 %v258, %v257
      %v373 = vpack.c.bf16 %v260, %v259
      %v374 = vpack.c.bf16 %v262, %v261
      %v375 = vpack.c.bf16 %v264, %v263
      %v376 = vpack.c.bf16 %v266, %v265
      %v377 = vpack.c.bf16 %v268, %v267
      %v378 = vpack.c.bf16 %v270, %v269
      %v379 = vpack.c.bf16 %v272, %v271
      %v380 = vpack.c.bf16 %v274, %v273
      %v381 = vpack.c.bf16 %v276, %v275
      %v382 = vpack.c.bf16 %v278, %v277
      %v383 = vpack.c.bf16 %v280, %v279
      %v384 = vpack.c.bf16 %v282, %v281
      %v385 = vpack.c.bf16 %v284, %v283
      %v386 = vpack.c.bf16 %v286, %v285
      %v387 = vpack.c.bf16 %v288, %v287
      %v388 = vpack.c.bf16 %v290, %v289
      %v389 = vpack.c.bf16 %v292, %v291
      %v390 = vpack.c.bf16 %v294, %v293
      %v391 = vpack.c.bf16 %v296, %v295
      %v392 = vpack.c.bf16 %v298, %v297
      %v393 = vpack.c.bf16 %v300, %v299
      %v394 = vpack.c.bf16 %v302, %v301
      %v395 = vpack.c.bf16 %v304, %v303
      %v396 = vpack.c.bf16 %v306, %v305
      %v397 = vpack.c.bf16 %v308, %v307
      %v398 = vpack.c.bf16 %v310, %v309
      %v399 = vpack.c.bf16 %v312, %v311
      %v400 = vpack.c.bf16 %v314, %v313
      %v401 = vpack.c.bf16 %v316, %v315
      %v402 = vpack.c.bf16 %v318, %v317
      %v403 = vpack.c.bf16 %v320, %v319
      %v404 = vpack.c.bf16 %v322, %v321
      %v405 = vpack.c.bf16 %v324, %v323
      %v406 = vpack.c.bf16 %v326, %v325
      %v407 = vpack.c.bf16 %v328, %v327
      %v408 = vpack.c.bf16 %v330, %v329
      %v409 = vpack.c.bf16 %v332, %v331
      %v410 = vpack.c.bf16 %v334, %v333
      %v411 = vpack.c.bf16 %v336, %v335
      %v412 = vpack.c.bf16 %v338, %v337
      %v413 = vpack.c.bf16 %v340, %v339
      %v414 = vpack.c.bf16 %v342, %v341
      %v415 = vpack.c.bf16 %v344, %v343
      %v416 = vpack.c.bf16 %v346, %v345
      %v417 = vpack.c.bf16 %v348, %v347
      %v418 = vpack.c.bf16 %v350, %v349
      %v419 = vpack.c.bf16 %v352, %v351
      %v420 = vpack.c.bf16 %v354, %v353
      %v421 = vpack.c.bf16 %v356, %v355
      %v422 = vpack.c.bf16 %v358, %v357
      %v423 = vld [vmem:[%s1] sm:$0xf]
      %v424 = vld [vmem:[%s1 + $0x4] sm:$0xf]
      %v425 = vld [vmem:[%s1 + $0x8] sm:$0xf]
      %v426 = vld [vmem:[%s1 + $0xc] sm:$0xf]
      %v427 = vld [vmem:[%s1 + $0x10] sm:$0xf]
      %v428 = vld [vmem:[%s1 + $0x14] sm:$0xf]
      %v429 = vld [vmem:[%s1 + $0x18] sm:$0xf]
      %v430 = vld [vmem:[%s1 + $0x1c] sm:$0xf]
      %v431 = vld [vmem:[%s1 + $0x20] sm:$0xf]
      %v432 = vld [vmem:[%s1 + $0x24] sm:$0xf]
      %v433 = vld [vmem:[%s1 + $0x28] sm:$0xf]
      %v434 = vld [vmem:[%s1 + $0x2c] sm:$0xf]
      %v435 = vld [vmem:[%s1 + $0x30] sm:$0x3]
      %v436 = vld [vmem:[%s2] sm:$0x1]
      %v438 = vlaneseq
      %v439 = vshrl.u32 %v438, 7
      %v440 = vsub.s32 0, %v439
      %v441 = vrot.slane %v436, %v440
      %v456 = vunpack.c.l.b16 %v423
      %v457 = vunpack.c.l.b16 %v424
      %v458 = vunpack.c.l.b16 %v425
      %v459 = vunpack.c.l.b16 %v426
      %v460 = vunpack.c.l.b16 %v427
      %v461 = vunpack.c.l.b16 %v428
      %v462 = vunpack.c.l.b16 %v429
      %v463 = vunpack.c.l.b16 %v430
      %v464 = vunpack.c.l.b16 %v431
      %v465 = vunpack.c.l.b16 %v432
      %v466 = vunpack.c.l.b16 %v433
      %v467 = vunpack.c.l.b16 %v434
      %v468 = vunpack.c.l.b16 %v435
      %v469 = vpack.c.b16 %v457, %v456
      %v470 = vpack.c.b16 %v459, %v458
      %v471 = vpack.c.b16 %v461, %v460
      %v472 = vpack.c.b16 %v463, %v462
      %v473 = vpack.c.b16 %v465, %v464
      %v474 = vpack.c.b16 %v467, %v466
      %v475 = vpack.c.b16 %v468, %v468
      %vm482 = vcmask 818176
      %v484 = vsel %vm482, %v359, 0
      %v487 = vsel %vm482, %v360, 0
      %v490 = vsel %vm482, %v361, 0
      %v493 = vsel %vm482, %v362, 0
      %v496 = vsel %vm482, %v363, 0
      %v499 = vsel %vm482, %v364, 0
      %v502 = vsel %vm482, %v365, 0
      %v505 = vsel %vm482, %v366, 0
      %v508 = vsel %vm482, %v367, 0
      %v511 = vsel %vm482, %v368, 0
      %v514 = vsel %vm482, %v369, 0
      %v517 = vsel %vm482, %v370, 0
      %v520 = vsel %vm482, %v371, 0
      %v523 = vsel %vm482, %v372, 0
      %v526 = vsel %vm482, %v373, 0
      %v529 = vsel %vm482, %v374, 0
      %v532 = vsel %vm482, %v375, 0
      %v535 = vsel %vm482, %v376, 0
      %v538 = vsel %vm482, %v377, 0
      %v541 = vsel %vm482, %v378, 0
      %v544 = vsel %vm482, %v379, 0
      %v547 = vsel %vm482, %v380, 0
      %v550 = vsel %vm482, %v381, 0
      %v553 = vsel %vm482, %v382, 0
      %v556 = vsel %vm482, %v383, 0
      %v559 = vsel %vm482, %v384, 0
      %v562 = vsel %vm482, %v385, 0
      %v565 = vsel %vm482, %v386, 0
      %v568 = vsel %vm482, %v387, 0
      %v571 = vsel %vm482, %v388, 0
      %v574 = vsel %vm482, %v389, 0
      %v577 = vsel %vm482, %v390, 0
      %v580 = vsel %vm482, %v391, 0
      %v583 = vsel %vm482, %v392, 0
      %v586 = vsel %vm482, %v393, 0
      %v589 = vsel %vm482, %v394, 0
      %v592 = vsel %vm482, %v395, 0
      %v595 = vsel %vm482, %v396, 0
      %v598 = vsel %vm482, %v397, 0
      %v601 = vsel %vm482, %v398, 0
      %v604 = vsel %vm482, %v399, 0
      %v607 = vsel %vm482, %v400, 0
      %v610 = vsel %vm482, %v401, 0
      %v613 = vsel %vm482, %v402, 0
      %v616 = vsel %vm482, %v403, 0
      %v619 = vsel %vm482, %v404, 0
      %v622 = vsel %vm482, %v405, 0
      %v625 = vsel %vm482, %v406, 0
      %v628 = vsel %vm482, %v407, 0
      %v631 = vsel %vm482, %v408, 0
      %v634 = vsel %vm482, %v409, 0
      %v637 = vsel %vm482, %v410, 0
      %v640 = vsel %vm482, %v411, 0
      %v643 = vsel %vm482, %v412, 0
      %v646 = vsel %vm482, %v413, 0
      %v649 = vsel %vm482, %v414, 0
      %v652 = vsel %vm482, %v415, 0
      %v655 = vsel %vm482, %v416, 0
      %v658 = vsel %vm482, %v417, 0
      %v661 = vsel %vm482, %v418, 0
      %v664 = vsel %vm482, %v419, 0
      %v667 = vsel %vm482, %v420, 0
      %v670 = vsel %vm482, %v421, 0
      %v673 = vsel %vm482, %v422, 0
      %vm675 = vcmask 1041408
      %v677 = vsel %vm675, %v475, 0
      %679 = vmatprep.subr.bf16.mxu0 0
      %680 = vmatpush1.bf16.msra.mxu0 %v469
      %681 = vmatprep.subr.bf16.mxu0 0
      %682 = vmatpush1.bf16.msra.mxu0 %v470
      %683 = vmatprep.subr.bf16.mxu0 0
      %684 = vmatpush1.bf16.msra.mxu0 %v471
      %685 = vmatprep.subr.bf16.mxu0 0
      %686 = vmatpush1.bf16.msra.mxu0 %v472
      %687 = vmatprep.subr.bf16.mxu0 0
      %688 = vmatpush1.bf16.msra.mxu0 %v473
      %689 = vmatprep.subr.bf16.mxu0 0
      %690 = vmatpush1.bf16.msra.mxu0 %v474
      %691 = vmatprep.subr.bf16.mxu0 0
      %692 = vmatpush1.bf16.msra.mxu0 %v677
      %693 = vmatprep.subr.bf16.mxu0 0
      %694 = vmatpush1.bf16.msra.mxu0 0
      %695 = vmatprep.subr.bf16.mxu0 0
      %696 = vmatpush1.bf16.msra.mxu0 0
      %697 = vmatprep.subr.bf16.mxu0 0
      %698 = vmatpush1.bf16.msra.mxu0 0
      %699 = vmatprep.subr.bf16.mxu0 0
      %700 = vmatpush1.bf16.msra.mxu0 0
      %701 = vmatprep.subr.bf16.mxu0 0
      %702 = vmatpush1.bf16.msra.mxu0 0
      %703 = vmatprep.subr.bf16.mxu0 0
      %704 = vmatpush1.bf16.msra.mxu0 0
      %705 = vmatprep.subr.bf16.mxu0 0
      %706 = vmatpush1.bf16.msra.mxu0 0
      %707 = vmatprep.subr.bf16.mxu0 0
      %708 = vmatpush1.bf16.msra.mxu0 0
      %709 = vmatprep.subr.bf16.mxu0 0
      %710 = vmatpush1.bf16.msra.mxu0 0
      %711 = vmatprep.mubr.bf16.mxu0 0
      %712 = vmatmul.mubr.bf16.gmra.mrb[0].mxu0 %v484
      %v713 = vpop.f32.mrb[0].mxu0
      %v714 = vadd.f32 %v441, %v713
      %v715 = vpop.f32.mrb[0].mxu0
      %v716 = vpop.f32.mrb[0].mxu0
      %v717 = vadd.f32 %v441, %v716
      %v718 = vpop.f32.mrb[0].mxu0
      %719 = vmatprep.mubr.bf16.mxu0 0
      %720 = vmatmul.mubr.bf16.gmra.mrb[0].mxu0 %v487
      %v721 = vpop.f32.mrb[0].mxu0
      %v722 = vadd.f32 %v441, %v721
      %v723 = vpop.f32.mrb[0].mxu0
      %v724 = vpop.f32.mrb[0].mxu0
      %v725 = vadd.f32 %v441, %v724
      %v726 = vpop.f32.mrb[0].mxu0
      %727 = vmatprep.mubr.bf16.mxu0 0
      %728 = vmatmul.mubr.bf16.gmra.mrb[0].mxu0 %v490
      %v729 = vpop.f32.mrb[0].mxu0
      %v730 = vadd.f32 %v441, %v729
      %v731 = vpop.f32.mrb[0].mxu0
      %v732 = vpop.f32.mrb[0].mxu0
      %v733 = vadd.f32 %v441, %v732
      %v734 = vpop.f32.mrb[0].mxu0
      %735 = vmatprep.mubr.bf16.mxu0 0
      %736 = vmatmul.mubr.bf16.gmra.mrb[0].mxu0 %v493
      %v737 = vpop.f32.mrb[0].mxu0
      %v738 = vadd.f32 %v441, %v737
      %v739 = vpop.f32.mrb[0].mxu0
      %v740 = vpop.f32.mrb[0].mxu0
      %v741 = vadd.f32 %v441, %v740
      %v742 = vpop.f32.mrb[0].mxu0
      %743 = vmatprep.mubr.bf16.mxu0 0
      %744 = vmatmul.mubr.bf16.gmra.mrb[0].mxu0 %v496
      %v745 = vpop.f32.mrb[0].mxu0
      %v746 = vadd.f32 %v441, %v745
      %v747 = vpop.f32.mrb[0].mxu0
      %v748 = vpop.f32.mrb[0].mxu0
      %v749 = vadd.f32 %v441, %v748
      %v750 = vpop.f32.mrb[0].mxu0
      %751 = vmatprep.mubr.bf16.mxu0 0
      %752 = vmatmul.mubr.bf16.gmra.mrb[0].mxu0 %v499
      %v753 = vpop.f32.mrb[0].mxu0
      %v754 = vadd.f32 %v441, %v753
      %v755 = vpop.f32.mrb[0].mxu0
      %v756 = vpop.f32.mrb[0].mxu0
      %v757 = vadd.f32 %v441, %v756
      %v758 = vpop.f32.mrb[0].mxu0
      %759 = vmatprep.mubr.bf16.mxu0 0
      %760 = vmatmul.mubr.bf16.gmra.mrb[0].mxu0 %v502
      %v761 = vpop.f32.mrb[0].mxu0
      %v762 = vadd.f32 %v441, %v761
      %v763 = vpop.f32.mrb[0].mxu0
      %v764 = vpop.f32.mrb[0].mxu0
      %v765 = vadd.f32 %v441, %v764
      %v766 = vpop.f32.mrb[0].mxu0
      %767 = vmatprep.mubr.bf16.mxu0 0
      %768 = vmatmul.mubr.bf16.gmra.mrb[0].mxu0 %v505
      %v769 = vpop.f32.mrb[0].mxu0
      %v770 = vadd.f32 %v441, %v769
      %v771 = vpop.f32.mrb[0].mxu0
      %v772 = vpop.f32.mrb[0].mxu0
      %v773 = vadd.f32 %v441, %v772
      %v774 = vpop.f32.mrb[0].mxu0
      %775 = vmatprep.mubr.bf16.mxu0 0
      %776 = vmatmul.mubr.bf16.gmra.mrb[0].mxu0 %v508
      %v777 = vpop.f32.mrb[0].mxu0
      %v778 = vadd.f32 %v441, %v777
      %v779 = vpop.f32.mrb[0].mxu0
      %v780 = vpop.f32.mrb[0].mxu0
      %v781 = vadd.f32 %v441, %v780
      %v782 = vpop.f32.mrb[0].mxu0
      %783 = vmatprep.mubr.bf16.mxu0 0
      %784 = vmatmul.mubr.bf16.gmra.mrb[0].mxu0 %v511
      %v785 = vpop.f32.mrb[0].mxu0
      %v786 = vadd.f32 %v441, %v785
      %v787 = vpop.f32.mrb[0].mxu0
      %v788 = vpop.f32.mrb[0].mxu0
      %v789 = vadd.f32 %v441, %v788
      %v790 = vpop.f32.mrb[0].mxu0
      %791 = vmatprep.mubr.bf16.mxu0 0
      %792 = vmatmul.mubr.bf16.gmra.mrb[0].mxu0 %v514
      %v793 = vpop.f32.mrb[0].mxu0
      %v794 = vadd.f32 %v441, %v793
      %v795 = vpop.f32.mrb[0].mxu0
      %v796 = vpop.f32.mrb[0].mxu0
      %v797 = vadd.f32 %v441, %v796
      %v798 = vpop.f32.mrb[0].mxu0
      %799 = vmatprep.mubr.bf16.mxu0 0
      %800 = vmatmul.mubr.bf16.gmra.mrb[0].mxu0 %v517
      %v801 = vpop.f32.mrb[0].mxu0
      %v802 = vadd.f32 %v441, %v801
      %v803 = vpop.f32.mrb[0].mxu0
      %v804 = vpop.f32.mrb[0].mxu0
      %v805 = vadd.f32 %v441, %v804
      %v806 = vpop.f32.mrb[0].mxu0
      %807 = vmatprep.mubr.bf16.mxu0 0
      %808 = vmatmul.mubr.bf16.gmra.mrb[0].mxu0 %v520
      %v809 = vpop.f32.mrb[0].mxu0
      %v810 = vadd.f32 %v441, %v809
      %v811 = vpop.f32.mrb[0].mxu0
      %v812 = vpop.f32.mrb[0].mxu0
      %v813 = vadd.f32 %v441, %v812
      %v814 = vpop.f32.mrb[0].mxu0
      %815 = vmatprep.mubr.bf16.mxu0 0
      %816 = vmatmul.mubr.bf16.gmra.mrb[0].mxu0 %v523
      %v817 = vpop.f32.mrb[0].mxu0
      %v818 = vadd.f32 %v441, %v817
      %v819 = vpop.f32.mrb[0].mxu0
      %v820 = vpop.f32.mrb[0].mxu0
      %v821 = vadd.f32 %v441, %v820
      %v822 = vpop.f32.mrb[0].mxu0
      %823 = vmatprep.mubr.bf16.mxu0 0
      %824 = vmatmul.mubr.bf16.gmra.mrb[0].mxu0 %v526
      %v825 = vpop.f32.mrb[0].mxu0
      %v826 = vadd.f32 %v441, %v825
      %v827 = vpop.f32.mrb[0].mxu0
      %v828 = vpop.f32.mrb[0].mxu0
      %v829 = vadd.f32 %v441, %v828
      %v830 = vpop.f32.mrb[0].mxu0
      %831 = vmatprep.mubr.bf16.mxu0 0
      %832 = vmatmul.mubr.bf16.gmra.mrb[0].mxu0 %v529
      %v833 = vpop.f32.mrb[0].mxu0
      %v834 = vadd.f32 %v441, %v833
      %v835 = vpop.f32.mrb[0].mxu0
      %v836 = vpop.f32.mrb[0].mxu0
      %v837 = vadd.f32 %v441, %v836
      %v838 = vpop.f32.mrb[0].mxu0
      %839 = vmatprep.mubr.bf16.mxu0 0
      %840 = vmatmul.mubr.bf16.gmra.mrb[0].mxu0 %v532
      %v841 = vpop.f32.mrb[0].mxu0
      %v842 = vadd.f32 %v441, %v841
      %v843 = vpop.f32.mrb[0].mxu0
      %v844 = vpop.f32.mrb[0].mxu0
      %v845 = vadd.f32 %v441, %v844
      %v846 = vpop.f32.mrb[0].mxu0
      %847 = vmatprep.mubr.bf16.mxu0 0
      %848 = vmatmul.mubr.bf16.gmra.mrb[0].mxu0 %v535
      %v849 = vpop.f32.mrb[0].mxu0
      %v850 = vadd.f32 %v441, %v849
      %v851 = vpop.f32.mrb[0].mxu0
      %v852 = vpop.f32.mrb[0].mxu0
      %v853 = vadd.f32 %v441, %v852
      %v854 = vpop.f32.mrb[0].mxu0
      %855 = vmatprep.mubr.bf16.mxu0 0
      %856 = vmatmul.mubr.bf16.gmra.mrb[0].mxu0 %v538
      %v857 = vpop.f32.mrb[0].mxu0
      %v858 = vadd.f32 %v441, %v857
      %v859 = vpop.f32.mrb[0].mxu0
      %v860 = vpop.f32.mrb[0].mxu0
      %v861 = vadd.f32 %v441, %v860
      %v862 = vpop.f32.mrb[0].mxu0
      %863 = vmatprep.mubr.bf16.mxu0 0
      %864 = vmatmul.mubr.bf16.gmra.mrb[0].mxu0 %v541
      %v865 = vpop.f32.mrb[0].mxu0
      %v866 = vadd.f32 %v441, %v865
      %v867 = vpop.f32.mrb[0].mxu0
      %v868 = vpop.f32.mrb[0].mxu0
      %v869 = vadd.f32 %v441, %v868
      %v870 = vpop.f32.mrb[0].mxu0
      %871 = vmatprep.mubr.bf16.mxu0 0
      %872 = vmatmul.mubr.bf16.gmra.mrb[0].mxu0 %v544
      %v873 = vpop.f32.mrb[0].mxu0
      %v874 = vadd.f32 %v441, %v873
      %v875 = vpop.f32.mrb[0].mxu0
      %v876 = vpop.f32.mrb[0].mxu0
      %v877 = vadd.f32 %v441, %v876
      %v878 = vpop.f32.mrb[0].mxu0
      %879 = vmatprep.mubr.bf16.mxu0 0
      %880 = vmatmul.mubr.bf16.gmra.mrb[0].mxu0 %v547
      %v881 = vpop.f32.mrb[0].mxu0
      %v882 = vadd.f32 %v441, %v881
      %v883 = vpop.f32.mrb[0].mxu0
      %v884 = vpop.f32.mrb[0].mxu0
      %v885 = vadd.f32 %v441, %v884
      %v886 = vpop.f32.mrb[0].mxu0
      %887 = vmatprep.mubr.bf16.mxu0 0
      %888 = vmatmul.mubr.bf16.gmra.mrb[0].mxu0 %v550
      %v889 = vpop.f32.mrb[0].mxu0
      %v890 = vadd.f32 %v441, %v889
      %v891 = vpop.f32.mrb[0].mxu0
      %v892 = vpop.f32.mrb[0].mxu0
      %v893 = vadd.f32 %v441, %v892
      %v894 = vpop.f32.mrb[0].mxu0
      %895 = vmatprep.mubr.bf16.mxu0 0
      %896 = vmatmul.mubr.bf16.gmra.mrb[0].mxu0 %v553
      %v897 = vpop.f32.mrb[0].mxu0
      %v898 = vadd.f32 %v441, %v897
      %v899 = vpop.f32.mrb[0].mxu0
      %v900 = vpop.f32.mrb[0].mxu0
      %v901 = vadd.f32 %v441, %v900
      %v902 = vpop.f32.mrb[0].mxu0
      %903 = vmatprep.mubr.bf16.mxu0 0
      %904 = vmatmul.mubr.bf16.gmra.mrb[0].mxu0 %v556
      %v905 = vpop.f32.mrb[0].mxu0
      %v906 = vadd.f32 %v441, %v905
      %v907 = vpop.f32.mrb[0].mxu0
      %v908 = vpop.f32.mrb[0].mxu0
      %v909 = vadd.f32 %v441, %v908
      %v910 = vpop.f32.mrb[0].mxu0
      %911 = vmatprep.mubr.bf16.mxu0 0
      %912 = vmatmul.mubr.bf16.gmra.mrb[0].mxu0 %v559
      %v913 = vpop.f32.mrb[0].mxu0
      %v914 = vadd.f32 %v441, %v913
      %v915 = vpop.f32.mrb[0].mxu0
      %v916 = vpop.f32.mrb[0].mxu0
      %v917 = vadd.f32 %v441, %v916
      %v918 = vpop.f32.mrb[0].mxu0
      %919 = vmatprep.mubr.bf16.mxu0 0
      %920 = vmatmul.mubr.bf16.gmra.mrb[0].mxu0 %v562
      %v921 = vpop.f32.mrb[0].mxu0
      %v922 = vadd.f32 %v441, %v921
      %v923 = vpop.f32.mrb[0].mxu0
      %v924 = vpop.f32.mrb[0].mxu0
      %v925 = vadd.f32 %v441, %v924
      %v926 = vpop.f32.mrb[0].mxu0
      %927 = vmatprep.mubr.bf16.mxu0 0
      %928 = vmatmul.mubr.bf16.gmra.mrb[0].mxu0 %v565
      %v929 = vpop.f32.mrb[0].mxu0
      %v930 = vadd.f32 %v441, %v929
      %v931 = vpop.f32.mrb[0].mxu0
      %v932 = vpop.f32.mrb[0].mxu0
      %v933 = vadd.f32 %v441, %v932
      %v934 = vpop.f32.mrb[0].mxu0
      %935 = vmatprep.mubr.bf16.mxu0 0
      %936 = vmatmul.mubr.bf16.gmra.mrb[0].mxu0 %v568
      %v937 = vpop.f32.mrb[0].mxu0
      %v938 = vadd.f32 %v441, %v937
      %v939 = vpop.f32.mrb[0].mxu0
      %v940 = vpop.f32.mrb[0].mxu0
      %v941 = vadd.f32 %v441, %v940
      %v942 = vpop.f32.mrb[0].mxu0
      %943 = vmatprep.mubr.bf16.mxu0 0
      %944 = vmatmul.mubr.bf16.gmra.mrb[0].mxu0 %v571
      %v945 = vpop.f32.mrb[0].mxu0
      %v946 = vadd.f32 %v441, %v945
      %v947 = vpop.f32.mrb[0].mxu0
      %v948 = vpop.f32.mrb[0].mxu0
      %v949 = vadd.f32 %v441, %v948
      %v950 = vpop.f32.mrb[0].mxu0
      %951 = vmatprep.mubr.bf16.mxu0 0
      %952 = vmatmul.mubr.bf16.gmra.mrb[0].mxu0 %v574
      %v953 = vpop.f32.mrb[0].mxu0
      %v954 = vadd.f32 %v441, %v953
      %v955 = vpop.f32.mrb[0].mxu0
      %v956 = vpop.f32.mrb[0].mxu0
      %v957 = vadd.f32 %v441, %v956
      %v958 = vpop.f32.mrb[0].mxu0
      %959 = vmatprep.mubr.bf16.mxu0 0
      %960 = vmatmul.mubr.bf16.gmra.mrb[0].mxu0 %v577
      %v961 = vpop.f32.mrb[0].mxu0
      %v962 = vadd.f32 %v441, %v961
      %v963 = vpop.f32.mrb[0].mxu0
      %v964 = vpop.f32.mrb[0].mxu0
      %v965 = vadd.f32 %v441, %v964
      %v966 = vpop.f32.mrb[0].mxu0
      %967 = vmatprep.mubr.bf16.mxu0 0
      %968 = vmatmul.mubr.bf16.gmra.mrb[0].mxu0 %v580
      %v969 = vpop.f32.mrb[0].mxu0
      %v970 = vadd.f32 %v441, %v969
      %v971 = vpop.f32.mrb[0].mxu0
      %v972 = vpop.f32.mrb[0].mxu0
      %v973 = vadd.f32 %v441, %v972
      %v974 = vpop.f32.mrb[0].mxu0
      %975 = vmatprep.mubr.bf16.mxu0 0
      %976 = vmatmul.mubr.bf16.gmra.mrb[0].mxu0 %v583
      %v977 = vpop.f32.mrb[0].mxu0
      %v978 = vadd.f32 %v441, %v977
      %v979 = vpop.f32.mrb[0].mxu0
      %v980 = vpop.f32.mrb[0].mxu0
      %v981 = vadd.f32 %v441, %v980
      %v982 = vpop.f32.mrb[0].mxu0
      %983 = vmatprep.mubr.bf16.mxu0 0
      %984 = vmatmul.mubr.bf16.gmra.mrb[0].mxu0 %v586
      %v985 = vpop.f32.mrb[0].mxu0
      %v986 = vadd.f32 %v441, %v985
      %v987 = vpop.f32.mrb[0].mxu0
      %v988 = vpop.f32.mrb[0].mxu0
      %v989 = vadd.f32 %v441, %v988
      %v990 = vpop.f32.mrb[0].mxu0
      %991 = vmatprep.mubr.bf16.mxu0 0
      %992 = vmatmul.mubr.bf16.gmra.mrb[0].mxu0 %v589
      %v993 = vpop.f32.mrb[0].mxu0
      %v994 = vadd.f32 %v441, %v993
      %v995 = vpop.f32.mrb[0].mxu0
      %v996 = vpop.f32.mrb[0].mxu0
      %v997 = vadd.f32 %v441, %v996
      %v998 = vpop.f32.mrb[0].mxu0
      %999 = vmatprep.mubr.bf16.mxu0 0
      %1000 = vmatmul.mubr.bf16.gmra.mrb[0].mxu0 %v592
      %v1001 = vpop.f32.mrb[0].mxu0
      %v1002 = vadd.f32 %v441, %v1001
      %v1003 = vpop.f32.mrb[0].mxu0
      %v1004 = vpop.f32.mrb[0].mxu0
      %v1005 = vadd.f32 %v441, %v1004
      %v1006 = vpop.f32.mrb[0].mxu0
      %1007 = vmatprep.mubr.bf16.mxu0 0
      %1008 = vmatmul.mubr.bf16.gmra.mrb[0].mxu0 %v595
      %v1009 = vpop.f32.mrb[0].mxu0
      %v1010 = vadd.f32 %v441, %v1009
      %v1011 = vpop.f32.mrb[0].mxu0
      %v1012 = vpop.f32.mrb[0].mxu0
      %v1013 = vadd.f32 %v441, %v1012
      %v1014 = vpop.f32.mrb[0].mxu0
      %1015 = vmatprep.mubr.bf16.mxu0 0
      %1016 = vmatmul.mubr.bf16.gmra.mrb[0].mxu0 %v598
      %v1017 = vpop.f32.mrb[0].mxu0
      %v1018 = vadd.f32 %v441, %v1017
      %v1019 = vpop.f32.mrb[0].mxu0
      %v1020 = vpop.f32.mrb[0].mxu0
      %v1021 = vadd.f32 %v441, %v1020
      %v1022 = vpop.f32.mrb[0].mxu0
      %1023 = vmatprep.mubr.bf16.mxu0 0
      %1024 = vmatmul.mubr.bf16.gmra.mrb[0].mxu0 %v601
      %v1025 = vpop.f32.mrb[0].mxu0
      %v1026 = vadd.f32 %v441, %v1025
      %v1027 = vpop.f32.mrb[0].mxu0
      %v1028 = vpop.f32.mrb[0].mxu0
      %v1029 = vadd.f32 %v441, %v1028
      %v1030 = vpop.f32.mrb[0].mxu0
      %1031 = vmatprep.mubr.bf16.mxu0 0
      %1032 = vmatmul.mubr.bf16.gmra.mrb[0].mxu0 %v604
      %v1033 = vpop.f32.mrb[0].mxu0
      %v1034 = vadd.f32 %v441, %v1033
      %v1035 = vpop.f32.mrb[0].mxu0
      %v1036 = vpop.f32.mrb[0].mxu0
      %v1037 = vadd.f32 %v441, %v1036
      %v1038 = vpop.f32.mrb[0].mxu0
      %1039 = vmatprep.mubr.bf16.mxu0 0
      %1040 = vmatmul.mubr.bf16.gmra.mrb[0].mxu0 %v607
      %v1041 = vpop.f32.mrb[0].mxu0
      %v1042 = vadd.f32 %v441, %v1041
      %v1043 = vpop.f32.mrb[0].mxu0
      %v1044 = vpop.f32.mrb[0].mxu0
      %v1045 = vadd.f32 %v441, %v1044
      %v1046 = vpop.f32.mrb[0].mxu0
      %1047 = vmatprep.mubr.bf16.mxu0 0
      %1048 = vmatmul.mubr.bf16.gmra.mrb[0].mxu0 %v610
      %v1049 = vpop.f32.mrb[0].mxu0
      %v1050 = vadd.f32 %v441, %v1049
      %v1051 = vpop.f32.mrb[0].mxu0
      %v1052 = vpop.f32.mrb[0].mxu0
      %v1053 = vadd.f32 %v441, %v1052
      %v1054 = vpop.f32.mrb[0].mxu0
      %1055 = vmatprep.mubr.bf16.mxu0 0
      %1056 = vmatmul.mubr.bf16.gmra.mrb[0].mxu0 %v613
      %v1057 = vpop.f32.mrb[0].mxu0
      %v1058 = vadd.f32 %v441, %v1057
      %v1059 = vpop.f32.mrb[0].mxu0
      %v1060 = vpop.f32.mrb[0].mxu0
      %v1061 = vadd.f32 %v441, %v1060
      %v1062 = vpop.f32.mrb[0].mxu0
      %1063 = vmatprep.mubr.bf16.mxu0 0
      %1064 = vmatmul.mubr.bf16.gmra.mrb[0].mxu0 %v616
      %v1065 = vpop.f32.mrb[0].mxu0
      %v1066 = vadd.f32 %v441, %v1065
      %v1067 = vpop.f32.mrb[0].mxu0
      %v1068 = vpop.f32.mrb[0].mxu0
      %v1069 = vadd.f32 %v441, %v1068
      %v1070 = vpop.f32.mrb[0].mxu0
      %1071 = vmatprep.mubr.bf16.mxu0 0
      %1072 = vmatmul.mubr.bf16.gmra.mrb[0].mxu0 %v619
      %v1073 = vpop.f32.mrb[0].mxu0
      %v1074 = vadd.f32 %v441, %v1073
      %v1075 = vpop.f32.mrb[0].mxu0
      %v1076 = vpop.f32.mrb[0].mxu0
      %v1077 = vadd.f32 %v441, %v1076
      %v1078 = vpop.f32.mrb[0].mxu0
      %1079 = vmatprep.mubr.bf16.mxu0 0
      %1080 = vmatmul.mubr.bf16.gmra.mrb[0].mxu0 %v622
      %v1081 = vpop.f32.mrb[0].mxu0
      %v1082 = vadd.f32 %v441, %v1081
      %v1083 = vpop.f32.mrb[0].mxu0
      %v1084 = vpop.f32.mrb[0].mxu0
      %v1085 = vadd.f32 %v441, %v1084
      %v1086 = vpop.f32.mrb[0].mxu0
      %1087 = vmatprep.mubr.bf16.mxu0 0
      %1088 = vmatmul.mubr.bf16.gmra.mrb[0].mxu0 %v625
      %v1089 = vpop.f32.mrb[0].mxu0
      %v1090 = vadd.f32 %v441, %v1089
      %v1091 = vpop.f32.mrb[0].mxu0
      %v1092 = vpop.f32.mrb[0].mxu0
      %v1093 = vadd.f32 %v441, %v1092
      %v1094 = vpop.f32.mrb[0].mxu0
      %1095 = vmatprep.mubr.bf16.mxu0 0
      %1096 = vmatmul.mubr.bf16.gmra.mrb[0].mxu0 %v628
      %v1097 = vpop.f32.mrb[0].mxu0
      %v1098 = vadd.f32 %v441, %v1097
      %v1099 = vpop.f32.mrb[0].mxu0
      %v1100 = vpop.f32.mrb[0].mxu0
      %v1101 = vadd.f32 %v441, %v1100
      %v1102 = vpop.f32.mrb[0].mxu0
      %1103 = vmatprep.mubr.bf16.mxu0 0
      %1104 = vmatmul.mubr.bf16.gmra.mrb[0].mxu0 %v631
      %v1105 = vpop.f32.mrb[0].mxu0
      %v1106 = vadd.f32 %v441, %v1105
      %v1107 = vpop.f32.mrb[0].mxu0
      %v1108 = vpop.f32.mrb[0].mxu0
      %v1109 = vadd.f32 %v441, %v1108
      %v1110 = vpop.f32.mrb[0].mxu0
      %1111 = vmatprep.mubr.bf16.mxu0 0
      %1112 = vmatmul.mubr.bf16.gmra.mrb[0].mxu0 %v634
      %v1113 = vpop.f32.mrb[0].mxu0
      %v1114 = vadd.f32 %v441, %v1113
      %v1115 = vpop.f32.mrb[0].mxu0
      %v1116 = vpop.f32.mrb[0].mxu0
      %v1117 = vadd.f32 %v441, %v1116
      %v1118 = vpop.f32.mrb[0].mxu0
      %1119 = vmatprep.mubr.bf16.mxu0 0
      %1120 = vmatmul.mubr.bf16.gmra.mrb[0].mxu0 %v637
      %v1121 = vpop.f32.mrb[0].mxu0
      %v1122 = vadd.f32 %v441, %v1121
      %v1123 = vpop.f32.mrb[0].mxu0
      %v1124 = vpop.f32.mrb[0].mxu0
      %v1125 = vadd.f32 %v441, %v1124
      %v1126 = vpop.f32.mrb[0].mxu0
      %1127 = vmatprep.mubr.bf16.mxu0 0
      %1128 = vmatmul.mubr.bf16.gmra.mrb[0].mxu0 %v640
      %v1129 = vpop.f32.mrb[0].mxu0
      %v1130 = vadd.f32 %v441, %v1129
      %v1131 = vpop.f32.mrb[0].mxu0
      %v1132 = vpop.f32.mrb[0].mxu0
      %v1133 = vadd.f32 %v441, %v1132
      %v1134 = vpop.f32.mrb[0].mxu0
      %1135 = vmatprep.mubr.bf16.mxu0 0
      %1136 = vmatmul.mubr.bf16.gmra.mrb[0].mxu0 %v643
      %v1137 = vpop.f32.mrb[0].mxu0
      %v1138 = vadd.f32 %v441, %v1137
      %v1139 = vpop.f32.mrb[0].mxu0
      %v1140 = vpop.f32.mrb[0].mxu0
      %v1141 = vadd.f32 %v441, %v1140
      %v1142 = vpop.f32.mrb[0].mxu0
      %1143 = vmatprep.mubr.bf16.mxu0 0
      %1144 = vmatmul.mubr.bf16.gmra.mrb[0].mxu0 %v646
      %v1145 = vpop.f32.mrb[0].mxu0
      %v1146 = vadd.f32 %v441, %v1145
      %v1147 = vpop.f32.mrb[0].mxu0
      %v1148 = vpop.f32.mrb[0].mxu0
      %v1149 = vadd.f32 %v441, %v1148
      %v1150 = vpop.f32.mrb[0].mxu0
      %1151 = vmatprep.mubr.bf16.mxu0 0
      %1152 = vmatmul.mubr.bf16.gmra.mrb[0].mxu0 %v649
      %v1153 = vpop.f32.mrb[0].mxu0
      %v1154 = vadd.f32 %v441, %v1153
      %v1155 = vpop.f32.mrb[0].mxu0
      %v1156 = vpop.f32.mrb[0].mxu0
      %v1157 = vadd.f32 %v441, %v1156
      %v1158 = vpop.f32.mrb[0].mxu0
      %1159 = vmatprep.mubr.bf16.mxu0 0
      %1160 = vmatmul.mubr.bf16.gmra.mrb[0].mxu0 %v652
      %v1161 = vpop.f32.mrb[0].mxu0
      %v1162 = vadd.f32 %v441, %v1161
      %v1163 = vpop.f32.mrb[0].mxu0
      %v1164 = vpop.f32.mrb[0].mxu0
      %v1165 = vadd.f32 %v441, %v1164
      %v1166 = vpop.f32.mrb[0].mxu0
      %1167 = vmatprep.mubr.bf16.mxu0 0
      %1168 = vmatmul.mubr.bf16.gmra.mrb[0].mxu0 %v655
      %v1169 = vpop.f32.mrb[0].mxu0
      %v1170 = vadd.f32 %v441, %v1169
      %v1171 = vpop.f32.mrb[0].mxu0
      %v1172 = vpop.f32.mrb[0].mxu0
      %v1173 = vadd.f32 %v441, %v1172
      %v1174 = vpop.f32.mrb[0].mxu0
      %1175 = vmatprep.mubr.bf16.mxu0 0
      %1176 = vmatmul.mubr.bf16.gmra.mrb[0].mxu0 %v658
      %v1177 = vpop.f32.mrb[0].mxu0
      %v1178 = vadd.f32 %v441, %v1177
      %v1179 = vpop.f32.mrb[0].mxu0
      %v1180 = vpop.f32.mrb[0].mxu0
      %v1181 = vadd.f32 %v441, %v1180
      %v1182 = vpop.f32.mrb[0].mxu0
      %1183 = vmatprep.mubr.bf16.mxu0 0
      %1184 = vmatmul.mubr.bf16.gmra.mrb[0].mxu0 %v661
      %v1185 = vpop.f32.mrb[0].mxu0
      %v1186 = vadd.f32 %v441, %v1185
      %v1187 = vpop.f32.mrb[0].mxu0
      %v1188 = vpop.f32.mrb[0].mxu0
      %v1189 = vadd.f32 %v441, %v1188
      %v1190 = vpop.f32.mrb[0].mxu0
      %1191 = vmatprep.mubr.bf16.mxu0 0
      %1192 = vmatmul.mubr.bf16.gmra.mrb[0].mxu0 %v664
      %v1193 = vpop.f32.mrb[0].mxu0
      %v1194 = vadd.f32 %v441, %v1193
      %v1195 = vpop.f32.mrb[0].mxu0
      %v1196 = vpop.f32.mrb[0].mxu0
      %v1197 = vadd.f32 %v441, %v1196
      %v1198 = vpop.f32.mrb[0].mxu0
      %1199 = vmatprep.mubr.bf16.mxu0 0
      %1200 = vmatmul.mubr.bf16.gmra.mrb[0].mxu0 %v667
      %v1201 = vpop.f32.mrb[0].mxu0
      %v1202 = vadd.f32 %v441, %v1201
      %v1203 = vpop.f32.mrb[0].mxu0
      %v1204 = vpop.f32.mrb[0].mxu0
      %v1205 = vadd.f32 %v441, %v1204
      %v1206 = vpop.f32.mrb[0].mxu0
      %1207 = vmatprep.mubr.bf16.mxu0 0
      %1208 = vmatmul.mubr.bf16.gmra.mrb[0].mxu0 %v670
      %v1209 = vpop.f32.mrb[0].mxu0
      %v1210 = vadd.f32 %v441, %v1209
      %v1211 = vpop.f32.mrb[0].mxu0
      %v1212 = vpop.f32.mrb[0].mxu0
      %v1213 = vadd.f32 %v441, %v1212
      %v1214 = vpop.f32.mrb[0].mxu0
      %1215 = vmatprep.mubr.bf16.mxu0 0
      %1216 = vmatmul.mubr.bf16.gmra.mrb[0].mxu0 %v673
      %v1217 = vpop.f32.mrb[0].mxu0
      %v1218 = vadd.f32 %v441, %v1217
      %v1219 = vpop.f32.mrb[0].mxu0
      %v1220 = vpop.f32.mrb[0].mxu0
      %v1221 = vadd.f32 %v441, %v1220
      %v1222 = vpop.f32.mrb[0].mxu0
      %1223 = vdwg.mxu0
      %v1224 = vmax.f32 %v714, 0.0
      %v1225 = vmax.f32 %v717, 0.0
      %v1226 = vmax.f32 %v722, 0.0
      %v1227 = vmax.f32 %v725, 0.0
      %v1228 = vmax.f32 %v730, 0.0
      %v1229 = vmax.f32 %v733, 0.0
      %v1230 = vmax.f32 %v738, 0.0
      %v1231 = vmax.f32 %v741, 0.0
      %v1232 = vmax.f32 %v746, 0.0
      %v1233 = vmax.f32 %v749, 0.0
      %v1234 = vmax.f32 %v754, 0.0
      %v1235 = vmax.f32 %v757, 0.0
      %v1236 = vmax.f32 %v762, 0.0
      %v1237 = vmax.f32 %v765, 0.0
      %v1238 = vmax.f32 %v770, 0.0
      %v1239 = vmax.f32 %v773, 0.0
      %v1240 = vmax.f32 %v778, 0.0
      %v1241 = vmax.f32 %v781, 0.0
      %v1242 = vmax.f32 %v786, 0.0
      %v1243 = vmax.f32 %v789, 0.0
      %v1244 = vmax.f32 %v794, 0.0
      %v1245 = vmax.f32 %v797, 0.0
      %v1246 = vmax.f32 %v802, 0.0
      %v1247 = vmax.f32 %v805, 0.0
      %v1248 = vmax.f32 %v810, 0.0
      %v1249 = vmax.f32 %v813, 0.0
      %v1250 = vmax.f32 %v818, 0.0
      %v1251 = vmax.f32 %v821, 0.0
      %v1252 = vmax.f32 %v826, 0.0
      %v1253 = vmax.f32 %v829, 0.0
      %v1254 = vmax.f32 %v834, 0.0
      %v1255 = vmax.f32 %v837, 0.0
      %v1256 = vmax.f32 %v842, 0.0
      %v1257 = vmax.f32 %v845, 0.0
      %v1258 = vmax.f32 %v850, 0.0
      %v1259 = vmax.f32 %v853, 0.0
      %v1260 = vmax.f32 %v858, 0.0
      %v1261 = vmax.f32 %v861, 0.0
      %v1262 = vmax.f32 %v866, 0.0
      %v1263 = vmax.f32 %v869, 0.0
      %v1264 = vmax.f32 %v874, 0.0
      %v1265 = vmax.f32 %v877, 0.0
      %v1266 = vmax.f32 %v882, 0.0
      %v1267 = vmax.f32 %v885, 0.0
      %v1268 = vmax.f32 %v890, 0.0
      %v1269 = vmax.f32 %v893, 0.0
      %v1270 = vmax.f32 %v898, 0.0
      %v1271 = vmax.f32 %v901, 0.0
      %v1272 = vmax.f32 %v906, 0.0
      %v1273 = vmax.f32 %v909, 0.0
      %v1274 = vmax.f32 %v914, 0.0
      %v1275 = vmax.f32 %v917, 0.0
      %v1276 = vmax.f32 %v922, 0.0
      %v1277 = vmax.f32 %v925, 0.0
      %v1278 = vmax.f32 %v930, 0.0
      %v1279 = vmax.f32 %v933, 0.0
      %v1280 = vmax.f32 %v938, 0.0
      %v1281 = vmax.f32 %v941, 0.0
      %v1282 = vmax.f32 %v946, 0.0
      %v1283 = vmax.f32 %v949, 0.0
      %v1284 = vmax.f32 %v954, 0.0
      %v1285 = vmax.f32 %v957, 0.0
      %v1286 = vmax.f32 %v962, 0.0
      %v1287 = vmax.f32 %v965, 0.0
      %v1288 = vmax.f32 %v970, 0.0
      %v1289 = vmax.f32 %v973, 0.0
      %v1290 = vmax.f32 %v978, 0.0
      %v1291 = vmax.f32 %v981, 0.0
      %v1292 = vmax.f32 %v986, 0.0
      %v1293 = vmax.f32 %v989, 0.0
      %v1294 = vmax.f32 %v994, 0.0
      %v1295 = vmax.f32 %v997, 0.0
      %v1296 = vmax.f32 %v1002, 0.0
      %v1297 = vmax.f32 %v1005, 0.0
      %v1298 = vmax.f32 %v1010, 0.0
      %v1299 = vmax.f32 %v1013, 0.0
      %v1300 = vmax.f32 %v1018, 0.0
      %v1301 = vmax.f32 %v1021, 0.0
      %v1302 = vmax.f32 %v1026, 0.0
      %v1303 = vmax.f32 %v1029, 0.0
      %v1304 = vmax.f32 %v1034, 0.0
      %v1305 = vmax.f32 %v1037, 0.0
      %v1306 = vmax.f32 %v1042, 0.0
      %v1307 = vmax.f32 %v1045, 0.0
      %v1308 = vmax.f32 %v1050, 0.0
      %v1309 = vmax.f32 %v1053, 0.0
      %v1310 = vmax.f32 %v1058, 0.0
      %v1311 = vmax.f32 %v1061, 0.0
      %v1312 = vmax.f32 %v1066, 0.0
      %v1313 = vmax.f32 %v1069, 0.0
      %v1314 = vmax.f32 %v1074, 0.0
      %v1315 = vmax.f32 %v1077, 0.0
      %v1316 = vmax.f32 %v1082, 0.0
      %v1317 = vmax.f32 %v1085, 0.0
      %v1318 = vmax.f32 %v1090, 0.0
      %v1319 = vmax.f32 %v1093, 0.0
      %v1320 = vmax.f32 %v1098, 0.0
      %v1321 = vmax.f32 %v1101, 0.0
      %v1322 = vmax.f32 %v1106, 0.0
      %v1323 = vmax.f32 %v1109, 0.0
      %v1324 = vmax.f32 %v1114, 0.0
      %v1325 = vmax.f32 %v1117, 0.0
      %v1326 = vmax.f32 %v1122, 0.0
      %v1327 = vmax.f32 %v1125, 0.0
      %v1328 = vmax.f32 %v1130, 0.0
      %v1329 = vmax.f32 %v1133, 0.0
      %v1330 = vmax.f32 %v1138, 0.0
      %v1331 = vmax.f32 %v1141, 0.0
      %v1332 = vmax.f32 %v1146, 0.0
      %v1333 = vmax.f32 %v1149, 0.0
      %v1334 = vmax.f32 %v1154, 0.0
      %v1335 = vmax.f32 %v1157, 0.0
      %v1336 = vmax.f32 %v1162, 0.0
      %v1337 = vmax.f32 %v1165, 0.0
      %v1338 = vmax.f32 %v1170, 0.0
      %v1339 = vmax.f32 %v1173, 0.0
      %v1340 = vmax.f32 %v1178, 0.0
      %v1341 = vmax.f32 %v1181, 0.0
      %v1342 = vmax.f32 %v1186, 0.0
      %v1343 = vmax.f32 %v1189, 0.0
      %v1344 = vmax.f32 %v1194, 0.0
      %v1345 = vmax.f32 %v1197, 0.0
      %v1346 = vmax.f32 %v1202, 0.0
      %v1347 = vmax.f32 %v1205, 0.0
      %v1348 = vmax.f32 %v1210, 0.0
      %v1349 = vmax.f32 %v1213, 0.0
      %v1350 = vmax.f32 %v1218, 0.0
      %v1351 = vmax.f32 %v1221, 0.0
      %v1352 = vpack.c.bf16 %v1225, %v1224
      %v1353 = vpack.c.bf16 %v1227, %v1226
      %v1354 = vpack.c.bf16 %v1229, %v1228
      %v1355 = vpack.c.bf16 %v1231, %v1230
      %v1356 = vpack.c.bf16 %v1233, %v1232
      %v1357 = vpack.c.bf16 %v1235, %v1234
      %v1358 = vpack.c.bf16 %v1237, %v1236
      %v1359 = vpack.c.bf16 %v1239, %v1238
      %v1360 = vpack.c.bf16 %v1241, %v1240
      %v1361 = vpack.c.bf16 %v1243, %v1242
      %v1362 = vpack.c.bf16 %v1245, %v1244
      %v1363 = vpack.c.bf16 %v1247, %v1246
      %v1364 = vpack.c.bf16 %v1249, %v1248
      %v1365 = vpack.c.bf16 %v1251, %v1250
      %v1366 = vpack.c.bf16 %v1253, %v1252
      %v1367 = vpack.c.bf16 %v1255, %v1254
      %v1368 = vpack.c.bf16 %v1257, %v1256
      %v1369 = vpack.c.bf16 %v1259, %v1258
      %v1370 = vpack.c.bf16 %v1261, %v1260
      %v1371 = vpack.c.bf16 %v1263, %v1262
      %v1372 = vpack.c.bf16 %v1265, %v1264
      %v1373 = vpack.c.bf16 %v1267, %v1266
      %v1374 = vpack.c.bf16 %v1269, %v1268
      %v1375 = vpack.c.bf16 %v1271, %v1270
      %v1376 = vpack.c.bf16 %v1273, %v1272
      %v1377 = vpack.c.bf16 %v1275, %v1274
      %v1378 = vpack.c.bf16 %v1277, %v1276
      %v1379 = vpack.c.bf16 %v1279, %v1278
      %v1380 = vpack.c.bf16 %v1281, %v1280
      %v1381 = vpack.c.bf16 %v1283, %v1282
      %v1382 = vpack.c.bf16 %v1285, %v1284
      %v1383 = vpack.c.bf16 %v1287, %v1286
      %v1384 = vpack.c.bf16 %v1289, %v1288
      %v1385 = vpack.c.bf16 %v1291, %v1290
      %v1386 = vpack.c.bf16 %v1293, %v1292
      %v1387 = vpack.c.bf16 %v1295, %v1294
      %v1388 = vpack.c.bf16 %v1297, %v1296
      %v1389 = vpack.c.bf16 %v1299, %v1298
      %v1390 = vpack.c.bf16 %v1301, %v1300
      %v1391 = vpack.c.bf16 %v1303, %v1302
      %v1392 = vpack.c.bf16 %v1305, %v1304
      %v1393 = vpack.c.bf16 %v1307, %v1306
      %v1394 = vpack.c.bf16 %v1309, %v1308
      %v1395 = vpack.c.bf16 %v1311, %v1310
      %v1396 = vpack.c.bf16 %v1313, %v1312
      %v1397 = vpack.c.bf16 %v1315, %v1314
      %v1398 = vpack.c.bf16 %v1317, %v1316
      %v1399 = vpack.c.bf16 %v1319, %v1318
      %v1400 = vpack.c.bf16 %v1321, %v1320
      %v1401 = vpack.c.bf16 %v1323, %v1322
      %v1402 = vpack.c.bf16 %v1325, %v1324
      %v1403 = vpack.c.bf16 %v1327, %v1326
      %v1404 = vpack.c.bf16 %v1329, %v1328
      %v1405 = vpack.c.bf16 %v1331, %v1330
      %v1406 = vpack.c.bf16 %v1333, %v1332
      %v1407 = vpack.c.bf16 %v1335, %v1334
      %v1408 = vpack.c.bf16 %v1337, %v1336
      %v1409 = vpack.c.bf16 %v1339, %v1338
      %v1410 = vpack.c.bf16 %v1341, %v1340
      %v1411 = vpack.c.bf16 %v1343, %v1342
      %v1412 = vpack.c.bf16 %v1345, %v1344
      %v1413 = vpack.c.bf16 %v1347, %v1346
      %v1414 = vpack.c.bf16 %v1349, %v1348
      %v1415 = vpack.c.bf16 %v1351, %v1350
      %v1416 = vld [vmem:[%s3] sm:$0xff]
      %v1417 = vld [vmem:[%s3 + $0x8] sm:$0xff]
      %v1418 = vld [vmem:[%s3 + $0x10] sm:$0xff]
      %v1419 = vld [vmem:[%s3 + $0x18] sm:$0xff]
      %v1420 = vld [vmem:[%s3 + $0x20] sm:$0xff]
      %v1421 = vld [vmem:[%s3 + $0x28] sm:$0xff]
      %v1422 = vld [vmem:[%s3 + $0x30] sm:$0xff]
      %v1423 = vld [vmem:[%s3 + $0x38] sm:$0xff]
      %v1424 = vld [vmem:[%s3 + $0x40] sm:$0xff]
      %v1425 = vld [vmem:[%s3 + $0x48] sm:$0xff]
      %v1426 = vld [vmem:[%s3 + $0x50] sm:$0xff]
      %v1427 = vld [vmem:[%s3 + $0x58] sm:$0xff]
      %v1428 = vld [vmem:[%s3 + $0x60] sm:$0xff]
      %v1429 = vld [vmem:[%s3 + $0x68] sm:$0xff]
      %v1430 = vld [vmem:[%s3 + $0x70] sm:$0xff]
      %v1431 = vld [vmem:[%s3 + $0x78] sm:$0xff]
      %v1432 = vld [vmem:[%s4] sm:$0x3]
      %v1434 = vlaneseq
      %v1435 = vshrl.u32 %v1434, 7
      %v1436 = vsub.s32 0, %v1435
      %v1437 = vrot.slane %v1432, %v1436
      %v1438 = vlaneseq
      %v1439 = vshrl.u32 %v1438, 7
      %v1440 = vsub.s32 1, %v1439
      %v1441 = vrot.slane %v1432, %v1440
      %v1460 = vunpack.c.l.b16 %v1416
      %v1461 = vunpack.c.h.b16 %v1416
      %v1462 = vunpack.c.l.b16 %v1417
      %v1463 = vunpack.c.h.b16 %v1417
      %v1464 = vunpack.c.l.b16 %v1418
      %v1465 = vunpack.c.h.b16 %v1418
      %v1466 = vunpack.c.l.b16 %v1419
      %v1467 = vunpack.c.h.b16 %v1419
      %v1468 = vunpack.c.l.b16 %v1420
      %v1469 = vunpack.c.h.b16 %v1420
      %v1470 = vunpack.c.l.b16 %v1421
      %v1471 = vunpack.c.h.b16 %v1421
      %v1472 = vunpack.c.l.b16 %v1422
      %v1473 = vunpack.c.h.b16 %v1422
      %v1474 = vunpack.c.l.b16 %v1423
      %v1475 = vunpack.c.h.b16 %v1423
      %v1476 = vunpack.c.l.b16 %v1424
      %v1477 = vunpack.c.h.b16 %v1424
      %v1478 = vunpack.c.l.b16 %v1425
      %v1479 = vunpack.c.h.b16 %v1425
      %v1480 = vunpack.c.l.b16 %v1426
      %v1481 = vunpack.c.h.b16 %v1426
      %v1482 = vunpack.c.l.b16 %v1427
      %v1483 = vunpack.c.h.b16 %v1427
      %v1484 = vunpack.c.l.b16 %v1428
      %v1485 = vunpack.c.h.b16 %v1428
      %v1486 = vunpack.c.l.b16 %v1429
      %v1487 = vunpack.c.h.b16 %v1429
      %v1488 = vunpack.c.l.b16 %v1430
      %v1489 = vunpack.c.h.b16 %v1430
      %v1490 = vunpack.c.l.b16 %v1431
      %v1491 = vunpack.c.h.b16 %v1431
      %v1492 = vpack.c.b16 %v1462, %v1460
      %v1493 = vpack.c.b16 %v1463, %v1461
      %v1494 = vpack.c.b16 %v1466, %v1464
      %v1495 = vpack.c.b16 %v1467, %v1465
      %v1496 = vpack.c.b16 %v1470, %v1468
      %v1497 = vpack.c.b16 %v1471, %v1469
      %v1498 = vpack.c.b16 %v1474, %v1472
      %v1499 = vpack.c.b16 %v1475, %v1473
      %v1500 = vpack.c.b16 %v1478, %v1476
      %v1501 = vpack.c.b16 %v1479, %v1477
      %v1502 = vpack.c.b16 %v1482, %v1480
      %v1503 = vpack.c.b16 %v1483, %v1481
      %v1504 = vpack.c.b16 %v1486, %v1484
      %v1505 = vpack.c.b16 %v1487, %v1485
      %v1506 = vpack.c.b16 %v1490, %v1488
      %v1507 = vpack.c.b16 %v1491, %v1489
      %1524 = vmatprep.subr.bf16.mxu0 %v1493
      %1525 = vmatpush1.bf16.msra.mxu0 %v1492
      %1526 = vmatprep.subr.bf16.mxu0 %v1495
      %1527 = vmatpush1.bf16.msra.mxu0 %v1494
      %1528 = vmatprep.subr.bf16.mxu0 %v1497
      %1529 = vmatpush1.bf16.msra.mxu0 %v1496
      %1530 = vmatprep.subr.bf16.mxu0 %v1499
      %1531 = vmatpush1.bf16.msra.mxu0 %v1498
      %1532 = vmatprep.subr.bf16.mxu0 %v1501
      %1533 = vmatpush1.bf16.msra.mxu0 %v1500
      %1534 = vmatprep.subr.bf16.mxu0 %v1503
      %1535 = vmatpush1.bf16.msra.mxu0 %v1502
      %1536 = vmatprep.subr.bf16.mxu0 %v1505
      %1537 = vmatpush1.bf16.msra.mxu0 %v1504
      %1538 = vmatprep.subr.bf16.mxu0 %v1507
      %1539 = vmatpush1.bf16.msra.mxu0 %v1506
      %1540 = vmatprep.subr.bf16.mxu0 0
      %1541 = vmatpush1.bf16.msra.mxu0 0
      %1542 = vmatprep.subr.bf16.mxu0 0
      %1543 = vmatpush1.bf16.msra.mxu0 0
      %1544 = vmatprep.subr.bf16.mxu0 0
      %1545 = vmatpush1.bf16.msra.mxu0 0
      %1546 = vmatprep.subr.bf16.mxu0 0
      %1547 = vmatpush1.bf16.msra.mxu0 0
      %1548 = vmatprep.subr.bf16.mxu0 0
      %1549 = vmatpush1.bf16.msra.mxu0 0
      %1550 = vmatprep.subr.bf16.mxu0 0
      %1551 = vmatpush1.bf16.msra.mxu0 0
      %1552 = vmatprep.subr.bf16.mxu0 0
      %1553 = vmatpush1.bf16.msra.mxu0 0
      %1554 = vmatprep.subr.bf16.mxu0 0
      %1555 = vmatpush1.bf16.msra.mxu0 0
      %1556 = vmatprep.mubr.bf16.mxu0 0
      %1557 = vmatmul.mubr.bf16.gmra.mrb[0].mxu0 %v1352
      %v1558 = vpop.f32.mrb[0].mxu0
      %v1559 = vadd.f32 %v1437, %v1558
      %v1560 = vpop.f32.mrb[0].mxu0
      %v1561 = vadd.f32 %v1441, %v1560
      %v1562 = vpop.f32.mrb[0].mxu0
      %v1563 = vadd.f32 %v1437, %v1562
      %v1564 = vpop.f32.mrb[0].mxu0
      %v1565 = vadd.f32 %v1441, %v1564
      %1566 = vmatprep.mubr.bf16.mxu0 0
      %1567 = vmatmul.mubr.bf16.gmra.mrb[0].mxu0 %v1353
      %v1568 = vpop.f32.mrb[0].mxu0
      %v1569 = vadd.f32 %v1437, %v1568
      %v1570 = vpop.f32.mrb[0].mxu0
      %v1571 = vadd.f32 %v1441, %v1570
      %v1572 = vpop.f32.mrb[0].mxu0
      %v1573 = vadd.f32 %v1437, %v1572
      %v1574 = vpop.f32.mrb[0].mxu0
      %v1575 = vadd.f32 %v1441, %v1574
      %1576 = vmatprep.mubr.bf16.mxu0 0
      %1577 = vmatmul.mubr.bf16.gmra.mrb[0].mxu0 %v1354
      %v1578 = vpop.f32.mrb[0].mxu0
      %v1579 = vadd.f32 %v1437, %v1578
      %v1580 = vpop.f32.mrb[0].mxu0
      %v1581 = vadd.f32 %v1441, %v1580
      %v1582 = vpop.f32.mrb[0].mxu0
      %v1583 = vadd.f32 %v1437, %v1582
      %v1584 = vpop.f32.mrb[0].mxu0
      %v1585 = vadd.f32 %v1441, %v1584
      %1586 = vmatprep.mubr.bf16.mxu0 0
      %1587 = vmatmul.mubr.bf16.gmra.mrb[0].mxu0 %v1355
      %v1588 = vpop.f32.mrb[0].mxu0
      %v1589 = vadd.f32 %v1437, %v1588
      %v1590 = vpop.f32.mrb[0].mxu0
      %v1591 = vadd.f32 %v1441, %v1590
      %v1592 = vpop.f32.mrb[0].mxu0
      %v1593 = vadd.f32 %v1437, %v1592
      %v1594 = vpop.f32.mrb[0].mxu0
      %v1595 = vadd.f32 %v1441, %v1594
      %1596 = vmatprep.mubr.bf16.mxu0 0
      %1597 = vmatmul.mubr.bf16.gmra.mrb[0].mxu0 %v1356
      %v1598 = vpop.f32.mrb[0].mxu0
      %v1599 = vadd.f32 %v1437, %v1598
      %v1600 = vpop.f32.mrb[0].mxu0
      %v1601 = vadd.f32 %v1441, %v1600
      %v1602 = vpop.f32.mrb[0].mxu0
      %v1603 = vadd.f32 %v1437, %v1602
      %v1604 = vpop.f32.mrb[0].mxu0
      %v1605 = vadd.f32 %v1441, %v1604
      %1606 = vmatprep.mubr.bf16.mxu0 0
      %1607 = vmatmul.mubr.bf16.gmra.mrb[0].mxu0 %v1357
      %v1608 = vpop.f32.mrb[0].mxu0
      %v1609 = vadd.f32 %v1437, %v1608
      %v1610 = vpop.f32.mrb[0].mxu0
      %v1611 = vadd.f32 %v1441, %v1610
      %v1612 = vpop.f32.mrb[0].mxu0
      %v1613 = vadd.f32 %v1437, %v1612
      %v1614 = vpop.f32.mrb[0].mxu0
      %v1615 = vadd.f32 %v1441, %v1614
      %1616 = vmatprep.mubr.bf16.mxu0 0
      %1617 = vmatmul.mubr.bf16.gmra.mrb[0].mxu0 %v1358
      %v1618 = vpop.f32.mrb[0].mxu0
      %v1619 = vadd.f32 %v1437, %v1618
      %v1620 = vpop.f32.mrb[0].mxu0
      %v1621 = vadd.f32 %v1441, %v1620
      %v1622 = vpop.f32.mrb[0].mxu0
      %v1623 = vadd.f32 %v1437, %v1622
      %v1624 = vpop.f32.mrb[0].mxu0
      %v1625 = vadd.f32 %v1441, %v1624
      %1626 = vmatprep.mubr.bf16.mxu0 0
      %1627 = vmatmul.mubr.bf16.gmra.mrb[0].mxu0 %v1359
      %v1628 = vpop.f32.mrb[0].mxu0
      %v1629 = vadd.f32 %v1437, %v1628
      %v1630 = vpop.f32.mrb[0].mxu0
      %v1631 = vadd.f32 %v1441, %v1630
      %v1632 = vpop.f32.mrb[0].mxu0
      %v1633 = vadd.f32 %v1437, %v1632
      %v1634 = vpop.f32.mrb[0].mxu0
      %v1635 = vadd.f32 %v1441, %v1634
      %1636 = vmatprep.mubr.bf16.mxu0 0
      %1637 = vmatmul.mubr.bf16.gmra.mrb[0].mxu0 %v1360
      %v1638 = vpop.f32.mrb[0].mxu0
      %v1639 = vadd.f32 %v1437, %v1638
      %v1640 = vpop.f32.mrb[0].mxu0
      %v1641 = vadd.f32 %v1441, %v1640
      %v1642 = vpop.f32.mrb[0].mxu0
      %v1643 = vadd.f32 %v1437, %v1642
      %v1644 = vpop.f32.mrb[0].mxu0
      %v1645 = vadd.f32 %v1441, %v1644
      %1646 = vmatprep.mubr.bf16.mxu0 0
      %1647 = vmatmul.mubr.bf16.gmra.mrb[0].mxu0 %v1361
      %v1648 = vpop.f32.mrb[0].mxu0
      %v1649 = vadd.f32 %v1437, %v1648
      %v1650 = vpop.f32.mrb[0].mxu0
      %v1651 = vadd.f32 %v1441, %v1650
      %v1652 = vpop.f32.mrb[0].mxu0
      %v1653 = vadd.f32 %v1437, %v1652
      %v1654 = vpop.f32.mrb[0].mxu0
      %v1655 = vadd.f32 %v1441, %v1654
      %1656 = vmatprep.mubr.bf16.mxu0 0
      %1657 = vmatmul.mubr.bf16.gmra.mrb[0].mxu0 %v1362
      %v1658 = vpop.f32.mrb[0].mxu0
      %v1659 = vadd.f32 %v1437, %v1658
      %v1660 = vpop.f32.mrb[0].mxu0
      %v1661 = vadd.f32 %v1441, %v1660
      %v1662 = vpop.f32.mrb[0].mxu0
      %v1663 = vadd.f32 %v1437, %v1662
      %v1664 = vpop.f32.mrb[0].mxu0
      %v1665 = vadd.f32 %v1441, %v1664
      %1666 = vmatprep.mubr.bf16.mxu0 0
      %1667 = vmatmul.mubr.bf16.gmra.mrb[0].mxu0 %v1363
      %v1668 = vpop.f32.mrb[0].mxu0
      %v1669 = vadd.f32 %v1437, %v1668
      %v1670 = vpop.f32.mrb[0].mxu0
      %v1671 = vadd.f32 %v1441, %v1670
      %v1672 = vpop.f32.mrb[0].mxu0
      %v1673 = vadd.f32 %v1437, %v1672
      %v1674 = vpop.f32.mrb[0].mxu0
      %v1675 = vadd.f32 %v1441, %v1674
      %1676 = vmatprep.mubr.bf16.mxu0 0
      %1677 = vmatmul.mubr.bf16.gmra.mrb[0].mxu0 %v1364
      %v1678 = vpop.f32.mrb[0].mxu0
      %v1679 = vadd.f32 %v1437, %v1678
      %v1680 = vpop.f32.mrb[0].mxu0
      %v1681 = vadd.f32 %v1441, %v1680
      %v1682 = vpop.f32.mrb[0].mxu0
      %v1683 = vadd.f32 %v1437, %v1682
      %v1684 = vpop.f32.mrb[0].mxu0
      %v1685 = vadd.f32 %v1441, %v1684
      %1686 = vmatprep.mubr.bf16.mxu0 0
      %1687 = vmatmul.mubr.bf16.gmra.mrb[0].mxu0 %v1365
      %v1688 = vpop.f32.mrb[0].mxu0
      %v1689 = vadd.f32 %v1437, %v1688
      %v1690 = vpop.f32.mrb[0].mxu0
      %v1691 = vadd.f32 %v1441, %v1690
      %v1692 = vpop.f32.mrb[0].mxu0
      %v1693 = vadd.f32 %v1437, %v1692
      %v1694 = vpop.f32.mrb[0].mxu0
      %v1695 = vadd.f32 %v1441, %v1694
      %1696 = vmatprep.mubr.bf16.mxu0 0
      %1697 = vmatmul.mubr.bf16.gmra.mrb[0].mxu0 %v1366
      %v1698 = vpop.f32.mrb[0].mxu0
      %v1699 = vadd.f32 %v1437, %v1698
      %v1700 = vpop.f32.mrb[0].mxu0
      %v1701 = vadd.f32 %v1441, %v1700
      %v1702 = vpop.f32.mrb[0].mxu0
      %v1703 = vadd.f32 %v1437, %v1702
      %v1704 = vpop.f32.mrb[0].mxu0
      %v1705 = vadd.f32 %v1441, %v1704
      %1706 = vmatprep.mubr.bf16.mxu0 0
      %1707 = vmatmul.mubr.bf16.gmra.mrb[0].mxu0 %v1367
      %v1708 = vpop.f32.mrb[0].mxu0
      %v1709 = vadd.f32 %v1437, %v1708
      %v1710 = vpop.f32.mrb[0].mxu0
      %v1711 = vadd.f32 %v1441, %v1710
      %v1712 = vpop.f32.mrb[0].mxu0
      %v1713 = vadd.f32 %v1437, %v1712
      %v1714 = vpop.f32.mrb[0].mxu0
      %v1715 = vadd.f32 %v1441, %v1714
      %1716 = vmatprep.mubr.bf16.mxu0 0
      %1717 = vmatmul.mubr.bf16.gmra.mrb[0].mxu0 %v1368
      %v1718 = vpop.f32.mrb[0].mxu0
      %v1719 = vadd.f32 %v1437, %v1718
      %v1720 = vpop.f32.mrb[0].mxu0
      %v1721 = vadd.f32 %v1441, %v1720
      %v1722 = vpop.f32.mrb[0].mxu0
      %v1723 = vadd.f32 %v1437, %v1722
      %v1724 = vpop.f32.mrb[0].mxu0
      %v1725 = vadd.f32 %v1441, %v1724
      %1726 = vmatprep.mubr.bf16.mxu0 0
      %1727 = vmatmul.mubr.bf16.gmra.mrb[0].mxu0 %v1369
      %v1728 = vpop.f32.mrb[0].mxu0
      %v1729 = vadd.f32 %v1437, %v1728
      %v1730 = vpop.f32.mrb[0].mxu0
      %v1731 = vadd.f32 %v1441, %v1730
      %v1732 = vpop.f32.mrb[0].mxu0
      %v1733 = vadd.f32 %v1437, %v1732
      %v1734 = vpop.f32.mrb[0].mxu0
      %v1735 = vadd.f32 %v1441, %v1734
      %1736 = vmatprep.mubr.bf16.mxu0 0
      %1737 = vmatmul.mubr.bf16.gmra.mrb[0].mxu0 %v1370
      %v1738 = vpop.f32.mrb[0].mxu0
      %v1739 = vadd.f32 %v1437, %v1738
      %v1740 = vpop.f32.mrb[0].mxu0
      %v1741 = vadd.f32 %v1441, %v1740
      %v1742 = vpop.f32.mrb[0].mxu0
      %v1743 = vadd.f32 %v1437, %v1742
      %v1744 = vpop.f32.mrb[0].mxu0
      %v1745 = vadd.f32 %v1441, %v1744
      %1746 = vmatprep.mubr.bf16.mxu0 0
      %1747 = vmatmul.mubr.bf16.gmra.mrb[0].mxu0 %v1371
      %v1748 = vpop.f32.mrb[0].mxu0
      %v1749 = vadd.f32 %v1437, %v1748
      %v1750 = vpop.f32.mrb[0].mxu0
      %v1751 = vadd.f32 %v1441, %v1750
      %v1752 = vpop.f32.mrb[0].mxu0
      %v1753 = vadd.f32 %v1437, %v1752
      %v1754 = vpop.f32.mrb[0].mxu0
      %v1755 = vadd.f32 %v1441, %v1754
      %1756 = vmatprep.mubr.bf16.mxu0 0
      %1757 = vmatmul.mubr.bf16.gmra.mrb[0].mxu0 %v1372
      %v1758 = vpop.f32.mrb[0].mxu0
      %v1759 = vadd.f32 %v1437, %v1758
      %v1760 = vpop.f32.mrb[0].mxu0
      %v1761 = vadd.f32 %v1441, %v1760
      %v1762 = vpop.f32.mrb[0].mxu0
      %v1763 = vadd.f32 %v1437, %v1762
      %v1764 = vpop.f32.mrb[0].mxu0
      %v1765 = vadd.f32 %v1441, %v1764
      %1766 = vmatprep.mubr.bf16.mxu0 0
      %1767 = vmatmul.mubr.bf16.gmra.mrb[0].mxu0 %v1373
      %v1768 = vpop.f32.mrb[0].mxu0
      %v1769 = vadd.f32 %v1437, %v1768
      %v1770 = vpop.f32.mrb[0].mxu0
      %v1771 = vadd.f32 %v1441, %v1770
      %v1772 = vpop.f32.mrb[0].mxu0
      %v1773 = vadd.f32 %v1437, %v1772
      %v1774 = vpop.f32.mrb[0].mxu0
      %v1775 = vadd.f32 %v1441, %v1774
      %1776 = vmatprep.mubr.bf16.mxu0 0
      %1777 = vmatmul.mubr.bf16.gmra.mrb[0].mxu0 %v1374
      %v1778 = vpop.f32.mrb[0].mxu0
      %v1779 = vadd.f32 %v1437, %v1778
      %v1780 = vpop.f32.mrb[0].mxu0
      %v1781 = vadd.f32 %v1441, %v1780
      %v1782 = vpop.f32.mrb[0].mxu0
      %v1783 = vadd.f32 %v1437, %v1782
      %v1784 = vpop.f32.mrb[0].mxu0
      %v1785 = vadd.f32 %v1441, %v1784
      %1786 = vmatprep.mubr.bf16.mxu0 0
      %1787 = vmatmul.mubr.bf16.gmra.mrb[0].mxu0 %v1375
      %v1788 = vpop.f32.mrb[0].mxu0
      %v1789 = vadd.f32 %v1437, %v1788
      %v1790 = vpop.f32.mrb[0].mxu0
      %v1791 = vadd.f32 %v1441, %v1790
      %v1792 = vpop.f32.mrb[0].mxu0
      %v1793 = vadd.f32 %v1437, %v1792
      %v1794 = vpop.f32.mrb[0].mxu0
      %v1795 = vadd.f32 %v1441, %v1794
      %1796 = vmatprep.mubr.bf16.mxu0 0
      %1797 = vmatmul.mubr.bf16.gmra.mrb[0].mxu0 %v1376
      %v1798 = vpop.f32.mrb[0].mxu0
      %v1799 = vadd.f32 %v1437, %v1798
      %v1800 = vpop.f32.mrb[0].mxu0
      %v1801 = vadd.f32 %v1441, %v1800
      %v1802 = vpop.f32.mrb[0].mxu0
      %v1803 = vadd.f32 %v1437, %v1802
      %v1804 = vpop.f32.mrb[0].mxu0
      %v1805 = vadd.f32 %v1441, %v1804
      %1806 = vmatprep.mubr.bf16.mxu0 0
      %1807 = vmatmul.mubr.bf16.gmra.mrb[0].mxu0 %v1377
      %v1808 = vpop.f32.mrb[0].mxu0
      %v1809 = vadd.f32 %v1437, %v1808
      %v1810 = vpop.f32.mrb[0].mxu0
      %v1811 = vadd.f32 %v1441, %v1810
      %v1812 = vpop.f32.mrb[0].mxu0
      %v1813 = vadd.f32 %v1437, %v1812
      %v1814 = vpop.f32.mrb[0].mxu0
      %v1815 = vadd.f32 %v1441, %v1814
      %1816 = vmatprep.mubr.bf16.mxu0 0
      %1817 = vmatmul.mubr.bf16.gmra.mrb[0].mxu0 %v1378
      %v1818 = vpop.f32.mrb[0].mxu0
      %v1819 = vadd.f32 %v1437, %v1818
      %v1820 = vpop.f32.mrb[0].mxu0
      %v1821 = vadd.f32 %v1441, %v1820
      %v1822 = vpop.f32.mrb[0].mxu0
      %v1823 = vadd.f32 %v1437, %v1822
      %v1824 = vpop.f32.mrb[0].mxu0
      %v1825 = vadd.f32 %v1441, %v1824
      %1826 = vmatprep.mubr.bf16.mxu0 0
      %1827 = vmatmul.mubr.bf16.gmra.mrb[0].mxu0 %v1379
      %v1828 = vpop.f32.mrb[0].mxu0
      %v1829 = vadd.f32 %v1437, %v1828
      %v1830 = vpop.f32.mrb[0].mxu0
      %v1831 = vadd.f32 %v1441, %v1830
      %v1832 = vpop.f32.mrb[0].mxu0
      %v1833 = vadd.f32 %v1437, %v1832
      %v1834 = vpop.f32.mrb[0].mxu0
      %v1835 = vadd.f32 %v1441, %v1834
      %1836 = vmatprep.mubr.bf16.mxu0 0
      %1837 = vmatmul.mubr.bf16.gmra.mrb[0].mxu0 %v1380
      %v1838 = vpop.f32.mrb[0].mxu0
      %v1839 = vadd.f32 %v1437, %v1838
      %v1840 = vpop.f32.mrb[0].mxu0
      %v1841 = vadd.f32 %v1441, %v1840
      %v1842 = vpop.f32.mrb[0].mxu0
      %v1843 = vadd.f32 %v1437, %v1842
      %v1844 = vpop.f32.mrb[0].mxu0
      %v1845 = vadd.f32 %v1441, %v1844
      %1846 = vmatprep.mubr.bf16.mxu0 0
      %1847 = vmatmul.mubr.bf16.gmra.mrb[0].mxu0 %v1381
      %v1848 = vpop.f32.mrb[0].mxu0
      %v1849 = vadd.f32 %v1437, %v1848
      %v1850 = vpop.f32.mrb[0].mxu0
      %v1851 = vadd.f32 %v1441, %v1850
      %v1852 = vpop.f32.mrb[0].mxu0
      %v1853 = vadd.f32 %v1437, %v1852
      %v1854 = vpop.f32.mrb[0].mxu0
      %v1855 = vadd.f32 %v1441, %v1854
      %1856 = vmatprep.mubr.bf16.mxu0 0
      %1857 = vmatmul.mubr.bf16.gmra.mrb[0].mxu0 %v1382
      %v1858 = vpop.f32.mrb[0].mxu0
      %v1859 = vadd.f32 %v1437, %v1858
      %v1860 = vpop.f32.mrb[0].mxu0
      %v1861 = vadd.f32 %v1441, %v1860
      %v1862 = vpop.f32.mrb[0].mxu0
      %v1863 = vadd.f32 %v1437, %v1862
      %v1864 = vpop.f32.mrb[0].mxu0
      %v1865 = vadd.f32 %v1441, %v1864
      %1866 = vmatprep.mubr.bf16.mxu0 0
      %1867 = vmatmul.mubr.bf16.gmra.mrb[0].mxu0 %v1383
      %v1868 = vpop.f32.mrb[0].mxu0
      %v1869 = vadd.f32 %v1437, %v1868
      %v1870 = vpop.f32.mrb[0].mxu0
      %v1871 = vadd.f32 %v1441, %v1870
      %v1872 = vpop.f32.mrb[0].mxu0
      %v1873 = vadd.f32 %v1437, %v1872
      %v1874 = vpop.f32.mrb[0].mxu0
      %v1875 = vadd.f32 %v1441, %v1874
      %1876 = vmatprep.mubr.bf16.mxu0 0
      %1877 = vmatmul.mubr.bf16.gmra.mrb[0].mxu0 %v1384
      %v1878 = vpop.f32.mrb[0].mxu0
      %v1879 = vadd.f32 %v1437, %v1878
      %v1880 = vpop.f32.mrb[0].mxu0
      %v1881 = vadd.f32 %v1441, %v1880
      %v1882 = vpop.f32.mrb[0].mxu0
      %v1883 = vadd.f32 %v1437, %v1882
      %v1884 = vpop.f32.mrb[0].mxu0
      %v1885 = vadd.f32 %v1441, %v1884
      %1886 = vmatprep.mubr.bf16.mxu0 0
      %1887 = vmatmul.mubr.bf16.gmra.mrb[0].mxu0 %v1385
      %v1888 = vpop.f32.mrb[0].mxu0
      %v1889 = vadd.f32 %v1437, %v1888
      %v1890 = vpop.f32.mrb[0].mxu0
      %v1891 = vadd.f32 %v1441, %v1890
      %v1892 = vpop.f32.mrb[0].mxu0
      %v1893 = vadd.f32 %v1437, %v1892
      %v1894 = vpop.f32.mrb[0].mxu0
      %v1895 = vadd.f32 %v1441, %v1894
      %1896 = vmatprep.mubr.bf16.mxu0 0
      %1897 = vmatmul.mubr.bf16.gmra.mrb[0].mxu0 %v1386
      %v1898 = vpop.f32.mrb[0].mxu0
      %v1899 = vadd.f32 %v1437, %v1898
      %v1900 = vpop.f32.mrb[0].mxu0
      %v1901 = vadd.f32 %v1441, %v1900
      %v1902 = vpop.f32.mrb[0].mxu0
      %v1903 = vadd.f32 %v1437, %v1902
      %v1904 = vpop.f32.mrb[0].mxu0
      %v1905 = vadd.f32 %v1441, %v1904
      %1906 = vmatprep.mubr.bf16.mxu0 0
      %1907 = vmatmul.mubr.bf16.gmra.mrb[0].mxu0 %v1387
      %v1908 = vpop.f32.mrb[0].mxu0
      %v1909 = vadd.f32 %v1437, %v1908
      %v1910 = vpop.f32.mrb[0].mxu0
      %v1911 = vadd.f32 %v1441, %v1910
      %v1912 = vpop.f32.mrb[0].mxu0
      %v1913 = vadd.f32 %v1437, %v1912
      %v1914 = vpop.f32.mrb[0].mxu0
      %v1915 = vadd.f32 %v1441, %v1914
      %1916 = vmatprep.mubr.bf16.mxu0 0
      %1917 = vmatmul.mubr.bf16.gmra.mrb[0].mxu0 %v1388
      %v1918 = vpop.f32.mrb[0].mxu0
      %v1919 = vadd.f32 %v1437, %v1918
      %v1920 = vpop.f32.mrb[0].mxu0
      %v1921 = vadd.f32 %v1441, %v1920
      %v1922 = vpop.f32.mrb[0].mxu0
      %v1923 = vadd.f32 %v1437, %v1922
      %v1924 = vpop.f32.mrb[0].mxu0
      %v1925 = vadd.f32 %v1441, %v1924
      %1926 = vmatprep.mubr.bf16.mxu0 0
      %1927 = vmatmul.mubr.bf16.gmra.mrb[0].mxu0 %v1389
      %v1928 = vpop.f32.mrb[0].mxu0
      %v1929 = vadd.f32 %v1437, %v1928
      %v1930 = vpop.f32.mrb[0].mxu0
      %v1931 = vadd.f32 %v1441, %v1930
      %v1932 = vpop.f32.mrb[0].mxu0
      %v1933 = vadd.f32 %v1437, %v1932
      %v1934 = vpop.f32.mrb[0].mxu0
      %v1935 = vadd.f32 %v1441, %v1934
      %1936 = vmatprep.mubr.bf16.mxu0 0
      %1937 = vmatmul.mubr.bf16.gmra.mrb[0].mxu0 %v1390
      %v1938 = vpop.f32.mrb[0].mxu0
      %v1939 = vadd.f32 %v1437, %v1938
      %v1940 = vpop.f32.mrb[0].mxu0
      %v1941 = vadd.f32 %v1441, %v1940
      %v1942 = vpop.f32.mrb[0].mxu0
      %v1943 = vadd.f32 %v1437, %v1942
      %v1944 = vpop.f32.mrb[0].mxu0
      %v1945 = vadd.f32 %v1441, %v1944
      %1946 = vmatprep.mubr.bf16.mxu0 0
      %1947 = vmatmul.mubr.bf16.gmra.mrb[0].mxu0 %v1391
      %v1948 = vpop.f32.mrb[0].mxu0
      %v1949 = vadd.f32 %v1437, %v1948
      %v1950 = vpop.f32.mrb[0].mxu0
      %v1951 = vadd.f32 %v1441, %v1950
      %v1952 = vpop.f32.mrb[0].mxu0
      %v1953 = vadd.f32 %v1437, %v1952
      %v1954 = vpop.f32.mrb[0].mxu0
      %v1955 = vadd.f32 %v1441, %v1954
      %1956 = vmatprep.mubr.bf16.mxu0 0
      %1957 = vmatmul.mubr.bf16.gmra.mrb[0].mxu0 %v1392
      %v1958 = vpop.f32.mrb[0].mxu0
      %v1959 = vadd.f32 %v1437, %v1958
      %v1960 = vpop.f32.mrb[0].mxu0
      %v1961 = vadd.f32 %v1441, %v1960
      %v1962 = vpop.f32.mrb[0].mxu0
      %v1963 = vadd.f32 %v1437, %v1962
      %v1964 = vpop.f32.mrb[0].mxu0
      %v1965 = vadd.f32 %v1441, %v1964
      %1966 = vmatprep.mubr.bf16.mxu0 0
      %1967 = vmatmul.mubr.bf16.gmra.mrb[0].mxu0 %v1393
      %v1968 = vpop.f32.mrb[0].mxu0
      %v1969 = vadd.f32 %v1437, %v1968
      %v1970 = vpop.f32.mrb[0].mxu0
      %v1971 = vadd.f32 %v1441, %v1970
      %v1972 = vpop.f32.mrb[0].mxu0
      %v1973 = vadd.f32 %v1437, %v1972
      %v1974 = vpop.f32.mrb[0].mxu0
      %v1975 = vadd.f32 %v1441, %v1974
      %1976 = vmatprep.mubr.bf16.mxu0 0
      %1977 = vmatmul.mubr.bf16.gmra.mrb[0].mxu0 %v1394
      %v1978 = vpop.f32.mrb[0].mxu0
      %v1979 = vadd.f32 %v1437, %v1978
      %v1980 = vpop.f32.mrb[0].mxu0
      %v1981 = vadd.f32 %v1441, %v1980
      %v1982 = vpop.f32.mrb[0].mxu0
      %v1983 = vadd.f32 %v1437, %v1982
      %v1984 = vpop.f32.mrb[0].mxu0
      %v1985 = vadd.f32 %v1441, %v1984
      %1986 = vmatprep.mubr.bf16.mxu0 0
      %1987 = vmatmul.mubr.bf16.gmra.mrb[0].mxu0 %v1395
      %v1988 = vpop.f32.mrb[0].mxu0
      %v1989 = vadd.f32 %v1437, %v1988
      %v1990 = vpop.f32.mrb[0].mxu0
      %v1991 = vadd.f32 %v1441, %v1990
      %v1992 = vpop.f32.mrb[0].mxu0
      %v1993 = vadd.f32 %v1437, %v1992
      %v1994 = vpop.f32.mrb[0].mxu0
      %v1995 = vadd.f32 %v1441, %v1994
      %1996 = vmatprep.mubr.bf16.mxu0 0
      %1997 = vmatmul.mubr.bf16.gmra.mrb[0].mxu0 %v1396
      %v1998 = vpop.f32.mrb[0].mxu0
      %v1999 = vadd.f32 %v1437, %v1998
      %v2000 = vpop.f32.mrb[0].mxu0
      %v2001 = vadd.f32 %v1441, %v2000
      %v2002 = vpop.f32.mrb[0].mxu0
      %v2003 = vadd.f32 %v1437, %v2002
      %v2004 = vpop.f32.mrb[0].mxu0
      %v2005 = vadd.f32 %v1441, %v2004
      %2006 = vmatprep.mubr.bf16.mxu0 0
      %2007 = vmatmul.mubr.bf16.gmra.mrb[0].mxu0 %v1397
      %v2008 = vpop.f32.mrb[0].mxu0
      %v2009 = vadd.f32 %v1437, %v2008
      %v2010 = vpop.f32.mrb[0].mxu0
      %v2011 = vadd.f32 %v1441, %v2010
      %v2012 = vpop.f32.mrb[0].mxu0
      %v2013 = vadd.f32 %v1437, %v2012
      %v2014 = vpop.f32.mrb[0].mxu0
      %v2015 = vadd.f32 %v1441, %v2014
      %2016 = vmatprep.mubr.bf16.mxu0 0
      %2017 = vmatmul.mubr.bf16.gmra.mrb[0].mxu0 %v1398
      %v2018 = vpop.f32.mrb[0].mxu0
      %v2019 = vadd.f32 %v1437, %v2018
      %v2020 = vpop.f32.mrb[0].mxu0
      %v2021 = vadd.f32 %v1441, %v2020
      %v2022 = vpop.f32.mrb[0].mxu0
      %v2023 = vadd.f32 %v1437, %v2022
      %v2024 = vpop.f32.mrb[0].mxu0
      %v2025 = vadd.f32 %v1441, %v2024
      %2026 = vmatprep.mubr.bf16.mxu0 0
      %2027 = vmatmul.mubr.bf16.gmra.mrb[0].mxu0 %v1399
      %v2028 = vpop.f32.mrb[0].mxu0
      %v2029 = vadd.f32 %v1437, %v2028
      %v2030 = vpop.f32.mrb[0].mxu0
      %v2031 = vadd.f32 %v1441, %v2030
      %v2032 = vpop.f32.mrb[0].mxu0
      %v2033 = vadd.f32 %v1437, %v2032
      %v2034 = vpop.f32.mrb[0].mxu0
      %v2035 = vadd.f32 %v1441, %v2034
      %2036 = vmatprep.mubr.bf16.mxu0 0
      %2037 = vmatmul.mubr.bf16.gmra.mrb[0].mxu0 %v1400
      %v2038 = vpop.f32.mrb[0].mxu0
      %v2039 = vadd.f32 %v1437, %v2038
      %v2040 = vpop.f32.mrb[0].mxu0
      %v2041 = vadd.f32 %v1441, %v2040
      %v2042 = vpop.f32.mrb[0].mxu0
      %v2043 = vadd.f32 %v1437, %v2042
      %v2044 = vpop.f32.mrb[0].mxu0
      %v2045 = vadd.f32 %v1441, %v2044
      %2046 = vmatprep.mubr.bf16.mxu0 0
      %2047 = vmatmul.mubr.bf16.gmra.mrb[0].mxu0 %v1401
      %v2048 = vpop.f32.mrb[0].mxu0
      %v2049 = vadd.f32 %v1437, %v2048
      %v2050 = vpop.f32.mrb[0].mxu0
      %v2051 = vadd.f32 %v1441, %v2050
      %v2052 = vpop.f32.mrb[0].mxu0
      %v2053 = vadd.f32 %v1437, %v2052
      %v2054 = vpop.f32.mrb[0].mxu0
      %v2055 = vadd.f32 %v1441, %v2054
      %2056 = vmatprep.mubr.bf16.mxu0 0
      %2057 = vmatmul.mubr.bf16.gmra.mrb[0].mxu0 %v1402
      %v2058 = vpop.f32.mrb[0].mxu0
      %v2059 = vadd.f32 %v1437, %v2058
      %v2060 = vpop.f32.mrb[0].mxu0
      %v2061 = vadd.f32 %v1441, %v2060
      %v2062 = vpop.f32.mrb[0].mxu0
      %v2063 = vadd.f32 %v1437, %v2062
      %v2064 = vpop.f32.mrb[0].mxu0
      %v2065 = vadd.f32 %v1441, %v2064
      %2066 = vmatprep.mubr.bf16.mxu0 0
      %2067 = vmatmul.mubr.bf16.gmra.mrb[0].mxu0 %v1403
      %v2068 = vpop.f32.mrb[0].mxu0
      %v2069 = vadd.f32 %v1437, %v2068
      %v2070 = vpop.f32.mrb[0].mxu0
      %v2071 = vadd.f32 %v1441, %v2070
      %v2072 = vpop.f32.mrb[0].mxu0
      %v2073 = vadd.f32 %v1437, %v2072
      %v2074 = vpop.f32.mrb[0].mxu0
      %v2075 = vadd.f32 %v1441, %v2074
      %2076 = vmatprep.mubr.bf16.mxu0 0
      %2077 = vmatmul.mubr.bf16.gmra.mrb[0].mxu0 %v1404
      %v2078 = vpop.f32.mrb[0].mxu0
      %v2079 = vadd.f32 %v1437, %v2078
      %v2080 = vpop.f32.mrb[0].mxu0
      %v2081 = vadd.f32 %v1441, %v2080
      %v2082 = vpop.f32.mrb[0].mxu0
      %v2083 = vadd.f32 %v1437, %v2082
      %v2084 = vpop.f32.mrb[0].mxu0
      %v2085 = vadd.f32 %v1441, %v2084
      %2086 = vmatprep.mubr.bf16.mxu0 0
      %2087 = vmatmul.mubr.bf16.gmra.mrb[0].mxu0 %v1405
      %v2088 = vpop.f32.mrb[0].mxu0
      %v2089 = vadd.f32 %v1437, %v2088
      %v2090 = vpop.f32.mrb[0].mxu0
      %v2091 = vadd.f32 %v1441, %v2090
      %v2092 = vpop.f32.mrb[0].mxu0
      %v2093 = vadd.f32 %v1437, %v2092
      %v2094 = vpop.f32.mrb[0].mxu0
      %v2095 = vadd.f32 %v1441, %v2094
      %2096 = vmatprep.mubr.bf16.mxu0 0
      %2097 = vmatmul.mubr.bf16.gmra.mrb[0].mxu0 %v1406
      %v2098 = vpop.f32.mrb[0].mxu0
      %v2099 = vadd.f32 %v1437, %v2098
      %v2100 = vpop.f32.mrb[0].mxu0
      %v2101 = vadd.f32 %v1441, %v2100
      %v2102 = vpop.f32.mrb[0].mxu0
      %v2103 = vadd.f32 %v1437, %v2102
      %v2104 = vpop.f32.mrb[0].mxu0
      %v2105 = vadd.f32 %v1441, %v2104
      %2106 = vmatprep.mubr.bf16.mxu0 0
      %2107 = vmatmul.mubr.bf16.gmra.mrb[0].mxu0 %v1407
      %v2108 = vpop.f32.mrb[0].mxu0
      %v2109 = vadd.f32 %v1437, %v2108
      %v2110 = vpop.f32.mrb[0].mxu0
      %v2111 = vadd.f32 %v1441, %v2110
      %v2112 = vpop.f32.mrb[0].mxu0
      %v2113 = vadd.f32 %v1437, %v2112
      %v2114 = vpop.f32.mrb[0].mxu0
      %v2115 = vadd.f32 %v1441, %v2114
      %2116 = vmatprep.mubr.bf16.mxu0 0
      %2117 = vmatmul.mubr.bf16.gmra.mrb[0].mxu0 %v1408
      %v2118 = vpop.f32.mrb[0].mxu0
      %v2119 = vadd.f32 %v1437, %v2118
      %v2120 = vpop.f32.mrb[0].mxu0
      %v2121 = vadd.f32 %v1441, %v2120
      %v2122 = vpop.f32.mrb[0].mxu0
      %v2123 = vadd.f32 %v1437, %v2122
      %v2124 = vpop.f32.mrb[0].mxu0
      %v2125 = vadd.f32 %v1441, %v2124
      %2126 = vmatprep.mubr.bf16.mxu0 0
      %2127 = vmatmul.mubr.bf16.gmra.mrb[0].mxu0 %v1409
      %v2128 = vpop.f32.mrb[0].mxu0
      %v2129 = vadd.f32 %v1437, %v2128
      %v2130 = vpop.f32.mrb[0].mxu0
      %v2131 = vadd.f32 %v1441, %v2130
      %v2132 = vpop.f32.mrb[0].mxu0
      %v2133 = vadd.f32 %v1437, %v2132
      %v2134 = vpop.f32.mrb[0].mxu0
      %v2135 = vadd.f32 %v1441, %v2134
      %2136 = vmatprep.mubr.bf16.mxu0 0
      %2137 = vmatmul.mubr.bf16.gmra.mrb[0].mxu0 %v1410
      %v2138 = vpop.f32.mrb[0].mxu0
      %v2139 = vadd.f32 %v1437, %v2138
      %v2140 = vpop.f32.mrb[0].mxu0
      %v2141 = vadd.f32 %v1441, %v2140
      %v2142 = vpop.f32.mrb[0].mxu0
      %v2143 = vadd.f32 %v1437, %v2142
      %v2144 = vpop.f32.mrb[0].mxu0
      %v2145 = vadd.f32 %v1441, %v2144
      %2146 = vmatprep.mubr.bf16.mxu0 0
      %2147 = vmatmul.mubr.bf16.gmra.mrb[0].mxu0 %v1411
      %v2148 = vpop.f32.mrb[0].mxu0
      %v2149 = vadd.f32 %v1437, %v2148
      %v2150 = vpop.f32.mrb[0].mxu0
      %v2151 = vadd.f32 %v1441, %v2150
      %v2152 = vpop.f32.mrb[0].mxu0
      %v2153 = vadd.f32 %v1437, %v2152
      %v2154 = vpop.f32.mrb[0].mxu0
      %v2155 = vadd.f32 %v1441, %v2154
      %2156 = vmatprep.mubr.bf16.mxu0 0
      %2157 = vmatmul.mubr.bf16.gmra.mrb[0].mxu0 %v1412
      %v2158 = vpop.f32.mrb[0].mxu0
      %v2159 = vadd.f32 %v1437, %v2158
      %v2160 = vpop.f32.mrb[0].mxu0
      %v2161 = vadd.f32 %v1441, %v2160
      %v2162 = vpop.f32.mrb[0].mxu0
      %v2163 = vadd.f32 %v1437, %v2162
      %v2164 = vpop.f32.mrb[0].mxu0
      %v2165 = vadd.f32 %v1441, %v2164
      %2166 = vmatprep.mubr.bf16.mxu0 0
      %2167 = vmatmul.mubr.bf16.gmra.mrb[0].mxu0 %v1413
      %v2168 = vpop.f32.mrb[0].mxu0
      %v2169 = vadd.f32 %v1437, %v2168
      %v2170 = vpop.f32.mrb[0].mxu0
      %v2171 = vadd.f32 %v1441, %v2170
      %v2172 = vpop.f32.mrb[0].mxu0
      %v2173 = vadd.f32 %v1437, %v2172
      %v2174 = vpop.f32.mrb[0].mxu0
      %v2175 = vadd.f32 %v1441, %v2174
      %2176 = vmatprep.mubr.bf16.mxu0 0
      %2177 = vmatmul.mubr.bf16.gmra.mrb[0].mxu0 %v1414
      %v2178 = vpop.f32.mrb[0].mxu0
      %v2179 = vadd.f32 %v1437, %v2178
      %v2180 = vpop.f32.mrb[0].mxu0
      %v2181 = vadd.f32 %v1441, %v2180
      %v2182 = vpop.f32.mrb[0].mxu0
      %v2183 = vadd.f32 %v1437, %v2182
      %v2184 = vpop.f32.mrb[0].mxu0
      %v2185 = vadd.f32 %v1441, %v2184
      %2186 = vmatprep.mubr.bf16.mxu0 0
      %2187 = vmatmul.mubr.bf16.gmra.mrb[0].mxu0 %v1415
      %v2188 = vpop.f32.mrb[0].mxu0
      %v2189 = vadd.f32 %v1437, %v2188
      %v2190 = vpop.f32.mrb[0].mxu0
      %v2191 = vadd.f32 %v1441, %v2190
      %v2192 = vpop.f32.mrb[0].mxu0
      %v2193 = vadd.f32 %v1437, %v2192
      %v2194 = vpop.f32.mrb[0].mxu0
      %v2195 = vadd.f32 %v1441, %v2194
      %2196 = vdwg.mxu0
      %v2197 = vsub.f32 0.0, %v1559
      %v2198 = vsub.f32 0.0, %v1561
      %v2199 = vsub.f32 0.0, %v1563
      %v2200 = vsub.f32 0.0, %v1565
      %v2201 = vsub.f32 0.0, %v1569
      %v2202 = vsub.f32 0.0, %v1571
      %v2203 = vsub.f32 0.0, %v1573
      %v2204 = vsub.f32 0.0, %v1575
      %v2205 = vsub.f32 0.0, %v1579
      %v2206 = vsub.f32 0.0, %v1581
      %v2207 = vsub.f32 0.0, %v1583
      %v2208 = vsub.f32 0.0, %v1585
      %v2209 = vsub.f32 0.0, %v1589
      %v2210 = vsub.f32 0.0, %v1591
      %v2211 = vsub.f32 0.0, %v1593
      %v2212 = vsub.f32 0.0, %v1595
      %v2213 = vsub.f32 0.0, %v1599
      %v2214 = vsub.f32 0.0, %v1601
      %v2215 = vsub.f32 0.0, %v1603
      %v2216 = vsub.f32 0.0, %v1605
      %v2217 = vsub.f32 0.0, %v1609
      %v2218 = vsub.f32 0.0, %v1611
      %v2219 = vsub.f32 0.0, %v1613
      %v2220 = vsub.f32 0.0, %v1615
      %v2221 = vsub.f32 0.0, %v1619
      %v2222 = vsub.f32 0.0, %v1621
      %v2223 = vsub.f32 0.0, %v1623
      %v2224 = vsub.f32 0.0, %v1625
      %v2225 = vsub.f32 0.0, %v1629
      %v2226 = vsub.f32 0.0, %v1631
      %v2227 = vsub.f32 0.0, %v1633
      %v2228 = vsub.f32 0.0, %v1635
      %v2229 = vsub.f32 0.0, %v1639
      %v2230 = vsub.f32 0.0, %v1641
      %v2231 = vsub.f32 0.0, %v1643
      %v2232 = vsub.f32 0.0, %v1645
      %v2233 = vsub.f32 0.0, %v1649
      %v2234 = vsub.f32 0.0, %v1651
      %v2235 = vsub.f32 0.0, %v1653
      %v2236 = vsub.f32 0.0, %v1655
      %v2237 = vsub.f32 0.0, %v1659
      %v2238 = vsub.f32 0.0, %v1661
      %v2239 = vsub.f32 0.0, %v1663
      %v2240 = vsub.f32 0.0, %v1665
      %v2241 = vsub.f32 0.0, %v1669
      %v2242 = vsub.f32 0.0, %v1671
      %v2243 = vsub.f32 0.0, %v1673
      %v2244 = vsub.f32 0.0, %v1675
      %v2245 = vsub.f32 0.0, %v1679
      %v2246 = vsub.f32 0.0, %v1681
      %v2247 = vsub.f32 0.0, %v1683
      %v2248 = vsub.f32 0.0, %v1685
      %v2249 = vsub.f32 0.0, %v1689
      %v2250 = vsub.f32 0.0, %v1691
      %v2251 = vsub.f32 0.0, %v1693
      %v2252 = vsub.f32 0.0, %v1695
      %v2253 = vsub.f32 0.0, %v1699
      %v2254 = vsub.f32 0.0, %v1701
      %v2255 = vsub.f32 0.0, %v1703
      %v2256 = vsub.f32 0.0, %v1705
      %v2257 = vsub.f32 0.0, %v1709
      %v2258 = vsub.f32 0.0, %v1711
      %v2259 = vsub.f32 0.0, %v1713
      %v2260 = vsub.f32 0.0, %v1715
      %v2261 = vsub.f32 0.0, %v1719
      %v2262 = vsub.f32 0.0, %v1721
      %v2263 = vsub.f32 0.0, %v1723
      %v2264 = vsub.f32 0.0, %v1725
      %v2265 = vsub.f32 0.0, %v1729
      %v2266 = vsub.f32 0.0, %v1731
      %v2267 = vsub.f32 0.0, %v1733
      %v2268 = vsub.f32 0.0, %v1735
      %v2269 = vsub.f32 0.0, %v1739
      %v2270 = vsub.f32 0.0, %v1741
      %v2271 = vsub.f32 0.0, %v1743
      %v2272 = vsub.f32 0.0, %v1745
      %v2273 = vsub.f32 0.0, %v1749
      %v2274 = vsub.f32 0.0, %v1751
      %v2275 = vsub.f32 0.0, %v1753
      %v2276 = vsub.f32 0.0, %v1755
      %v2277 = vsub.f32 0.0, %v1759
      %v2278 = vsub.f32 0.0, %v1761
      %v2279 = vsub.f32 0.0, %v1763
      %v2280 = vsub.f32 0.0, %v1765
      %v2281 = vsub.f32 0.0, %v1769
      %v2282 = vsub.f32 0.0, %v1771
      %v2283 = vsub.f32 0.0, %v1773
      %v2284 = vsub.f32 0.0, %v1775
      %v2285 = vsub.f32 0.0, %v1779
      %v2286 = vsub.f32 0.0, %v1781
      %v2287 = vsub.f32 0.0, %v1783
      %v2288 = vsub.f32 0.0, %v1785
      %v2289 = vsub.f32 0.0, %v1789
      %v2290 = vsub.f32 0.0, %v1791
      %v2291 = vsub.f32 0.0, %v1793
      %v2292 = vsub.f32 0.0, %v1795
      %v2293 = vsub.f32 0.0, %v1799
      %v2294 = vsub.f32 0.0, %v1801
      %v2295 = vsub.f32 0.0, %v1803
      %v2296 = vsub.f32 0.0, %v1805
      %v2297 = vsub.f32 0.0, %v1809
      %v2298 = vsub.f32 0.0, %v1811
      %v2299 = vsub.f32 0.0, %v1813
      %v2300 = vsub.f32 0.0, %v1815
      %v2301 = vsub.f32 0.0, %v1819
      %v2302 = vsub.f32 0.0, %v1821
      %v2303 = vsub.f32 0.0, %v1823
      %v2304 = vsub.f32 0.0, %v1825
      %v2305 = vsub.f32 0.0, %v1829
      %v2306 = vsub.f32 0.0, %v1831
      %v2307 = vsub.f32 0.0, %v1833
      %v2308 = vsub.f32 0.0, %v1835
      %v2309 = vsub.f32 0.0, %v1839
      %v2310 = vsub.f32 0.0, %v1841
      %v2311 = vsub.f32 0.0, %v1843
      %v2312 = vsub.f32 0.0, %v1845
      %v2313 = vsub.f32 0.0, %v1849
      %v2314 = vsub.f32 0.0, %v1851
      %v2315 = vsub.f32 0.0, %v1853
      %v2316 = vsub.f32 0.0, %v1855
      %v2317 = vsub.f32 0.0, %v1859
      %v2318 = vsub.f32 0.0, %v1861
      %v2319 = vsub.f32 0.0, %v1863
      %v2320 = vsub.f32 0.0, %v1865
      %v2321 = vsub.f32 0.0, %v1869
      %v2322 = vsub.f32 0.0, %v1871
      %v2323 = vsub.f32 0.0, %v1873
      %v2324 = vsub.f32 0.0, %v1875
      %v2325 = vsub.f32 0.0, %v1879
      %v2326 = vsub.f32 0.0, %v1881
      %v2327 = vsub.f32 0.0, %v1883
      %v2328 = vsub.f32 0.0, %v1885
      %v2329 = vsub.f32 0.0, %v1889
      %v2330 = vsub.f32 0.0, %v1891
      %v2331 = vsub.f32 0.0, %v1893
      %v2332 = vsub.f32 0.0, %v1895
      %v2333 = vsub.f32 0.0, %v1899
      %v2334 = vsub.f32 0.0, %v1901
      %v2335 = vsub.f32 0.0, %v1903
      %v2336 = vsub.f32 0.0, %v1905
      %v2337 = vsub.f32 0.0, %v1909
      %v2338 = vsub.f32 0.0, %v1911
      %v2339 = vsub.f32 0.0, %v1913
      %v2340 = vsub.f32 0.0, %v1915
      %v2341 = vsub.f32 0.0, %v1919
      %v2342 = vsub.f32 0.0, %v1921
      %v2343 = vsub.f32 0.0, %v1923
      %v2344 = vsub.f32 0.0, %v1925
      %v2345 = vsub.f32 0.0, %v1929
      %v2346 = vsub.f32 0.0, %v1931
      %v2347 = vsub.f32 0.0, %v1933
      %v2348 = vsub.f32 0.0, %v1935
      %v2349 = vsub.f32 0.0, %v1939
      %v2350 = vsub.f32 0.0, %v1941
      %v2351 = vsub.f32 0.0, %v1943
      %v2352 = vsub.f32 0.0, %v1945
      %v2353 = vsub.f32 0.0, %v1949
      %v2354 = vsub.f32 0.0, %v1951
      %v2355 = vsub.f32 0.0, %v1953
      %v2356 = vsub.f32 0.0, %v1955
      %v2357 = vsub.f32 0.0, %v1959
      %v2358 = vsub.f32 0.0, %v1961
      %v2359 = vsub.f32 0.0, %v1963
      %v2360 = vsub.f32 0.0, %v1965
      %v2361 = vsub.f32 0.0, %v1969
      %v2362 = vsub.f32 0.0, %v1971
      %v2363 = vsub.f32 0.0, %v1973
      %v2364 = vsub.f32 0.0, %v1975
      %v2365 = vsub.f32 0.0, %v1979
      %v2366 = vsub.f32 0.0, %v1981
      %v2367 = vsub.f32 0.0, %v1983
      %v2368 = vsub.f32 0.0, %v1985
      %v2369 = vsub.f32 0.0, %v1989
      %v2370 = vsub.f32 0.0, %v1991
      %v2371 = vsub.f32 0.0, %v1993
      %v2372 = vsub.f32 0.0, %v1995
      %v2373 = vsub.f32 0.0, %v1999
      %v2374 = vsub.f32 0.0, %v2001
      %v2375 = vsub.f32 0.0, %v2003
      %v2376 = vsub.f32 0.0, %v2005
      %v2377 = vsub.f32 0.0, %v2009
      %v2378 = vsub.f32 0.0, %v2011
      %v2379 = vsub.f32 0.0, %v2013
      %v2380 = vsub.f32 0.0, %v2015
      %v2381 = vsub.f32 0.0, %v2019
      %v2382 = vsub.f32 0.0, %v2021
      %v2383 = vsub.f32 0.0, %v2023
      %v2384 = vsub.f32 0.0, %v2025
      %v2385 = vsub.f32 0.0, %v2029
      %v2386 = vsub.f32 0.0, %v2031
      %v2387 = vsub.f32 0.0, %v2033
      %v2388 = vsub.f32 0.0, %v2035
      %v2389 = vsub.f32 0.0, %v2039
      %v2390 = vsub.f32 0.0, %v2041
      %v2391 = vsub.f32 0.0, %v2043
      %v2392 = vsub.f32 0.0, %v2045
      %v2393 = vsub.f32 0.0, %v2049
      %v2394 = vsub.f32 0.0, %v2051
      %v2395 = vsub.f32 0.0, %v2053
      %v2396 = vsub.f32 0.0, %v2055
      %v2397 = vsub.f32 0.0, %v2059
      %v2398 = vsub.f32 0.0, %v2061
      %v2399 = vsub.f32 0.0, %v2063
      %v2400 = vsub.f32 0.0, %v2065
      %v2401 = vsub.f32 0.0, %v2069
      %v2402 = vsub.f32 0.0, %v2071
      %v2403 = vsub.f32 0.0, %v2073
      %v2404 = vsub.f32 0.0, %v2075
      %v2405 = vsub.f32 0.0, %v2079
      %v2406 = vsub.f32 0.0, %v2081
      %v2407 = vsub.f32 0.0, %v2083
      %v2408 = vsub.f32 0.0, %v2085
      %v2409 = vsub.f32 0.0, %v2089
      %v2410 = vsub.f32 0.0, %v2091
      %v2411 = vsub.f32 0.0, %v2093
      %v2412 = vsub.f32 0.0, %v2095
      %v2413 = vsub.f32 0.0, %v2099
      %v2414 = vsub.f32 0.0, %v2101
      %v2415 = vsub.f32 0.0, %v2103
      %v2416 = vsub.f32 0.0, %v2105
      %v2417 = vsub.f32 0.0, %v2109
      %v2418 = vsub.f32 0.0, %v2111
      %v2419 = vsub.f32 0.0, %v2113
      %v2420 = vsub.f32 0.0, %v2115
      %v2421 = vsub.f32 0.0, %v2119
      %v2422 = vsub.f32 0.0, %v2121
      %v2423 = vsub.f32 0.0, %v2123
      %v2424 = vsub.f32 0.0, %v2125
      %v2425 = vsub.f32 0.0, %v2129
      %v2426 = vsub.f32 0.0, %v2131
      %v2427 = vsub.f32 0.0, %v2133
      %v2428 = vsub.f32 0.0, %v2135
      %v2429 = vsub.f32 0.0, %v2139
      %v2430 = vsub.f32 0.0, %v2141
      %v2431 = vsub.f32 0.0, %v2143
      %v2432 = vsub.f32 0.0, %v2145
      %v2433 = vsub.f32 0.0, %v2149
      %v2434 = vsub.f32 0.0, %v2151
      %v2435 = vsub.f32 0.0, %v2153
      %v2436 = vsub.f32 0.0, %v2155
      %v2437 = vsub.f32 0.0, %v2159
      %v2438 = vsub.f32 0.0, %v2161
      %v2439 = vsub.f32 0.0, %v2163
      %v2440 = vsub.f32 0.0, %v2165
      %v2441 = vsub.f32 0.0, %v2169
      %v2442 = vsub.f32 0.0, %v2171
      %v2443 = vsub.f32 0.0, %v2173
      %v2444 = vsub.f32 0.0, %v2175
      %v2445 = vsub.f32 0.0, %v2179
      %v2446 = vsub.f32 0.0, %v2181
      %v2447 = vsub.f32 0.0, %v2183
      %v2448 = vsub.f32 0.0, %v2185
      %v2449 = vsub.f32 0.0, %v2189
      %v2450 = vsub.f32 0.0, %v2191
      %v2451 = vsub.f32 0.0, %v2193
      %v2452 = vsub.f32 0.0, %v2195
      %v2453 = vmul.f32 %v2197, 1.442695
      %v2454 = vpow.pop %v2453
      %v2455 = vmul.f32 %v2198, 1.442695
      %v2456 = vpow.pop %v2455
      %v2457 = vmul.f32 %v2199, 1.442695
      %v2458 = vpow.pop %v2457
      %v2459 = vmul.f32 %v2200, 1.442695
      %v2460 = vpow.pop %v2459
      %v2461 = vmul.f32 %v2201, 1.442695
      %v2462 = vpow.pop %v2461
      %v2463 = vmul.f32 %v2202, 1.442695
      %v2464 = vpow.pop %v2463
      %v2465 = vmul.f32 %v2203, 1.442695
      %v2466 = vpow.pop %v2465
      %v2467 = vmul.f32 %v2204, 1.442695
      %v2468 = vpow.pop %v2467
      %v2469 = vmul.f32 %v2205, 1.442695
      %v2470 = vpow.pop %v2469
      %v2471 = vmul.f32 %v2206, 1.442695
      %v2472 = vpow.pop %v2471
      %v2473 = vmul.f32 %v2207, 1.442695
      %v2474 = vpow.pop %v2473
      %v2475 = vmul.f32 %v2208, 1.442695
      %v2476 = vpow.pop %v2475
      %v2477 = vmul.f32 %v2209, 1.442695
      %v2478 = vpow.pop %v2477
      %v2479 = vmul.f32 %v2210, 1.442695
      %v2480 = vpow.pop %v2479
      %v2481 = vmul.f32 %v2211, 1.442695
      %v2482 = vpow.pop %v2481
      %v2483 = vmul.f32 %v2212, 1.442695
      %v2484 = vpow.pop %v2483
      %v2485 = vmul.f32 %v2213, 1.442695
      %v2486 = vpow.pop %v2485
      %v2487 = vmul.f32 %v2214, 1.442695
      %v2488 = vpow.pop %v2487
      %v2489 = vmul.f32 %v2215, 1.442695
      %v2490 = vpow.pop %v2489
      %v2491 = vmul.f32 %v2216, 1.442695
      %v2492 = vpow.pop %v2491
      %v2493 = vmul.f32 %v2217, 1.442695
      %v2494 = vpow.pop %v2493
      %v2495 = vmul.f32 %v2218, 1.442695
      %v2496 = vpow.pop %v2495
      %v2497 = vmul.f32 %v2219, 1.442695
      %v2498 = vpow.pop %v2497
      %v2499 = vmul.f32 %v2220, 1.442695
      %v2500 = vpow.pop %v2499
      %v2501 = vmul.f32 %v2221, 1.442695
      %v2502 = vpow.pop %v2501
      %v2503 = vmul.f32 %v2222, 1.442695
      %v2504 = vpow.pop %v2503
      %v2505 = vmul.f32 %v2223, 1.442695
      %v2506 = vpow.pop %v2505
      %v2507 = vmul.f32 %v2224, 1.442695
      %v2508 = vpow.pop %v2507
      %v2509 = vmul.f32 %v2225, 1.442695
      %v2510 = vpow.pop %v2509
      %v2511 = vmul.f32 %v2226, 1.442695
      %v2512 = vpow.pop %v2511
      %v2513 = vmul.f32 %v2227, 1.442695
      %v2514 = vpow.pop %v2513
      %v2515 = vmul.f32 %v2228, 1.442695
      %v2516 = vpow.pop %v2515
      %v2517 = vmul.f32 %v2229, 1.442695
      %v2518 = vpow.pop %v2517
      %v2519 = vmul.f32 %v2230, 1.442695
      %v2520 = vpow.pop %v2519
      %v2521 = vmul.f32 %v2231, 1.442695
      %v2522 = vpow.pop %v2521
      %v2523 = vmul.f32 %v2232, 1.442695
      %v2524 = vpow.pop %v2523
      %v2525 = vmul.f32 %v2233, 1.442695
      %v2526 = vpow.pop %v2525
      %v2527 = vmul.f32 %v2234, 1.442695
      %v2528 = vpow.pop %v2527
      %v2529 = vmul.f32 %v2235, 1.442695
      %v2530 = vpow.pop %v2529
      %v2531 = vmul.f32 %v2236, 1.442695
      %v2532 = vpow.pop %v2531
      %v2533 = vmul.f32 %v2237, 1.442695
      %v2534 = vpow.pop %v2533
      %v2535 = vmul.f32 %v2238, 1.442695
      %v2536 = vpow.pop %v2535
      %v2537 = vmul.f32 %v2239, 1.442695
      %v2538 = vpow.pop %v2537
      %v2539 = vmul.f32 %v2240, 1.442695
      %v2540 = vpow.pop %v2539
      %v2541 = vmul.f32 %v2241, 1.442695
      %v2542 = vpow.pop %v2541
      %v2543 = vmul.f32 %v2242, 1.442695
      %v2544 = vpow.pop %v2543
      %v2545 = vmul.f32 %v2243, 1.442695
      %v2546 = vpow.pop %v2545
      %v2547 = vmul.f32 %v2244, 1.442695
      %v2548 = vpow.pop %v2547
      %v2549 = vmul.f32 %v2245, 1.442695
      %v2550 = vpow.pop %v2549
      %v2551 = vmul.f32 %v2246, 1.442695
      %v2552 = vpow.pop %v2551
      %v2553 = vmul.f32 %v2247, 1.442695
      %v2554 = vpow.pop %v2553
      %v2555 = vmul.f32 %v2248, 1.442695
      %v2556 = vpow.pop %v2555
      %v2557 = vmul.f32 %v2249, 1.442695
      %v2558 = vpow.pop %v2557
      %v2559 = vmul.f32 %v2250, 1.442695
      %v2560 = vpow.pop %v2559
      %v2561 = vmul.f32 %v2251, 1.442695
      %v2562 = vpow.pop %v2561
      %v2563 = vmul.f32 %v2252, 1.442695
      %v2564 = vpow.pop %v2563
      %v2565 = vmul.f32 %v2253, 1.442695
      %v2566 = vpow.pop %v2565
      %v2567 = vmul.f32 %v2254, 1.442695
      %v2568 = vpow.pop %v2567
      %v2569 = vmul.f32 %v2255, 1.442695
      %v2570 = vpow.pop %v2569
      %v2571 = vmul.f32 %v2256, 1.442695
      %v2572 = vpow.pop %v2571
      %v2573 = vmul.f32 %v2257, 1.442695
      %v2574 = vpow.pop %v2573
      %v2575 = vmul.f32 %v2258, 1.442695
      %v2576 = vpow.pop %v2575
      %v2577 = vmul.f32 %v2259, 1.442695
      %v2578 = vpow.pop %v2577
      %v2579 = vmul.f32 %v2260, 1.442695
      %v2580 = vpow.pop %v2579
      %v2581 = vmul.f32 %v2261, 1.442695
      %v2582 = vpow.pop %v2581
      %v2583 = vmul.f32 %v2262, 1.442695
      %v2584 = vpow.pop %v2583
      %v2585 = vmul.f32 %v2263, 1.442695
      %v2586 = vpow.pop %v2585
      %v2587 = vmul.f32 %v2264, 1.442695
      %v2588 = vpow.pop %v2587
      %v2589 = vmul.f32 %v2265, 1.442695
      %v2590 = vpow.pop %v2589
      %v2591 = vmul.f32 %v2266, 1.442695
      %v2592 = vpow.pop %v2591
      %v2593 = vmul.f32 %v2267, 1.442695
      %v2594 = vpow.pop %v2593
      %v2595 = vmul.f32 %v2268, 1.442695
      %v2596 = vpow.pop %v2595
      %v2597 = vmul.f32 %v2269, 1.442695
      %v2598 = vpow.pop %v2597
      %v2599 = vmul.f32 %v2270, 1.442695
      %v2600 = vpow.pop %v2599
      %v2601 = vmul.f32 %v2271, 1.442695
      %v2602 = vpow.pop %v2601
      %v2603 = vmul.f32 %v2272, 1.442695
      %v2604 = vpow.pop %v2603
      %v2605 = vmul.f32 %v2273, 1.442695
      %v2606 = vpow.pop %v2605
      %v2607 = vmul.f32 %v2274, 1.442695
      %v2608 = vpow.pop %v2607
      %v2609 = vmul.f32 %v2275, 1.442695
      %v2610 = vpow.pop %v2609
      %v2611 = vmul.f32 %v2276, 1.442695
      %v2612 = vpow.pop %v2611
      %v2613 = vmul.f32 %v2277, 1.442695
      %v2614 = vpow.pop %v2613
      %v2615 = vmul.f32 %v2278, 1.442695
      %v2616 = vpow.pop %v2615
      %v2617 = vmul.f32 %v2279, 1.442695
      %v2618 = vpow.pop %v2617
      %v2619 = vmul.f32 %v2280, 1.442695
      %v2620 = vpow.pop %v2619
      %v2621 = vmul.f32 %v2281, 1.442695
      %v2622 = vpow.pop %v2621
      %v2623 = vmul.f32 %v2282, 1.442695
      %v2624 = vpow.pop %v2623
      %v2625 = vmul.f32 %v2283, 1.442695
      %v2626 = vpow.pop %v2625
      %v2627 = vmul.f32 %v2284, 1.442695
      %v2628 = vpow.pop %v2627
      %v2629 = vmul.f32 %v2285, 1.442695
      %v2630 = vpow.pop %v2629
      %v2631 = vmul.f32 %v2286, 1.442695
      %v2632 = vpow.pop %v2631
      %v2633 = vmul.f32 %v2287, 1.442695
      %v2634 = vpow.pop %v2633
      %v2635 = vmul.f32 %v2288, 1.442695
      %v2636 = vpow.pop %v2635
      %v2637 = vmul.f32 %v2289, 1.442695
      %v2638 = vpow.pop %v2637
      %v2639 = vmul.f32 %v2290, 1.442695
      %v2640 = vpow.pop %v2639
      %v2641 = vmul.f32 %v2291, 1.442695
      %v2642 = vpow.pop %v2641
      %v2643 = vmul.f32 %v2292, 1.442695
      %v2644 = vpow.pop %v2643
      %v2645 = vmul.f32 %v2293, 1.442695
      %v2646 = vpow.pop %v2645
      %v2647 = vmul.f32 %v2294, 1.442695
      %v2648 = vpow.pop %v2647
      %v2649 = vmul.f32 %v2295, 1.442695
      %v2650 = vpow.pop %v2649
      %v2651 = vmul.f32 %v2296, 1.442695
      %v2652 = vpow.pop %v2651
      %v2653 = vmul.f32 %v2297, 1.442695
      %v2654 = vpow.pop %v2653
      %v2655 = vmul.f32 %v2298, 1.442695
      %v2656 = vpow.pop %v2655
      %v2657 = vmul.f32 %v2299, 1.442695
      %v2658 = vpow.pop %v2657
      %v2659 = vmul.f32 %v2300, 1.442695
      %v2660 = vpow.pop %v2659
      %v2661 = vmul.f32 %v2301, 1.442695
      %v2662 = vpow.pop %v2661
      %v2663 = vmul.f32 %v2302, 1.442695
      %v2664 = vpow.pop %v2663
      %v2665 = vmul.f32 %v2303, 1.442695
      %v2666 = vpow.pop %v2665
      %v2667 = vmul.f32 %v2304, 1.442695
      %v2668 = vpow.pop %v2667
      %v2669 = vmul.f32 %v2305, 1.442695
      %v2670 = vpow.pop %v2669
      %v2671 = vmul.f32 %v2306, 1.442695
      %v2672 = vpow.pop %v2671
      %v2673 = vmul.f32 %v2307, 1.442695
      %v2674 = vpow.pop %v2673
      %v2675 = vmul.f32 %v2308, 1.442695
      %v2676 = vpow.pop %v2675
      %v2677 = vmul.f32 %v2309, 1.442695
      %v2678 = vpow.pop %v2677
      %v2679 = vmul.f32 %v2310, 1.442695
      %v2680 = vpow.pop %v2679
      %v2681 = vmul.f32 %v2311, 1.442695
      %v2682 = vpow.pop %v2681
      %v2683 = vmul.f32 %v2312, 1.442695
      %v2684 = vpow.pop %v2683
      %v2685 = vmul.f32 %v2313, 1.442695
      %v2686 = vpow.pop %v2685
      %v2687 = vmul.f32 %v2314, 1.442695
      %v2688 = vpow.pop %v2687
      %v2689 = vmul.f32 %v2315, 1.442695
      %v2690 = vpow.pop %v2689
      %v2691 = vmul.f32 %v2316, 1.442695
      %v2692 = vpow.pop %v2691
      %v2693 = vmul.f32 %v2317, 1.442695
      %v2694 = vpow.pop %v2693
      %v2695 = vmul.f32 %v2318, 1.442695
      %v2696 = vpow.pop %v2695
      %v2697 = vmul.f32 %v2319, 1.442695
      %v2698 = vpow.pop %v2697
      %v2699 = vmul.f32 %v2320, 1.442695
      %v2700 = vpow.pop %v2699
      %v2701 = vmul.f32 %v2321, 1.442695
      %v2702 = vpow.pop %v2701
      %v2703 = vmul.f32 %v2322, 1.442695
      %v2704 = vpow.pop %v2703
      %v2705 = vmul.f32 %v2323, 1.442695
      %v2706 = vpow.pop %v2705
      %v2707 = vmul.f32 %v2324, 1.442695
      %v2708 = vpow.pop %v2707
      %v2709 = vmul.f32 %v2325, 1.442695
      %v2710 = vpow.pop %v2709
      %v2711 = vmul.f32 %v2326, 1.442695
      %v2712 = vpow.pop %v2711
      %v2713 = vmul.f32 %v2327, 1.442695
      %v2714 = vpow.pop %v2713
      %v2715 = vmul.f32 %v2328, 1.442695
      %v2716 = vpow.pop %v2715
      %v2717 = vmul.f32 %v2329, 1.442695
      %v2718 = vpow.pop %v2717
      %v2719 = vmul.f32 %v2330, 1.442695
      %v2720 = vpow.pop %v2719
      %v2721 = vmul.f32 %v2331, 1.442695
      %v2722 = vpow.pop %v2721
      %v2723 = vmul.f32 %v2332, 1.442695
      %v2724 = vpow.pop %v2723
      %v2725 = vmul.f32 %v2333, 1.442695
      %v2726 = vpow.pop %v2725
      %v2727 = vmul.f32 %v2334, 1.442695
      %v2728 = vpow.pop %v2727
      %v2729 = vmul.f32 %v2335, 1.442695
      %v2730 = vpow.pop %v2729
      %v2731 = vmul.f32 %v2336, 1.442695
      %v2732 = vpow.pop %v2731
      %v2733 = vmul.f32 %v2337, 1.442695
      %v2734 = vpow.pop %v2733
      %v2735 = vmul.f32 %v2338, 1.442695
      %v2736 = vpow.pop %v2735
      %v2737 = vmul.f32 %v2339, 1.442695
      %v2738 = vpow.pop %v2737
      %v2739 = vmul.f32 %v2340, 1.442695
      %v2740 = vpow.pop %v2739
      %v2741 = vmul.f32 %v2341, 1.442695
      %v2742 = vpow.pop %v2741
      %v2743 = vmul.f32 %v2342, 1.442695
      %v2744 = vpow.pop %v2743
      %v2745 = vmul.f32 %v2343, 1.442695
      %v2746 = vpow.pop %v2745
      %v2747 = vmul.f32 %v2344, 1.442695
      %v2748 = vpow.pop %v2747
      %v2749 = vmul.f32 %v2345, 1.442695
      %v2750 = vpow.pop %v2749
      %v2751 = vmul.f32 %v2346, 1.442695
      %v2752 = vpow.pop %v2751
      %v2753 = vmul.f32 %v2347, 1.442695
      %v2754 = vpow.pop %v2753
      %v2755 = vmul.f32 %v2348, 1.442695
      %v2756 = vpow.pop %v2755
      %v2757 = vmul.f32 %v2349, 1.442695
      %v2758 = vpow.pop %v2757
      %v2759 = vmul.f32 %v2350, 1.442695
      %v2760 = vpow.pop %v2759
      %v2761 = vmul.f32 %v2351, 1.442695
      %v2762 = vpow.pop %v2761
      %v2763 = vmul.f32 %v2352, 1.442695
      %v2764 = vpow.pop %v2763
      %v2765 = vmul.f32 %v2353, 1.442695
      %v2766 = vpow.pop %v2765
      %v2767 = vmul.f32 %v2354, 1.442695
      %v2768 = vpow.pop %v2767
      %v2769 = vmul.f32 %v2355, 1.442695
      %v2770 = vpow.pop %v2769
      %v2771 = vmul.f32 %v2356, 1.442695
      %v2772 = vpow.pop %v2771
      %v2773 = vmul.f32 %v2357, 1.442695
      %v2774 = vpow.pop %v2773
      %v2775 = vmul.f32 %v2358, 1.442695
      %v2776 = vpow.pop %v2775
      %v2777 = vmul.f32 %v2359, 1.442695
      %v2778 = vpow.pop %v2777
      %v2779 = vmul.f32 %v2360, 1.442695
      %v2780 = vpow.pop %v2779
      %v2781 = vmul.f32 %v2361, 1.442695
      %v2782 = vpow.pop %v2781
      %v2783 = vmul.f32 %v2362, 1.442695
      %v2784 = vpow.pop %v2783
      %v2785 = vmul.f32 %v2363, 1.442695
      %v2786 = vpow.pop %v2785
      %v2787 = vmul.f32 %v2364, 1.442695
      %v2788 = vpow.pop %v2787
      %v2789 = vmul.f32 %v2365, 1.442695
      %v2790 = vpow.pop %v2789
      %v2791 = vmul.f32 %v2366, 1.442695
      %v2792 = vpow.pop %v2791
      %v2793 = vmul.f32 %v2367, 1.442695
      %v2794 = vpow.pop %v2793
      %v2795 = vmul.f32 %v2368, 1.442695
      %v2796 = vpow.pop %v2795
      %v2797 = vmul.f32 %v2369, 1.442695
      %v2798 = vpow.pop %v2797
      %v2799 = vmul.f32 %v2370, 1.442695
      %v2800 = vpow.pop %v2799
      %v2801 = vmul.f32 %v2371, 1.442695
      %v2802 = vpow.pop %v2801
      %v2803 = vmul.f32 %v2372, 1.442695
      %v2804 = vpow.pop %v2803
      %v2805 = vmul.f32 %v2373, 1.442695
      %v2806 = vpow.pop %v2805
      %v2807 = vmul.f32 %v2374, 1.442695
      %v2808 = vpow.pop %v2807
      %v2809 = vmul.f32 %v2375, 1.442695
      %v2810 = vpow.pop %v2809
      %v2811 = vmul.f32 %v2376, 1.442695
      %v2812 = vpow.pop %v2811
      %v2813 = vmul.f32 %v2377, 1.442695
      %v2814 = vpow.pop %v2813
      %v2815 = vmul.f32 %v2378, 1.442695
      %v2816 = vpow.pop %v2815
      %v2817 = vmul.f32 %v2379, 1.442695
      %v2818 = vpow.pop %v2817
      %v2819 = vmul.f32 %v2380, 1.442695
      %v2820 = vpow.pop %v2819
      %v2821 = vmul.f32 %v2381, 1.442695
      %v2822 = vpow.pop %v2821
      %v2823 = vmul.f32 %v2382, 1.442695
      %v2824 = vpow.pop %v2823
      %v2825 = vmul.f32 %v2383, 1.442695
      %v2826 = vpow.pop %v2825
      %v2827 = vmul.f32 %v2384, 1.442695
      %v2828 = vpow.pop %v2827
      %v2829 = vmul.f32 %v2385, 1.442695
      %v2830 = vpow.pop %v2829
      %v2831 = vmul.f32 %v2386, 1.442695
      %v2832 = vpow.pop %v2831
      %v2833 = vmul.f32 %v2387, 1.442695
      %v2834 = vpow.pop %v2833
      %v2835 = vmul.f32 %v2388, 1.442695
      %v2836 = vpow.pop %v2835
      %v2837 = vmul.f32 %v2389, 1.442695
      %v2838 = vpow.pop %v2837
      %v2839 = vmul.f32 %v2390, 1.442695
      %v2840 = vpow.pop %v2839
      %v2841 = vmul.f32 %v2391, 1.442695
      %v2842 = vpow.pop %v2841
      %v2843 = vmul.f32 %v2392, 1.442695
      %v2844 = vpow.pop %v2843
      %v2845 = vmul.f32 %v2393, 1.442695
      %v2846 = vpow.pop %v2845
      %v2847 = vmul.f32 %v2394, 1.442695
      %v2848 = vpow.pop %v2847
      %v2849 = vmul.f32 %v2395, 1.442695
      %v2850 = vpow.pop %v2849
      %v2851 = vmul.f32 %v2396, 1.442695
      %v2852 = vpow.pop %v2851
      %v2853 = vmul.f32 %v2397, 1.442695
      %v2854 = vpow.pop %v2853
      %v2855 = vmul.f32 %v2398, 1.442695
      %v2856 = vpow.pop %v2855
      %v2857 = vmul.f32 %v2399, 1.442695
      %v2858 = vpow.pop %v2857
      %v2859 = vmul.f32 %v2400, 1.442695
      %v2860 = vpow.pop %v2859
      %v2861 = vmul.f32 %v2401, 1.442695
      %v2862 = vpow.pop %v2861
      %v2863 = vmul.f32 %v2402, 1.442695
      %v2864 = vpow.pop %v2863
      %v2865 = vmul.f32 %v2403, 1.442695
      %v2866 = vpow.pop %v2865
      %v2867 = vmul.f32 %v2404, 1.442695
      %v2868 = vpow.pop %v2867
      %v2869 = vmul.f32 %v2405, 1.442695
      %v2870 = vpow.pop %v2869
      %v2871 = vmul.f32 %v2406, 1.442695
      %v2872 = vpow.pop %v2871
      %v2873 = vmul.f32 %v2407, 1.442695
      %v2874 = vpow.pop %v2873
      %v2875 = vmul.f32 %v2408, 1.442695
      %v2876 = vpow.pop %v2875
      %v2877 = vmul.f32 %v2409, 1.442695
      %v2878 = vpow.pop %v2877
      %v2879 = vmul.f32 %v2410, 1.442695
      %v2880 = vpow.pop %v2879
      %v2881 = vmul.f32 %v2411, 1.442695
      %v2882 = vpow.pop %v2881
      %v2883 = vmul.f32 %v2412, 1.442695
      %v2884 = vpow.pop %v2883
      %v2885 = vmul.f32 %v2413, 1.442695
      %v2886 = vpow.pop %v2885
      %v2887 = vmul.f32 %v2414, 1.442695
      %v2888 = vpow.pop %v2887
      %v2889 = vmul.f32 %v2415, 1.442695
      %v2890 = vpow.pop %v2889
      %v2891 = vmul.f32 %v2416, 1.442695
      %v2892 = vpow.pop %v2891
      %v2893 = vmul.f32 %v2417, 1.442695
      %v2894 = vpow.pop %v2893
      %v2895 = vmul.f32 %v2418, 1.442695
      %v2896 = vpow.pop %v2895
      %v2897 = vmul.f32 %v2419, 1.442695
      %v2898 = vpow.pop %v2897
      %v2899 = vmul.f32 %v2420, 1.442695
      %v2900 = vpow.pop %v2899
      %v2901 = vmul.f32 %v2421, 1.442695
      %v2902 = vpow.pop %v2901
      %v2903 = vmul.f32 %v2422, 1.442695
      %v2904 = vpow.pop %v2903
      %v2905 = vmul.f32 %v2423, 1.442695
      %v2906 = vpow.pop %v2905
      %v2907 = vmul.f32 %v2424, 1.442695
      %v2908 = vpow.pop %v2907
      %v2909 = vmul.f32 %v2425, 1.442695
      %v2910 = vpow.pop %v2909
      %v2911 = vmul.f32 %v2426, 1.442695
      %v2912 = vpow.pop %v2911
      %v2913 = vmul.f32 %v2427, 1.442695
      %v2914 = vpow.pop %v2913
      %v2915 = vmul.f32 %v2428, 1.442695
      %v2916 = vpow.pop %v2915
      %v2917 = vmul.f32 %v2429, 1.442695
      %v2918 = vpow.pop %v2917
      %v2919 = vmul.f32 %v2430, 1.442695
      %v2920 = vpow.pop %v2919
      %v2921 = vmul.f32 %v2431, 1.442695
      %v2922 = vpow.pop %v2921
      %v2923 = vmul.f32 %v2432, 1.442695
      %v2924 = vpow.pop %v2923
      %v2925 = vmul.f32 %v2433, 1.442695
      %v2926 = vpow.pop %v2925
      %v2927 = vmul.f32 %v2434, 1.442695
      %v2928 = vpow.pop %v2927
      %v2929 = vmul.f32 %v2435, 1.442695
      %v2930 = vpow.pop %v2929
      %v2931 = vmul.f32 %v2436, 1.442695
      %v2932 = vpow.pop %v2931
      %v2933 = vmul.f32 %v2437, 1.442695
      %v2934 = vpow.pop %v2933
      %v2935 = vmul.f32 %v2438, 1.442695
      %v2936 = vpow.pop %v2935
      %v2937 = vmul.f32 %v2439, 1.442695
      %v2938 = vpow.pop %v2937
      %v2939 = vmul.f32 %v2440, 1.442695
      %v2940 = vpow.pop %v2939
      %v2941 = vmul.f32 %v2441, 1.442695
      %v2942 = vpow.pop %v2941
      %v2943 = vmul.f32 %v2442, 1.442695
      %v2944 = vpow.pop %v2943
      %v2945 = vmul.f32 %v2443, 1.442695
      %v2946 = vpow.pop %v2945
      %v2947 = vmul.f32 %v2444, 1.442695
      %v2948 = vpow.pop %v2947
      %v2949 = vmul.f32 %v2445, 1.442695
      %v2950 = vpow.pop %v2949
      %v2951 = vmul.f32 %v2446, 1.442695
      %v2952 = vpow.pop %v2951
      %v2953 = vmul.f32 %v2447, 1.442695
      %v2954 = vpow.pop %v2953
      %v2955 = vmul.f32 %v2448, 1.442695
      %v2956 = vpow.pop %v2955
      %v2957 = vmul.f32 %v2449, 1.442695
      %v2958 = vpow.pop %v2957
      %v2959 = vmul.f32 %v2450, 1.442695
      %v2960 = vpow.pop %v2959
      %v2961 = vmul.f32 %v2451, 1.442695
      %v2962 = vpow.pop %v2961
      %v2963 = vmul.f32 %v2452, 1.442695
      %v2964 = vpow.pop %v2963
      %v2965 = vadd.f32 %v2454, 1.0
      %v2966 = vadd.f32 %v2456, 1.0
      %v2967 = vadd.f32 %v2458, 1.0
      %v2968 = vadd.f32 %v2460, 1.0
      %v2969 = vadd.f32 %v2462, 1.0
      %v2970 = vadd.f32 %v2464, 1.0
      %v2971 = vadd.f32 %v2466, 1.0
      %v2972 = vadd.f32 %v2468, 1.0
      %v2973 = vadd.f32 %v2470, 1.0
      %v2974 = vadd.f32 %v2472, 1.0
      %v2975 = vadd.f32 %v2474, 1.0
      %v2976 = vadd.f32 %v2476, 1.0
      %v2977 = vadd.f32 %v2478, 1.0
      %v2978 = vadd.f32 %v2480, 1.0
      %v2979 = vadd.f32 %v2482, 1.0
      %v2980 = vadd.f32 %v2484, 1.0
      %v2981 = vadd.f32 %v2486, 1.0
      %v2982 = vadd.f32 %v2488, 1.0
      %v2983 = vadd.f32 %v2490, 1.0
      %v2984 = vadd.f32 %v2492, 1.0
      %v2985 = vadd.f32 %v2494, 1.0
      %v2986 = vadd.f32 %v2496, 1.0
      %v2987 = vadd.f32 %v2498, 1.0
      %v2988 = vadd.f32 %v2500, 1.0
      %v2989 = vadd.f32 %v2502, 1.0
      %v2990 = vadd.f32 %v2504, 1.0
      %v2991 = vadd.f32 %v2506, 1.0
      %v2992 = vadd.f32 %v2508, 1.0
      %v2993 = vadd.f32 %v2510, 1.0
      %v2994 = vadd.f32 %v2512, 1.0
      %v2995 = vadd.f32 %v2514, 1.0
      %v2996 = vadd.f32 %v2516, 1.0
      %v2997 = vadd.f32 %v2518, 1.0
      %v2998 = vadd.f32 %v2520, 1.0
      %v2999 = vadd.f32 %v2522, 1.0
      %v3000 = vadd.f32 %v2524, 1.0
      %v3001 = vadd.f32 %v2526, 1.0
      %v3002 = vadd.f32 %v2528, 1.0
      %v3003 = vadd.f32 %v2530, 1.0
      %v3004 = vadd.f32 %v2532, 1.0
      %v3005 = vadd.f32 %v2534, 1.0
      %v3006 = vadd.f32 %v2536, 1.0
      %v3007 = vadd.f32 %v2538, 1.0
      %v3008 = vadd.f32 %v2540, 1.0
      %v3009 = vadd.f32 %v2542, 1.0
      %v3010 = vadd.f32 %v2544, 1.0
      %v3011 = vadd.f32 %v2546, 1.0
      %v3012 = vadd.f32 %v2548, 1.0
      %v3013 = vadd.f32 %v2550, 1.0
      %v3014 = vadd.f32 %v2552, 1.0
      %v3015 = vadd.f32 %v2554, 1.0
      %v3016 = vadd.f32 %v2556, 1.0
      %v3017 = vadd.f32 %v2558, 1.0
      %v3018 = vadd.f32 %v2560, 1.0
      %v3019 = vadd.f32 %v2562, 1.0
      %v3020 = vadd.f32 %v2564, 1.0
      %v3021 = vadd.f32 %v2566, 1.0
      %v3022 = vadd.f32 %v2568, 1.0
      %v3023 = vadd.f32 %v2570, 1.0
      %v3024 = vadd.f32 %v2572, 1.0
      %v3025 = vadd.f32 %v2574, 1.0
      %v3026 = vadd.f32 %v2576, 1.0
      %v3027 = vadd.f32 %v2578, 1.0
      %v3028 = vadd.f32 %v2580, 1.0
      %v3029 = vadd.f32 %v2582, 1.0
      %v3030 = vadd.f32 %v2584, 1.0
      %v3031 = vadd.f32 %v2586, 1.0
      %v3032 = vadd.f32 %v2588, 1.0
      %v3033 = vadd.f32 %v2590, 1.0
      %v3034 = vadd.f32 %v2592, 1.0
      %v3035 = vadd.f32 %v2594, 1.0
      %v3036 = vadd.f32 %v2596, 1.0
      %v3037 = vadd.f32 %v2598, 1.0
      %v3038 = vadd.f32 %v2600, 1.0
      %v3039 = vadd.f32 %v2602, 1.0
      %v3040 = vadd.f32 %v2604, 1.0
      %v3041 = vadd.f32 %v2606, 1.0
      %v3042 = vadd.f32 %v2608, 1.0
      %v3043 = vadd.f32 %v2610, 1.0
      %v3044 = vadd.f32 %v2612, 1.0
      %v3045 = vadd.f32 %v2614, 1.0
      %v3046 = vadd.f32 %v2616, 1.0
      %v3047 = vadd.f32 %v2618, 1.0
      %v3048 = vadd.f32 %v2620, 1.0
      %v3049 = vadd.f32 %v2622, 1.0
      %v3050 = vadd.f32 %v2624, 1.0
      %v3051 = vadd.f32 %v2626, 1.0
      %v3052 = vadd.f32 %v2628, 1.0
      %v3053 = vadd.f32 %v2630, 1.0
      %v3054 = vadd.f32 %v2632, 1.0
      %v3055 = vadd.f32 %v2634, 1.0
      %v3056 = vadd.f32 %v2636, 1.0
      %v3057 = vadd.f32 %v2638, 1.0
      %v3058 = vadd.f32 %v2640, 1.0
      %v3059 = vadd.f32 %v2642, 1.0
      %v3060 = vadd.f32 %v2644, 1.0
      %v3061 = vadd.f32 %v2646, 1.0
      %v3062 = vadd.f32 %v2648, 1.0
      %v3063 = vadd.f32 %v2650, 1.0
      %v3064 = vadd.f32 %v2652, 1.0
      %v3065 = vadd.f32 %v2654, 1.0
      %v3066 = vadd.f32 %v2656, 1.0
      %v3067 = vadd.f32 %v2658, 1.0
      %v3068 = vadd.f32 %v2660, 1.0
      %v3069 = vadd.f32 %v2662, 1.0
      %v3070 = vadd.f32 %v2664, 1.0
      %v3071 = vadd.f32 %v2666, 1.0
      %v3072 = vadd.f32 %v2668, 1.0
      %v3073 = vadd.f32 %v2670, 1.0
      %v3074 = vadd.f32 %v2672, 1.0
      %v3075 = vadd.f32 %v2674, 1.0
      %v3076 = vadd.f32 %v2676, 1.0
      %v3077 = vadd.f32 %v2678, 1.0
      %v3078 = vadd.f32 %v2680, 1.0
      %v3079 = vadd.f32 %v2682, 1.0
      %v3080 = vadd.f32 %v2684, 1.0
      %v3081 = vadd.f32 %v2686, 1.0
      %v3082 = vadd.f32 %v2688, 1.0
      %v3083 = vadd.f32 %v2690, 1.0
      %v3084 = vadd.f32 %v2692, 1.0
      %v3085 = vadd.f32 %v2694, 1.0
      %v3086 = vadd.f32 %v2696, 1.0
      %v3087 = vadd.f32 %v2698, 1.0
      %v3088 = vadd.f32 %v2700, 1.0
      %v3089 = vadd.f32 %v2702, 1.0
      %v3090 = vadd.f32 %v2704, 1.0
      %v3091 = vadd.f32 %v2706, 1.0
      %v3092 = vadd.f32 %v2708, 1.0
      %v3093 = vadd.f32 %v2710, 1.0
      %v3094 = vadd.f32 %v2712, 1.0
      %v3095 = vadd.f32 %v2714, 1.0
      %v3096 = vadd.f32 %v2716, 1.0
      %v3097 = vadd.f32 %v2718, 1.0
      %v3098 = vadd.f32 %v2720, 1.0
      %v3099 = vadd.f32 %v2722, 1.0
      %v3100 = vadd.f32 %v2724, 1.0
      %v3101 = vadd.f32 %v2726, 1.0
      %v3102 = vadd.f32 %v2728, 1.0
      %v3103 = vadd.f32 %v2730, 1.0
      %v3104 = vadd.f32 %v2732, 1.0
      %v3105 = vadd.f32 %v2734, 1.0
      %v3106 = vadd.f32 %v2736, 1.0
      %v3107 = vadd.f32 %v2738, 1.0
      %v3108 = vadd.f32 %v2740, 1.0
      %v3109 = vadd.f32 %v2742, 1.0
      %v3110 = vadd.f32 %v2744, 1.0
      %v3111 = vadd.f32 %v2746, 1.0
      %v3112 = vadd.f32 %v2748, 1.0
      %v3113 = vadd.f32 %v2750, 1.0
      %v3114 = vadd.f32 %v2752, 1.0
      %v3115 = vadd.f32 %v2754, 1.0
      %v3116 = vadd.f32 %v2756, 1.0
      %v3117 = vadd.f32 %v2758, 1.0
      %v3118 = vadd.f32 %v2760, 1.0
      %v3119 = vadd.f32 %v2762, 1.0
      %v3120 = vadd.f32 %v2764, 1.0
      %v3121 = vadd.f32 %v2766, 1.0
      %v3122 = vadd.f32 %v2768, 1.0
      %v3123 = vadd.f32 %v2770, 1.0
      %v3124 = vadd.f32 %v2772, 1.0
      %v3125 = vadd.f32 %v2774, 1.0
      %v3126 = vadd.f32 %v2776, 1.0
      %v3127 = vadd.f32 %v2778, 1.0
      %v3128 = vadd.f32 %v2780, 1.0
      %v3129 = vadd.f32 %v2782, 1.0
      %v3130 = vadd.f32 %v2784, 1.0
      %v3131 = vadd.f32 %v2786, 1.0
      %v3132 = vadd.f32 %v2788, 1.0
      %v3133 = vadd.f32 %v2790, 1.0
      %v3134 = vadd.f32 %v2792, 1.0
      %v3135 = vadd.f32 %v2794, 1.0
      %v3136 = vadd.f32 %v2796, 1.0
      %v3137 = vadd.f32 %v2798, 1.0
      %v3138 = vadd.f32 %v2800, 1.0
      %v3139 = vadd.f32 %v2802, 1.0
      %v3140 = vadd.f32 %v2804, 1.0
      %v3141 = vadd.f32 %v2806, 1.0
      %v3142 = vadd.f32 %v2808, 1.0
      %v3143 = vadd.f32 %v2810, 1.0
      %v3144 = vadd.f32 %v2812, 1.0
      %v3145 = vadd.f32 %v2814, 1.0
      %v3146 = vadd.f32 %v2816, 1.0
      %v3147 = vadd.f32 %v2818, 1.0
      %v3148 = vadd.f32 %v2820, 1.0
      %v3149 = vadd.f32 %v2822, 1.0
      %v3150 = vadd.f32 %v2824, 1.0
      %v3151 = vadd.f32 %v2826, 1.0
      %v3152 = vadd.f32 %v2828, 1.0
      %v3153 = vadd.f32 %v2830, 1.0
      %v3154 = vadd.f32 %v2832, 1.0
      %v3155 = vadd.f32 %v2834, 1.0
      %v3156 = vadd.f32 %v2836, 1.0
      %v3157 = vadd.f32 %v2838, 1.0
      %v3158 = vadd.f32 %v2840, 1.0
      %v3159 = vadd.f32 %v2842, 1.0
      %v3160 = vadd.f32 %v2844, 1.0
      %v3161 = vadd.f32 %v2846, 1.0
      %v3162 = vadd.f32 %v2848, 1.0
      %v3163 = vadd.f32 %v2850, 1.0
      %v3164 = vadd.f32 %v2852, 1.0
      %v3165 = vadd.f32 %v2854, 1.0
      %v3166 = vadd.f32 %v2856, 1.0
      %v3167 = vadd.f32 %v2858, 1.0
      %v3168 = vadd.f32 %v2860, 1.0
      %v3169 = vadd.f32 %v2862, 1.0
      %v3170 = vadd.f32 %v2864, 1.0
      %v3171 = vadd.f32 %v2866, 1.0
      %v3172 = vadd.f32 %v2868, 1.0
      %v3173 = vadd.f32 %v2870, 1.0
      %v3174 = vadd.f32 %v2872, 1.0
      %v3175 = vadd.f32 %v2874, 1.0
      %v3176 = vadd.f32 %v2876, 1.0
      %v3177 = vadd.f32 %v2878, 1.0
      %v3178 = vadd.f32 %v2880, 1.0
      %v3179 = vadd.f32 %v2882, 1.0
      %v3180 = vadd.f32 %v2884, 1.0
      %v3181 = vadd.f32 %v2886, 1.0
      %v3182 = vadd.f32 %v2888, 1.0
      %v3183 = vadd.f32 %v2890, 1.0
      %v3184 = vadd.f32 %v2892, 1.0
      %v3185 = vadd.f32 %v2894, 1.0
      %v3186 = vadd.f32 %v2896, 1.0
      %v3187 = vadd.f32 %v2898, 1.0
      %v3188 = vadd.f32 %v2900, 1.0
      %v3189 = vadd.f32 %v2902, 1.0
      %v3190 = vadd.f32 %v2904, 1.0
      %v3191 = vadd.f32 %v2906, 1.0
      %v3192 = vadd.f32 %v2908, 1.0
      %v3193 = vadd.f32 %v2910, 1.0
      %v3194 = vadd.f32 %v2912, 1.0
      %v3195 = vadd.f32 %v2914, 1.0
      %v3196 = vadd.f32 %v2916, 1.0
      %v3197 = vadd.f32 %v2918, 1.0
      %v3198 = vadd.f32 %v2920, 1.0
      %v3199 = vadd.f32 %v2922, 1.0
      %v3200 = vadd.f32 %v2924, 1.0
      %v3201 = vadd.f32 %v2926, 1.0
      %v3202 = vadd.f32 %v2928, 1.0
      %v3203 = vadd.f32 %v2930, 1.0
      %v3204 = vadd.f32 %v2932, 1.0
      %v3205 = vadd.f32 %v2934, 1.0
      %v3206 = vadd.f32 %v2936, 1.0
      %v3207 = vadd.f32 %v2938, 1.0
      %v3208 = vadd.f32 %v2940, 1.0
      %v3209 = vadd.f32 %v2942, 1.0
      %v3210 = vadd.f32 %v2944, 1.0
      %v3211 = vadd.f32 %v2946, 1.0
      %v3212 = vadd.f32 %v2948, 1.0
      %v3213 = vadd.f32 %v2950, 1.0
      %v3214 = vadd.f32 %v2952, 1.0
      %v3215 = vadd.f32 %v2954, 1.0
      %v3216 = vadd.f32 %v2956, 1.0
      %v3217 = vadd.f32 %v2958, 1.0
      %v3218 = vadd.f32 %v2960, 1.0
      %v3219 = vadd.f32 %v2962, 1.0
      %v3220 = vadd.f32 %v2964, 1.0
      %v3221 = vrcp.pop %v2965
      %v3222 = vrcp.pop %v2966
      %v3223 = vrcp.pop %v2967
      %v3224 = vrcp.pop %v2968
      %v3225 = vrcp.pop %v2969
      %v3226 = vrcp.pop %v2970
      %v3227 = vrcp.pop %v2971
      %v3228 = vrcp.pop %v2972
      %v3229 = vrcp.pop %v2973
      %v3230 = vrcp.pop %v2974
      %v3231 = vrcp.pop %v2975
      %v3232 = vrcp.pop %v2976
      %v3233 = vrcp.pop %v2977
      %v3234 = vrcp.pop %v2978
      %v3235 = vrcp.pop %v2979
      %v3236 = vrcp.pop %v2980
      %v3237 = vrcp.pop %v2981
      %v3238 = vrcp.pop %v2982
      %v3239 = vrcp.pop %v2983
      %v3240 = vrcp.pop %v2984
      %v3241 = vrcp.pop %v2985
      %v3242 = vrcp.pop %v2986
      %v3243 = vrcp.pop %v2987
      %v3244 = vrcp.pop %v2988
      %v3245 = vrcp.pop %v2989
      %v3246 = vrcp.pop %v2990
      %v3247 = vrcp.pop %v2991
      %v3248 = vrcp.pop %v2992
      %v3249 = vrcp.pop %v2993
      %v3250 = vrcp.pop %v2994
      %v3251 = vrcp.pop %v2995
      %v3252 = vrcp.pop %v2996
      %v3253 = vrcp.pop %v2997
      %v3254 = vrcp.pop %v2998
      %v3255 = vrcp.pop %v2999
      %v3256 = vrcp.pop %v3000
      %v3257 = vrcp.pop %v3001
      %v3258 = vrcp.pop %v3002
      %v3259 = vrcp.pop %v3003
      %v3260 = vrcp.pop %v3004
      %v3261 = vrcp.pop %v3005
      %v3262 = vrcp.pop %v3006
      %v3263 = vrcp.pop %v3007
      %v3264 = vrcp.pop %v3008
      %v3265 = vrcp.pop %v3009
      %v3266 = vrcp.pop %v3010
      %v3267 = vrcp.pop %v3011
      %v3268 = vrcp.pop %v3012
      %v3269 = vrcp.pop %v3013
      %v3270 = vrcp.pop %v3014
      %v3271 = vrcp.pop %v3015
      %v3272 = vrcp.pop %v3016
      %v3273 = vrcp.pop %v3017
      %v3274 = vrcp.pop %v3018
      %v3275 = vrcp.pop %v3019
      %v3276 = vrcp.pop %v3020
      %v3277 = vrcp.pop %v3021
      %v3278 = vrcp.pop %v3022
      %v3279 = vrcp.pop %v3023
      %v3280 = vrcp.pop %v3024
      %v3281 = vrcp.pop %v3025
      %v3282 = vrcp.pop %v3026
      %v3283 = vrcp.pop %v3027
      %v3284 = vrcp.pop %v3028
      %v3285 = vrcp.pop %v3029
      %v3286 = vrcp.pop %v3030
      %v3287 = vrcp.pop %v3031
      %v3288 = vrcp.pop %v3032
      %v3289 = vrcp.pop %v3033
      %v3290 = vrcp.pop %v3034
      %v3291 = vrcp.pop %v3035
      %v3292 = vrcp.pop %v3036
      %v3293 = vrcp.pop %v3037
      %v3294 = vrcp.pop %v3038
      %v3295 = vrcp.pop %v3039
      %v3296 = vrcp.pop %v3040
      %v3297 = vrcp.pop %v3041
      %v3298 = vrcp.pop %v3042
      %v3299 = vrcp.pop %v3043
      %v3300 = vrcp.pop %v3044
      %v3301 = vrcp.pop %v3045
      %v3302 = vrcp.pop %v3046
      %v3303 = vrcp.pop %v3047
      %v3304 = vrcp.pop %v3048
      %v3305 = vrcp.pop %v3049
      %v3306 = vrcp.pop %v3050
      %v3307 = vrcp.pop %v3051
      %v3308 = vrcp.pop %v3052
      %v3309 = vrcp.pop %v3053
      %v3310 = vrcp.pop %v3054
      %v3311 = vrcp.pop %v3055
      %v3312 = vrcp.pop %v3056
      %v3313 = vrcp.pop %v3057
      %v3314 = vrcp.pop %v3058
      %v3315 = vrcp.pop %v3059
      %v3316 = vrcp.pop %v3060
      %v3317 = vrcp.pop %v3061
      %v3318 = vrcp.pop %v3062
      %v3319 = vrcp.pop %v3063
      %v3320 = vrcp.pop %v3064
      %v3321 = vrcp.pop %v3065
      %v3322 = vrcp.pop %v3066
      %v3323 = vrcp.pop %v3067
      %v3324 = vrcp.pop %v3068
      %v3325 = vrcp.pop %v3069
      %v3326 = vrcp.pop %v3070
      %v3327 = vrcp.pop %v3071
      %v3328 = vrcp.pop %v3072
      %v3329 = vrcp.pop %v3073
      %v3330 = vrcp.pop %v3074
      %v3331 = vrcp.pop %v3075
      %v3332 = vrcp.pop %v3076
      %v3333 = vrcp.pop %v3077
      %v3334 = vrcp.pop %v3078
      %v3335 = vrcp.pop %v3079
      %v3336 = vrcp.pop %v3080
      %v3337 = vrcp.pop %v3081
      %v3338 = vrcp.pop %v3082
      %v3339 = vrcp.pop %v3083
      %v3340 = vrcp.pop %v3084
      %v3341 = vrcp.pop %v3085
      %v3342 = vrcp.pop %v3086
      %v3343 = vrcp.pop %v3087
      %v3344 = vrcp.pop %v3088
      %v3345 = vrcp.pop %v3089
      %v3346 = vrcp.pop %v3090
      %v3347 = vrcp.pop %v3091
      %v3348 = vrcp.pop %v3092
      %v3349 = vrcp.pop %v3093
      %v3350 = vrcp.pop %v3094
      %v3351 = vrcp.pop %v3095
      %v3352 = vrcp.pop %v3096
      %v3353 = vrcp.pop %v3097
      %v3354 = vrcp.pop %v3098
      %v3355 = vrcp.pop %v3099
      %v3356 = vrcp.pop %v3100
      %v3357 = vrcp.pop %v3101
      %v3358 = vrcp.pop %v3102
      %v3359 = vrcp.pop %v3103
      %v3360 = vrcp.pop %v3104
      %v3361 = vrcp.pop %v3105
      %v3362 = vrcp.pop %v3106
      %v3363 = vrcp.pop %v3107
      %v3364 = vrcp.pop %v3108
      %v3365 = vrcp.pop %v3109
      %v3366 = vrcp.pop %v3110
      %v3367 = vrcp.pop %v3111
      %v3368 = vrcp.pop %v3112
      %v3369 = vrcp.pop %v3113
      %v3370 = vrcp.pop %v3114
      %v3371 = vrcp.pop %v3115
      %v3372 = vrcp.pop %v3116
      %v3373 = vrcp.pop %v3117
      %v3374 = vrcp.pop %v3118
      %v3375 = vrcp.pop %v3119
      %v3376 = vrcp.pop %v3120
      %v3377 = vrcp.pop %v3121
      %v3378 = vrcp.pop %v3122
      %v3379 = vrcp.pop %v3123
      %v3380 = vrcp.pop %v3124
      %v3381 = vrcp.pop %v3125
      %v3382 = vrcp.pop %v3126
      %v3383 = vrcp.pop %v3127
      %v3384 = vrcp.pop %v3128
      %v3385 = vrcp.pop %v3129
      %v3386 = vrcp.pop %v3130
      %v3387 = vrcp.pop %v3131
      %v3388 = vrcp.pop %v3132
      %v3389 = vrcp.pop %v3133
      %v3390 = vrcp.pop %v3134
      %v3391 = vrcp.pop %v3135
      %v3392 = vrcp.pop %v3136
      %v3393 = vrcp.pop %v3137
      %v3394 = vrcp.pop %v3138
      %v3395 = vrcp.pop %v3139
      %v3396 = vrcp.pop %v3140
      %v3397 = vrcp.pop %v3141
      %v3398 = vrcp.pop %v3142
      %v3399 = vrcp.pop %v3143
      %v3400 = vrcp.pop %v3144
      %v3401 = vrcp.pop %v3145
      %v3402 = vrcp.pop %v3146
      %v3403 = vrcp.pop %v3147
      %v3404 = vrcp.pop %v3148
      %v3405 = vrcp.pop %v3149
      %v3406 = vrcp.pop %v3150
      %v3407 = vrcp.pop %v3151
      %v3408 = vrcp.pop %v3152
      %v3409 = vrcp.pop %v3153
      %v3410 = vrcp.pop %v3154
      %v3411 = vrcp.pop %v3155
      %v3412 = vrcp.pop %v3156
      %v3413 = vrcp.pop %v3157
      %v3414 = vrcp.pop %v3158
      %v3415 = vrcp.pop %v3159
      %v3416 = vrcp.pop %v3160
      %v3417 = vrcp.pop %v3161
      %v3418 = vrcp.pop %v3162
      %v3419 = vrcp.pop %v3163
      %v3420 = vrcp.pop %v3164
      %v3421 = vrcp.pop %v3165
      %v3422 = vrcp.pop %v3166
      %v3423 = vrcp.pop %v3167
      %v3424 = vrcp.pop %v3168
      %v3425 = vrcp.pop %v3169
      %v3426 = vrcp.pop %v3170
      %v3427 = vrcp.pop %v3171
      %v3428 = vrcp.pop %v3172
      %v3429 = vrcp.pop %v3173
      %v3430 = vrcp.pop %v3174
      %v3431 = vrcp.pop %v3175
      %v3432 = vrcp.pop %v3176
      %v3433 = vrcp.pop %v3177
      %v3434 = vrcp.pop %v3178
      %v3435 = vrcp.pop %v3179
      %v3436 = vrcp.pop %v3180
      %v3437 = vrcp.pop %v3181
      %v3438 = vrcp.pop %v3182
      %v3439 = vrcp.pop %v3183
      %v3440 = vrcp.pop %v3184
      %v3441 = vrcp.pop %v3185
      %v3442 = vrcp.pop %v3186
      %v3443 = vrcp.pop %v3187
      %v3444 = vrcp.pop %v3188
      %v3445 = vrcp.pop %v3189
      %v3446 = vrcp.pop %v3190
      %v3447 = vrcp.pop %v3191
      %v3448 = vrcp.pop %v3192
      %v3449 = vrcp.pop %v3193
      %v3450 = vrcp.pop %v3194
      %v3451 = vrcp.pop %v3195
      %v3452 = vrcp.pop %v3196
      %v3453 = vrcp.pop %v3197
      %v3454 = vrcp.pop %v3198
      %v3455 = vrcp.pop %v3199
      %v3456 = vrcp.pop %v3200
      %v3457 = vrcp.pop %v3201
      %v3458 = vrcp.pop %v3202
      %v3459 = vrcp.pop %v3203
      %v3460 = vrcp.pop %v3204
      %v3461 = vrcp.pop %v3205
      %v3462 = vrcp.pop %v3206
      %v3463 = vrcp.pop %v3207
      %v3464 = vrcp.pop %v3208
      %v3465 = vrcp.pop %v3209
      %v3466 = vrcp.pop %v3210
      %v3467 = vrcp.pop %v3211
      %v3468 = vrcp.pop %v3212
      %v3469 = vrcp.pop %v3213
      %v3470 = vrcp.pop %v3214
      %v3471 = vrcp.pop %v3215
      %v3472 = vrcp.pop %v3216
      %v3473 = vrcp.pop %v3217
      %v3474 = vrcp.pop %v3218
      %v3475 = vrcp.pop %v3219
      %v3476 = vrcp.pop %v3220
      %v3477 = vpack.c.bf16 %v3223, %v3221
      %v3478 = vpack.c.bf16 %v3224, %v3222
      %v3479 = vpack.c.bf16 %v3227, %v3225
      %v3480 = vpack.c.bf16 %v3228, %v3226
      %v3481 = vpack.c.bf16 %v3231, %v3229
      %v3482 = vpack.c.bf16 %v3232, %v3230
      %v3483 = vpack.c.bf16 %v3235, %v3233
      %v3484 = vpack.c.bf16 %v3236, %v3234
      %v3485 = vpack.c.bf16 %v3239, %v3237
      %v3486 = vpack.c.bf16 %v3240, %v3238
      %v3487 = vpack.c.bf16 %v3243, %v3241
      %v3488 = vpack.c.bf16 %v3244, %v3242
      %v3489 = vpack.c.bf16 %v3247, %v3245
      %v3490 = vpack.c.bf16 %v3248, %v3246
      %v3491 = vpack.c.bf16 %v3251, %v3249
      %v3492 = vpack.c.bf16 %v3252, %v3250
      %v3493 = vpack.c.bf16 %v3255, %v3253
      %v3494 = vpack.c.bf16 %v3256, %v3254
      %v3495 = vpack.c.bf16 %v3259, %v3257
      %v3496 = vpack.c.bf16 %v3260, %v3258
      %v3497 = vpack.c.bf16 %v3263, %v3261
      %v3498 = vpack.c.bf16 %v3264, %v3262
      %v3499 = vpack.c.bf16 %v3267, %v3265
      %v3500 = vpack.c.bf16 %v3268, %v3266
      %v3501 = vpack.c.bf16 %v3271, %v3269
      %v3502 = vpack.c.bf16 %v3272, %v3270
      %v3503 = vpack.c.bf16 %v3275, %v3273
      %v3504 = vpack.c.bf16 %v3276, %v3274
      %v3505 = vpack.c.bf16 %v3279, %v3277
      %v3506 = vpack.c.bf16 %v3280, %v3278
      %v3507 = vpack.c.bf16 %v3283, %v3281
      %v3508 = vpack.c.bf16 %v3284, %v3282
      %v3509 = vpack.c.bf16 %v3287, %v3285
      %v3510 = vpack.c.bf16 %v3288, %v3286
      %v3511 = vpack.c.bf16 %v3291, %v3289
      %v3512 = vpack.c.bf16 %v3292, %v3290
      %v3513 = vpack.c.bf16 %v3295, %v3293
      %v3514 = vpack.c.bf16 %v3296, %v3294
      %v3515 = vpack.c.bf16 %v3299, %v3297
      %v3516 = vpack.c.bf16 %v3300, %v3298
      %v3517 = vpack.c.bf16 %v3303, %v3301
      %v3518 = vpack.c.bf16 %v3304, %v3302
      %v3519 = vpack.c.bf16 %v3307, %v3305
      %v3520 = vpack.c.bf16 %v3308, %v3306
      %v3521 = vpack.c.bf16 %v3311, %v3309
      %v3522 = vpack.c.bf16 %v3312, %v3310
      %v3523 = vpack.c.bf16 %v3315, %v3313
      %v3524 = vpack.c.bf16 %v3316, %v3314
      %v3525 = vpack.c.bf16 %v3319, %v3317
      %v3526 = vpack.c.bf16 %v3320, %v3318
      %v3527 = vpack.c.bf16 %v3323, %v3321
      %v3528 = vpack.c.bf16 %v3324, %v3322
      %v3529 = vpack.c.bf16 %v3327, %v3325
      %v3530 = vpack.c.bf16 %v3328, %v3326
      %v3531 = vpack.c.bf16 %v3331, %v3329
      %v3532 = vpack.c.bf16 %v3332, %v3330
      %v3533 = vpack.c.bf16 %v3335, %v3333
      %v3534 = vpack.c.bf16 %v3336, %v3334
      %v3535 = vpack.c.bf16 %v3339, %v3337
      %v3536 = vpack.c.bf16 %v3340, %v3338
      %v3537 = vpack.c.bf16 %v3343, %v3341
      %v3538 = vpack.c.bf16 %v3344, %v3342
      %v3539 = vpack.c.bf16 %v3347, %v3345
      %v3540 = vpack.c.bf16 %v3348, %v3346
      %v3541 = vpack.c.bf16 %v3351, %v3349
      %v3542 = vpack.c.bf16 %v3352, %v3350
      %v3543 = vpack.c.bf16 %v3355, %v3353
      %v3544 = vpack.c.bf16 %v3356, %v3354
      %v3545 = vpack.c.bf16 %v3359, %v3357
      %v3546 = vpack.c.bf16 %v3360, %v3358
      %v3547 = vpack.c.bf16 %v3363, %v3361
      %v3548 = vpack.c.bf16 %v3364, %v3362
      %v3549 = vpack.c.bf16 %v3367, %v3365
      %v3550 = vpack.c.bf16 %v3368, %v3366
      %v3551 = vpack.c.bf16 %v3371, %v3369
      %v3552 = vpack.c.bf16 %v3372, %v3370
      %v3553 = vpack.c.bf16 %v3375, %v3373
      %v3554 = vpack.c.bf16 %v3376, %v3374
      %v3555 = vpack.c.bf16 %v3379, %v3377
      %v3556 = vpack.c.bf16 %v3380, %v3378
      %v3557 = vpack.c.bf16 %v3383, %v3381
      %v3558 = vpack.c.bf16 %v3384, %v3382
      %v3559 = vpack.c.bf16 %v3387, %v3385
      %v3560 = vpack.c.bf16 %v3388, %v3386
      %v3561 = vpack.c.bf16 %v3391, %v3389
      %v3562 = vpack.c.bf16 %v3392, %v3390
      %v3563 = vpack.c.bf16 %v3395, %v3393
      %v3564 = vpack.c.bf16 %v3396, %v3394
      %v3565 = vpack.c.bf16 %v3399, %v3397
      %v3566 = vpack.c.bf16 %v3400, %v3398
      %v3567 = vpack.c.bf16 %v3403, %v3401
      %v3568 = vpack.c.bf16 %v3404, %v3402
      %v3569 = vpack.c.bf16 %v3407, %v3405
      %v3570 = vpack.c.bf16 %v3408, %v3406
      %v3571 = vpack.c.bf16 %v3411, %v3409
      %v3572 = vpack.c.bf16 %v3412, %v3410
      %v3573 = vpack.c.bf16 %v3415, %v3413
      %v3574 = vpack.c.bf16 %v3416, %v3414
      %v3575 = vpack.c.bf16 %v3419, %v3417
      %v3576 = vpack.c.bf16 %v3420, %v3418
      %v3577 = vpack.c.bf16 %v3423, %v3421
      %v3578 = vpack.c.bf16 %v3424, %v3422
      %v3579 = vpack.c.bf16 %v3427, %v3425
      %v3580 = vpack.c.bf16 %v3428, %v3426
      %v3581 = vpack.c.bf16 %v3431, %v3429
      %v3582 = vpack.c.bf16 %v3432, %v3430
      %v3583 = vpack.c.bf16 %v3435, %v3433
      %v3584 = vpack.c.bf16 %v3436, %v3434
      %v3585 = vpack.c.bf16 %v3439, %v3437
      %v3586 = vpack.c.bf16 %v3440, %v3438
      %v3587 = vpack.c.bf16 %v3443, %v3441
      %v3588 = vpack.c.bf16 %v3444, %v3442
      %v3589 = vpack.c.bf16 %v3447, %v3445
      %v3590 = vpack.c.bf16 %v3448, %v3446
      %v3591 = vpack.c.bf16 %v3451, %v3449
      %v3592 = vpack.c.bf16 %v3452, %v3450
      %v3593 = vpack.c.bf16 %v3455, %v3453
      %v3594 = vpack.c.bf16 %v3456, %v3454
      %v3595 = vpack.c.bf16 %v3459, %v3457
      %v3596 = vpack.c.bf16 %v3460, %v3458
      %v3597 = vpack.c.bf16 %v3463, %v3461
      %v3598 = vpack.c.bf16 %v3464, %v3462
      %v3599 = vpack.c.bf16 %v3467, %v3465
      %v3600 = vpack.c.bf16 %v3468, %v3466
      %v3601 = vpack.c.bf16 %v3471, %v3469
      %v3602 = vpack.c.bf16 %v3472, %v3470
      %v3603 = vpack.c.bf16 %v3475, %v3473
      %v3604 = vpack.c.bf16 %v3476, %v3474
      %v3733 = vunpack.c.l.b16 %v3477
      %v3734 = vunpack.c.l.b16 %v3478
      %v3735 = vunpack.c.h.b16 %v3477
      %v3736 = vunpack.c.h.b16 %v3478
      %v3737 = vunpack.c.l.b16 %v3479
      %v3738 = vunpack.c.l.b16 %v3480
      %v3739 = vunpack.c.h.b16 %v3479
      %v3740 = vunpack.c.h.b16 %v3480
      %v3741 = vunpack.c.l.b16 %v3481
      %v3742 = vunpack.c.l.b16 %v3482
      %v3743 = vunpack.c.h.b16 %v3481
      %v3744 = vunpack.c.h.b16 %v3482
      %v3745 = vunpack.c.l.b16 %v3483
      %v3746 = vunpack.c.l.b16 %v3484
      %v3747 = vunpack.c.h.b16 %v3483
      %v3748 = vunpack.c.h.b16 %v3484
      %v3749 = vunpack.c.l.b16 %v3485
      %v3750 = vunpack.c.l.b16 %v3486
      %v3751 = vunpack.c.h.b16 %v3485
      %v3752 = vunpack.c.h.b16 %v3486
      %v3753 = vunpack.c.l.b16 %v3487
      %v3754 = vunpack.c.l.b16 %v3488
      %v3755 = vunpack.c.h.b16 %v3487
      %v3756 = vunpack.c.h.b16 %v3488
      %v3757 = vunpack.c.l.b16 %v3489
      %v3758 = vunpack.c.l.b16 %v3490
      %v3759 = vunpack.c.h.b16 %v3489
      %v3760 = vunpack.c.h.b16 %v3490
      %v3761 = vunpack.c.l.b16 %v3491
      %v3762 = vunpack.c.l.b16 %v3492
      %v3763 = vunpack.c.h.b16 %v3491
      %v3764 = vunpack.c.h.b16 %v3492
      %v3765 = vunpack.c.l.b16 %v3493
      %v3766 = vunpack.c.l.b16 %v3494
      %v3767 = vunpack.c.h.b16 %v3493
      %v3768 = vunpack.c.h.b16 %v3494
      %v3769 = vunpack.c.l.b16 %v3495
      %v3770 = vunpack.c.l.b16 %v3496
      %v3771 = vunpack.c.h.b16 %v3495
      %v3772 = vunpack.c.h.b16 %v3496
      %v3773 = vunpack.c.l.b16 %v3497
      %v3774 = vunpack.c.l.b16 %v3498
      %v3775 = vunpack.c.h.b16 %v3497
      %v3776 = vunpack.c.h.b16 %v3498
      %v3777 = vunpack.c.l.b16 %v3499
      %v3778 = vunpack.c.l.b16 %v3500
      %v3779 = vunpack.c.h.b16 %v3499
      %v3780 = vunpack.c.h.b16 %v3500
      %v3781 = vunpack.c.l.b16 %v3501
      %v3782 = vunpack.c.l.b16 %v3502
      %v3783 = vunpack.c.h.b16 %v3501
      %v3784 = vunpack.c.h.b16 %v3502
      %v3785 = vunpack.c.l.b16 %v3503
      %v3786 = vunpack.c.l.b16 %v3504
      %v3787 = vunpack.c.h.b16 %v3503
      %v3788 = vunpack.c.h.b16 %v3504
      %v3789 = vunpack.c.l.b16 %v3505
      %v3790 = vunpack.c.l.b16 %v3506
      %v3791 = vunpack.c.h.b16 %v3505
      %v3792 = vunpack.c.h.b16 %v3506
      %v3793 = vunpack.c.l.b16 %v3507
      %v3794 = vunpack.c.l.b16 %v3508
      %v3795 = vunpack.c.h.b16 %v3507
      %v3796 = vunpack.c.h.b16 %v3508
      %v3797 = vunpack.c.l.b16 %v3509
      %v3798 = vunpack.c.l.b16 %v3510
      %v3799 = vunpack.c.h.b16 %v3509
      %v3800 = vunpack.c.h.b16 %v3510
      %v3801 = vunpack.c.l.b16 %v3511
      %v3802 = vunpack.c.l.b16 %v3512
      %v3803 = vunpack.c.h.b16 %v3511
      %v3804 = vunpack.c.h.b16 %v3512
      %v3805 = vunpack.c.l.b16 %v3513
      %v3806 = vunpack.c.l.b16 %v3514
      %v3807 = vunpack.c.h.b16 %v3513
      %v3808 = vunpack.c.h.b16 %v3514
      %v3809 = vunpack.c.l.b16 %v3515
      %v3810 = vunpack.c.l.b16 %v3516
      %v3811 = vunpack.c.h.b16 %v3515
      %v3812 = vunpack.c.h.b16 %v3516
      %v3813 = vunpack.c.l.b16 %v3517
      %v3814 = vunpack.c.l.b16 %v3518
      %v3815 = vunpack.c.h.b16 %v3517
      %v3816 = vunpack.c.h.b16 %v3518
      %v3817 = vunpack.c.l.b16 %v3519
      %v3818 = vunpack.c.l.b16 %v3520
      %v3819 = vunpack.c.h.b16 %v3519
      %v3820 = vunpack.c.h.b16 %v3520
      %v3821 = vunpack.c.l.b16 %v3521
      %v3822 = vunpack.c.l.b16 %v3522
      %v3823 = vunpack.c.h.b16 %v3521
      %v3824 = vunpack.c.h.b16 %v3522
      %v3825 = vunpack.c.l.b16 %v3523
      %v3826 = vunpack.c.l.b16 %v3524
      %v3827 = vunpack.c.h.b16 %v3523
      %v3828 = vunpack.c.h.b16 %v3524
      %v3829 = vunpack.c.l.b16 %v3525
      %v3830 = vunpack.c.l.b16 %v3526
      %v3831 = vunpack.c.h.b16 %v3525
      %v3832 = vunpack.c.h.b16 %v3526
      %v3833 = vunpack.c.l.b16 %v3527
      %v3834 = vunpack.c.l.b16 %v3528
      %v3835 = vunpack.c.h.b16 %v3527
      %v3836 = vunpack.c.h.b16 %v3528
      %v3837 = vunpack.c.l.b16 %v3529
      %v3838 = vunpack.c.l.b16 %v3530
      %v3839 = vunpack.c.h.b16 %v3529
      %v3840 = vunpack.c.h.b16 %v3530
      %v3841 = vunpack.c.l.b16 %v3531
      %v3842 = vunpack.c.l.b16 %v3532
      %v3843 = vunpack.c.h.b16 %v3531
      %v3844 = vunpack.c.h.b16 %v3532
      %v3845 = vunpack.c.l.b16 %v3533
      %v3846 = vunpack.c.l.b16 %v3534
      %v3847 = vunpack.c.h.b16 %v3533
      %v3848 = vunpack.c.h.b16 %v3534
      %v3849 = vunpack.c.l.b16 %v3535
      %v3850 = vunpack.c.l.b16 %v3536
      %v3851 = vunpack.c.h.b16 %v3535
      %v3852 = vunpack.c.h.b16 %v3536
      %v3853 = vunpack.c.l.b16 %v3537
      %v3854 = vunpack.c.l.b16 %v3538
      %v3855 = vunpack.c.h.b16 %v3537
      %v3856 = vunpack.c.h.b16 %v3538
      %v3857 = vunpack.c.l.b16 %v3539
      %v3858 = vunpack.c.l.b16 %v3540
      %v3859 = vunpack.c.h.b16 %v3539
      %v3860 = vunpack.c.h.b16 %v3540
      %v3861 = vunpack.c.l.b16 %v3541
      %v3862 = vunpack.c.l.b16 %v3542
      %v3863 = vunpack.c.h.b16 %v3541
      %v3864 = vunpack.c.h.b16 %v3542
      %v3865 = vunpack.c.l.b16 %v3543
      %v3866 = vunpack.c.l.b16 %v3544
      %v3867 = vunpack.c.h.b16 %v3543
      %v3868 = vunpack.c.h.b16 %v3544
      %v3869 = vunpack.c.l.b16 %v3545
      %v3870 = vunpack.c.l.b16 %v3546
      %v3871 = vunpack.c.h.b16 %v3545
      %v3872 = vunpack.c.h.b16 %v3546
      %v3873 = vunpack.c.l.b16 %v3547
      %v3874 = vunpack.c.l.b16 %v3548
      %v3875 = vunpack.c.h.b16 %v3547
      %v3876 = vunpack.c.h.b16 %v3548
      %v3877 = vunpack.c.l.b16 %v3549
      %v3878 = vunpack.c.l.b16 %v3550
      %v3879 = vunpack.c.h.b16 %v3549
      %v3880 = vunpack.c.h.b16 %v3550
      %v3881 = vunpack.c.l.b16 %v3551
      %v3882 = vunpack.c.l.b16 %v3552
      %v3883 = vunpack.c.h.b16 %v3551
      %v3884 = vunpack.c.h.b16 %v3552
      %v3885 = vunpack.c.l.b16 %v3553
      %v3886 = vunpack.c.l.b16 %v3554
      %v3887 = vunpack.c.h.b16 %v3553
      %v3888 = vunpack.c.h.b16 %v3554
      %v3889 = vunpack.c.l.b16 %v3555
      %v3890 = vunpack.c.l.b16 %v3556
      %v3891 = vunpack.c.h.b16 %v3555
      %v3892 = vunpack.c.h.b16 %v3556
      %v3893 = vunpack.c.l.b16 %v3557
      %v3894 = vunpack.c.l.b16 %v3558
      %v3895 = vunpack.c.h.b16 %v3557
      %v3896 = vunpack.c.h.b16 %v3558
      %v3897 = vunpack.c.l.b16 %v3559
      %v3898 = vunpack.c.l.b16 %v3560
      %v3899 = vunpack.c.h.b16 %v3559
      %v3900 = vunpack.c.h.b16 %v3560
      %v3901 = vunpack.c.l.b16 %v3561
      %v3902 = vunpack.c.l.b16 %v3562
      %v3903 = vunpack.c.h.b16 %v3561
      %v3904 = vunpack.c.h.b16 %v3562
      %v3905 = vunpack.c.l.b16 %v3563
      %v3906 = vunpack.c.l.b16 %v3564
      %v3907 = vunpack.c.h.b16 %v3563
      %v3908 = vunpack.c.h.b16 %v3564
      %v3909 = vunpack.c.l.b16 %v3565
      %v3910 = vunpack.c.l.b16 %v3566
      %v3911 = vunpack.c.h.b16 %v3565
      %v3912 = vunpack.c.h.b16 %v3566
      %v3913 = vunpack.c.l.b16 %v3567
      %v3914 = vunpack.c.l.b16 %v3568
      %v3915 = vunpack.c.h.b16 %v3567
      %v3916 = vunpack.c.h.b16 %v3568
      %v3917 = vunpack.c.l.b16 %v3569
      %v3918 = vunpack.c.l.b16 %v3570
      %v3919 = vunpack.c.h.b16 %v3569
      %v3920 = vunpack.c.h.b16 %v3570
      %v3921 = vunpack.c.l.b16 %v3571
      %v3922 = vunpack.c.l.b16 %v3572
      %v3923 = vunpack.c.h.b16 %v3571
      %v3924 = vunpack.c.h.b16 %v3572
      %v3925 = vunpack.c.l.b16 %v3573
      %v3926 = vunpack.c.l.b16 %v3574
      %v3927 = vunpack.c.h.b16 %v3573
      %v3928 = vunpack.c.h.b16 %v3574
      %v3929 = vunpack.c.l.b16 %v3575
      %v3930 = vunpack.c.l.b16 %v3576
      %v3931 = vunpack.c.h.b16 %v3575
      %v3932 = vunpack.c.h.b16 %v3576
      %v3933 = vunpack.c.l.b16 %v3577
      %v3934 = vunpack.c.l.b16 %v3578
      %v3935 = vunpack.c.h.b16 %v3577
      %v3936 = vunpack.c.h.b16 %v3578
      %v3937 = vunpack.c.l.b16 %v3579
      %v3938 = vunpack.c.l.b16 %v3580
      %v3939 = vunpack.c.h.b16 %v3579
      %v3940 = vunpack.c.h.b16 %v3580
      %v3941 = vunpack.c.l.b16 %v3581
      %v3942 = vunpack.c.l.b16 %v3582
      %v3943 = vunpack.c.h.b16 %v3581
      %v3944 = vunpack.c.h.b16 %v3582
      %v3945 = vunpack.c.l.b16 %v3583
      %v3946 = vunpack.c.l.b16 %v3584
      %v3947 = vunpack.c.h.b16 %v3583
      %v3948 = vunpack.c.h.b16 %v3584
      %v3949 = vunpack.c.l.b16 %v3585
      %v3950 = vunpack.c.l.b16 %v3586
      %v3951 = vunpack.c.h.b16 %v3585
      %v3952 = vunpack.c.h.b16 %v3586
      %v3953 = vunpack.c.l.b16 %v3587
      %v3954 = vunpack.c.l.b16 %v3588
      %v3955 = vunpack.c.h.b16 %v3587
      %v3956 = vunpack.c.h.b16 %v3588
      %v3957 = vunpack.c.l.b16 %v3589
      %v3958 = vunpack.c.l.b16 %v3590
      %v3959 = vunpack.c.h.b16 %v3589
      %v3960 = vunpack.c.h.b16 %v3590
      %v3961 = vunpack.c.l.b16 %v3591
      %v3962 = vunpack.c.l.b16 %v3592
      %v3963 = vunpack.c.h.b16 %v3591
      %v3964 = vunpack.c.h.b16 %v3592
      %v3965 = vunpack.c.l.b16 %v3593
      %v3966 = vunpack.c.l.b16 %v3594
      %v3967 = vunpack.c.h.b16 %v3593
      %v3968 = vunpack.c.h.b16 %v3594
      %v3969 = vunpack.c.l.b16 %v3595
      %v3970 = vunpack.c.l.b16 %v3596
      %v3971 = vunpack.c.h.b16 %v3595
      %v3972 = vunpack.c.h.b16 %v3596
      %v3973 = vunpack.c.l.b16 %v3597
      %v3974 = vunpack.c.l.b16 %v3598
      %v3975 = vunpack.c.h.b16 %v3597
      %v3976 = vunpack.c.h.b16 %v3598
      %v3977 = vunpack.c.l.b16 %v3599
      %v3978 = vunpack.c.l.b16 %v3600
      %v3979 = vunpack.c.h.b16 %v3599
      %v3980 = vunpack.c.h.b16 %v3600
      %v3981 = vunpack.c.l.b16 %v3601
      %v3982 = vunpack.c.l.b16 %v3602
      %v3983 = vunpack.c.h.b16 %v3601
      %v3984 = vunpack.c.h.b16 %v3602
      %v3985 = vunpack.c.l.b16 %v3603
      %v3986 = vunpack.c.l.b16 %v3604
      %v3987 = vunpack.c.h.b16 %v3603
      %v3988 = vunpack.c.h.b16 %v3604
      %v3989 = vpack.c.b16 %v3734, %v3733
      %v3990 = vpack.c.b16 %v3736, %v3735
      %v3991 = vpack.c.b16 %v3738, %v3737
      %v3992 = vpack.c.b16 %v3740, %v3739
      %v3993 = vpack.c.b16 %v3742, %v3741
      %v3994 = vpack.c.b16 %v3744, %v3743
      %v3995 = vpack.c.b16 %v3746, %v3745
      %v3996 = vpack.c.b16 %v3748, %v3747
      %v3997 = vpack.c.b16 %v3750, %v3749
      %v3998 = vpack.c.b16 %v3752, %v3751
      %v3999 = vpack.c.b16 %v3754, %v3753
      %v4000 = vpack.c.b16 %v3756, %v3755
      %v4001 = vpack.c.b16 %v3758, %v3757
      %v4002 = vpack.c.b16 %v3760, %v3759
      %v4003 = vpack.c.b16 %v3762, %v3761
      %v4004 = vpack.c.b16 %v3764, %v3763
      %v4005 = vpack.c.b16 %v3766, %v3765
      %v4006 = vpack.c.b16 %v3768, %v3767
      %v4007 = vpack.c.b16 %v3770, %v3769
      %v4008 = vpack.c.b16 %v3772, %v3771
      %v4009 = vpack.c.b16 %v3774, %v3773
      %v4010 = vpack.c.b16 %v3776, %v3775
      %v4011 = vpack.c.b16 %v3778, %v3777
      %v4012 = vpack.c.b16 %v3780, %v3779
      %v4013 = vpack.c.b16 %v3782, %v3781
      %v4014 = vpack.c.b16 %v3784, %v3783
      %v4015 = vpack.c.b16 %v3786, %v3785
      %v4016 = vpack.c.b16 %v3788, %v3787
      %v4017 = vpack.c.b16 %v3790, %v3789
      %v4018 = vpack.c.b16 %v3792, %v3791
      %v4019 = vpack.c.b16 %v3794, %v3793
      %v4020 = vpack.c.b16 %v3796, %v3795
      %v4021 = vpack.c.b16 %v3798, %v3797
      %v4022 = vpack.c.b16 %v3800, %v3799
      %v4023 = vpack.c.b16 %v3802, %v3801
      %v4024 = vpack.c.b16 %v3804, %v3803
      %v4025 = vpack.c.b16 %v3806, %v3805
      %v4026 = vpack.c.b16 %v3808, %v3807
      %v4027 = vpack.c.b16 %v3810, %v3809
      %v4028 = vpack.c.b16 %v3812, %v3811
      %v4029 = vpack.c.b16 %v3814, %v3813
      %v4030 = vpack.c.b16 %v3816, %v3815
      %v4031 = vpack.c.b16 %v3818, %v3817
      %v4032 = vpack.c.b16 %v3820, %v3819
      %v4033 = vpack.c.b16 %v3822, %v3821
      %v4034 = vpack.c.b16 %v3824, %v3823
      %v4035 = vpack.c.b16 %v3826, %v3825
      %v4036 = vpack.c.b16 %v3828, %v3827
      %v4037 = vpack.c.b16 %v3830, %v3829
      %v4038 = vpack.c.b16 %v3832, %v3831
      %v4039 = vpack.c.b16 %v3834, %v3833
      %v4040 = vpack.c.b16 %v3836, %v3835
      %v4041 = vpack.c.b16 %v3838, %v3837
      %v4042 = vpack.c.b16 %v3840, %v3839
      %v4043 = vpack.c.b16 %v3842, %v3841
      %v4044 = vpack.c.b16 %v3844, %v3843
      %v4045 = vpack.c.b16 %v3846, %v3845
      %v4046 = vpack.c.b16 %v3848, %v3847
      %v4047 = vpack.c.b16 %v3850, %v3849
      %v4048 = vpack.c.b16 %v3852, %v3851
      %v4049 = vpack.c.b16 %v3854, %v3853
      %v4050 = vpack.c.b16 %v3856, %v3855
      %v4051 = vpack.c.b16 %v3858, %v3857
      %v4052 = vpack.c.b16 %v3860, %v3859
      %v4053 = vpack.c.b16 %v3862, %v3861
      %v4054 = vpack.c.b16 %v3864, %v3863
      %v4055 = vpack.c.b16 %v3866, %v3865
      %v4056 = vpack.c.b16 %v3868, %v3867
      %v4057 = vpack.c.b16 %v3870, %v3869
      %v4058 = vpack.c.b16 %v3872, %v3871
      %v4059 = vpack.c.b16 %v3874, %v3873
      %v4060 = vpack.c.b16 %v3876, %v3875
      %v4061 = vpack.c.b16 %v3878, %v3877
      %v4062 = vpack.c.b16 %v3880, %v3879
      %v4063 = vpack.c.b16 %v3882, %v3881
      %v4064 = vpack.c.b16 %v3884, %v3883
      %v4065 = vpack.c.b16 %v3886, %v3885
      %v4066 = vpack.c.b16 %v3888, %v3887
      %v4067 = vpack.c.b16 %v3890, %v3889
      %v4068 = vpack.c.b16 %v3892, %v3891
      %v4069 = vpack.c.b16 %v3894, %v3893
      %v4070 = vpack.c.b16 %v3896, %v3895
      %v4071 = vpack.c.b16 %v3898, %v3897
      %v4072 = vpack.c.b16 %v3900, %v3899
      %v4073 = vpack.c.b16 %v3902, %v3901
      %v4074 = vpack.c.b16 %v3904, %v3903
      %v4075 = vpack.c.b16 %v3906, %v3905
      %v4076 = vpack.c.b16 %v3908, %v3907
      %v4077 = vpack.c.b16 %v3910, %v3909
      %v4078 = vpack.c.b16 %v3912, %v3911
      %v4079 = vpack.c.b16 %v3914, %v3913
      %v4080 = vpack.c.b16 %v3916, %v3915
      %v4081 = vpack.c.b16 %v3918, %v3917
      %v4082 = vpack.c.b16 %v3920, %v3919
      %v4083 = vpack.c.b16 %v3922, %v3921
      %v4084 = vpack.c.b16 %v3924, %v3923
      %v4085 = vpack.c.b16 %v3926, %v3925
      %v4086 = vpack.c.b16 %v3928, %v3927
      %v4087 = vpack.c.b16 %v3930, %v3929
      %v4088 = vpack.c.b16 %v3932, %v3931
      %v4089 = vpack.c.b16 %v3934, %v3933
      %v4090 = vpack.c.b16 %v3936, %v3935
      %v4091 = vpack.c.b16 %v3938, %v3937
      %v4092 = vpack.c.b16 %v3940, %v3939
      %v4093 = vpack.c.b16 %v3942, %v3941
      %v4094 = vpack.c.b16 %v3944, %v3943
      %v4095 = vpack.c.b16 %v3946, %v3945
      %v4096 = vpack.c.b16 %v3948, %v3947
      %v4097 = vpack.c.b16 %v3950, %v3949
      %v4098 = vpack.c.b16 %v3952, %v3951
      %v4099 = vpack.c.b16 %v3954, %v3953
      %v4100 = vpack.c.b16 %v3956, %v3955
      %v4101 = vpack.c.b16 %v3958, %v3957
      %v4102 = vpack.c.b16 %v3960, %v3959
      %v4103 = vpack.c.b16 %v3962, %v3961
      %v4104 = vpack.c.b16 %v3964, %v3963
      %v4105 = vpack.c.b16 %v3966, %v3965
      %v4106 = vpack.c.b16 %v3968, %v3967
      %v4107 = vpack.c.b16 %v3970, %v3969
      %v4108 = vpack.c.b16 %v3972, %v3971
      %v4109 = vpack.c.b16 %v3974, %v3973
      %v4110 = vpack.c.b16 %v3976, %v3975
      %v4111 = vpack.c.b16 %v3978, %v3977
      %v4112 = vpack.c.b16 %v3980, %v3979
      %v4113 = vpack.c.b16 %v3982, %v3981
      %v4114 = vpack.c.b16 %v3984, %v3983
      %v4115 = vpack.c.b16 %v3986, %v3985
      %v4116 = vpack.c.b16 %v3988, %v3987
      %vm4245 = vcmask 1043456
      %vm4246 = vcmask 588804
      %vm4247 = vmor %vm4246, %vm4245
      %4248 = vst.msk [vmem:[%s228] sm:$0xff] %vm4247, %v3989
      %4249 = vst.msk [vmem:[%s228 + $0x8] sm:$0xff] %vm4247, %v3990
      %4250 = vst.msk [vmem:[%s228 + $0x10] sm:$0xff] %vm4247, %v3991
      %4251 = vst.msk [vmem:[%s228 + $0x18] sm:$0xff] %vm4247, %v3992
      %4252 = vst.msk [vmem:[%s228 + $0x20] sm:$0xff] %vm4247, %v3993
      %4253 = vst.msk [vmem:[%s228 + $0x28] sm:$0xff] %vm4247, %v3994
      %4254 = vst.msk [vmem:[%s228 + $0x30] sm:$0xff] %vm4247, %v3995
      %4255 = vst.msk [vmem:[%s228 + $0x38] sm:$0xff] %vm4247, %v3996
      %4256 = vst.msk [vmem:[%s228 + $0x40] sm:$0xff] %vm4247, %v3997
      %4257 = vst.msk [vmem:[%s228 + $0x48] sm:$0xff] %vm4247, %v3998
      %4258 = vst.msk [vmem:[%s228 + $0x50] sm:$0xff] %vm4247, %v3999
      %4259 = vst.msk [vmem:[%s228 + $0x58] sm:$0xff] %vm4247, %v4000
      %4260 = vst.msk [vmem:[%s228 + $0x60] sm:$0xff] %vm4247, %v4001
      %4261 = vst.msk [vmem:[%s228 + $0x68] sm:$0xff] %vm4247, %v4002
      %4262 = vst.msk [vmem:[%s228 + $0x70] sm:$0xff] %vm4247, %v4003
      %4263 = vst.msk [vmem:[%s228 + $0x78] sm:$0xff] %vm4247, %v4004
      %4264 = vst.msk [vmem:[%s228 + $0x80] sm:$0xff] %vm4247, %v4005
      %4265 = vst.msk [vmem:[%s228 + $0x88] sm:$0xff] %vm4247, %v4006
      %4266 = vst.msk [vmem:[%s228 + $0x90] sm:$0xff] %vm4247, %v4007
      %4267 = vst.msk [vmem:[%s228 + $0x98] sm:$0xff] %vm4247, %v4008
      %4268 = vst.msk [vmem:[%s228 + $0xa0] sm:$0xff] %vm4247, %v4009
      %4269 = vst.msk [vmem:[%s228 + $0xa8] sm:$0xff] %vm4247, %v4010
      %4270 = vst.msk [vmem:[%s228 + $0xb0] sm:$0xff] %vm4247, %v4011
      %4271 = vst.msk [vmem:[%s228 + $0xb8] sm:$0xff] %vm4247, %v4012
      %4272 = vst.msk [vmem:[%s228 + $0xc0] sm:$0xff] %vm4247, %v4013
      %4273 = vst.msk [vmem:[%s228 + $0xc8] sm:$0xff] %vm4247, %v4014
      %4274 = vst.msk [vmem:[%s228 + $0xd0] sm:$0xff] %vm4247, %v4015
      %4275 = vst.msk [vmem:[%s228 + $0xd8] sm:$0xff] %vm4247, %v4016
      %4276 = vst.msk [vmem:[%s228 + $0xe0] sm:$0xff] %vm4247, %v4017
      %4277 = vst.msk [vmem:[%s228 + $0xe8] sm:$0xff] %vm4247, %v4018
      %4278 = vst.msk [vmem:[%s228 + $0xf0] sm:$0xff] %vm4247, %v4019
      %4279 = vst.msk [vmem:[%s228 + $0xf8] sm:$0xff] %vm4247, %v4020
      %4280 = vst.msk [vmem:[%s228 + $0x100] sm:$0xff] %vm4247, %v4021
      %4281 = vst.msk [vmem:[%s228 + $0x108] sm:$0xff] %vm4247, %v4022
      %4282 = vst.msk [vmem:[%s228 + $0x110] sm:$0xff] %vm4247, %v4023
      %4283 = vst.msk [vmem:[%s228 + $0x118] sm:$0xff] %vm4247, %v4024
      %4284 = vst.msk [vmem:[%s228 + $0x120] sm:$0xff] %vm4247, %v4025
      %4285 = vst.msk [vmem:[%s228 + $0x128] sm:$0xff] %vm4247, %v4026
      %4286 = vst.msk [vmem:[%s228 + $0x130] sm:$0xff] %vm4247, %v4027
      %4287 = vst.msk [vmem:[%s228 + $0x138] sm:$0xff] %vm4247, %v4028
      %4288 = vst.msk [vmem:[%s228 + $0x140] sm:$0xff] %vm4247, %v4029
      %4289 = vst.msk [vmem:[%s228 + $0x148] sm:$0xff] %vm4247, %v4030
      %4290 = vst.msk [vmem:[%s228 + $0x150] sm:$0xff] %vm4247, %v4031
      %4291 = vst.msk [vmem:[%s228 + $0x158] sm:$0xff] %vm4247, %v4032
      %4292 = vst.msk [vmem:[%s228 + $0x160] sm:$0xff] %vm4247, %v4033
      %4293 = vst.msk [vmem:[%s228 + $0x168] sm:$0xff] %vm4247, %v4034
      %4294 = vst.msk [vmem:[%s228 + $0x170] sm:$0xff] %vm4247, %v4035
      %4295 = vst.msk [vmem:[%s228 + $0x178] sm:$0xff] %vm4247, %v4036
      %4296 = vst.msk [vmem:[%s228 + $0x180] sm:$0xff] %vm4247, %v4037
      %4297 = vst.msk [vmem:[%s228 + $0x188] sm:$0xff] %vm4247, %v4038
      %4298 = vst.msk [vmem:[%s228 + $0x190] sm:$0xff] %vm4247, %v4039
      %4299 = vst.msk [vmem:[%s228 + $0x198] sm:$0xff] %vm4247, %v4040
      %4300 = vst.msk [vmem:[%s228 + $0x1a0] sm:$0xff] %vm4247, %v4041
      %4301 = vst.msk [vmem:[%s228 + $0x1a8] sm:$0xff] %vm4247, %v4042
      %4302 = vst.msk [vmem:[%s228 + $0x1b0] sm:$0xff] %vm4247, %v4043
      %4303 = vst.msk [vmem:[%s228 + $0x1b8] sm:$0xff] %vm4247, %v4044
      %4304 = vst.msk [vmem:[%s228 + $0x1c0] sm:$0xff] %vm4247, %v4045
      %4305 = vst.msk [vmem:[%s228 + $0x1c8] sm:$0xff] %vm4247, %v4046
      %4306 = vst.msk [vmem:[%s228 + $0x1d0] sm:$0xff] %vm4247, %v4047
      %4307 = vst.msk [vmem:[%s228 + $0x1d8] sm:$0xff] %vm4247, %v4048
      %4308 = vst.msk [vmem:[%s228 + $0x1e0] sm:$0xff] %vm4247, %v4049
      %4309 = vst.msk [vmem:[%s228 + $0x1e8] sm:$0xff] %vm4247, %v4050
      %4310 = vst.msk [vmem:[%s228 + $0x1f0] sm:$0xff] %vm4247, %v4051
      %4311 = vst.msk [vmem:[%s228 + $0x1f8] sm:$0xff] %vm4247, %v4052
      %4312 = vst.msk [vmem:[%s228 + $0x200] sm:$0xff] %vm4247, %v4053
      %4313 = vst.msk [vmem:[%s228 + $0x208] sm:$0xff] %vm4247, %v4054
      %4314 = vst.msk [vmem:[%s228 + $0x210] sm:$0xff] %vm4247, %v4055
      %4315 = vst.msk [vmem:[%s228 + $0x218] sm:$0xff] %vm4247, %v4056
      %4316 = vst.msk [vmem:[%s228 + $0x220] sm:$0xff] %vm4247, %v4057
      %4317 = vst.msk [vmem:[%s228 + $0x228] sm:$0xff] %vm4247, %v4058
      %4318 = vst.msk [vmem:[%s228 + $0x230] sm:$0xff] %vm4247, %v4059
      %4319 = vst.msk [vmem:[%s228 + $0x238] sm:$0xff] %vm4247, %v4060
      %4320 = vst.msk [vmem:[%s228 + $0x240] sm:$0xff] %vm4247, %v4061
      %4321 = vst.msk [vmem:[%s228 + $0x248] sm:$0xff] %vm4247, %v4062
      %4322 = vst.msk [vmem:[%s228 + $0x250] sm:$0xff] %vm4247, %v4063
      %4323 = vst.msk [vmem:[%s228 + $0x258] sm:$0xff] %vm4247, %v4064
      %4324 = vst.msk [vmem:[%s228 + $0x260] sm:$0xff] %vm4247, %v4065
      %4325 = vst.msk [vmem:[%s228 + $0x268] sm:$0xff] %vm4247, %v4066
      %4326 = vst.msk [vmem:[%s228 + $0x270] sm:$0xff] %vm4247, %v4067
      %4327 = vst.msk [vmem:[%s228 + $0x278] sm:$0xff] %vm4247, %v4068
      %4328 = vst.msk [vmem:[%s228 + $0x280] sm:$0xff] %vm4247, %v4069
      %4329 = vst.msk [vmem:[%s228 + $0x288] sm:$0xff] %vm4247, %v4070
      %4330 = vst.msk [vmem:[%s228 + $0x290] sm:$0xff] %vm4247, %v4071
      %4331 = vst.msk [vmem:[%s228 + $0x298] sm:$0xff] %vm4247, %v4072
      %4332 = vst.msk [vmem:[%s228 + $0x2a0] sm:$0xff] %vm4247, %v4073
      %4333 = vst.msk [vmem:[%s228 + $0x2a8] sm:$0xff] %vm4247, %v4074
      %4334 = vst.msk [vmem:[%s228 + $0x2b0] sm:$0xff] %vm4247, %v4075
      %4335 = vst.msk [vmem:[%s228 + $0x2b8] sm:$0xff] %vm4247, %v4076
      %4336 = vst.msk [vmem:[%s228 + $0x2c0] sm:$0xff] %vm4247, %v4077
      %4337 = vst.msk [vmem:[%s228 + $0x2c8] sm:$0xff] %vm4247, %v4078
      %4338 = vst.msk [vmem:[%s228 + $0x2d0] sm:$0xff] %vm4247, %v4079
      %4339 = vst.msk [vmem:[%s228 + $0x2d8] sm:$0xff] %vm4247, %v4080
      %4340 = vst.msk [vmem:[%s228 + $0x2e0] sm:$0xff] %vm4247, %v4081
      %4341 = vst.msk [vmem:[%s228 + $0x2e8] sm:$0xff] %vm4247, %v4082
      %4342 = vst.msk [vmem:[%s228 + $0x2f0] sm:$0xff] %vm4247, %v4083
      %4343 = vst.msk [vmem:[%s228 + $0x2f8] sm:$0xff] %vm4247, %v4084
      %4344 = vst.msk [vmem:[%s228 + $0x300] sm:$0xff] %vm4247, %v4085
      %4345 = vst.msk [vmem:[%s228 + $0x308] sm:$0xff] %vm4247, %v4086
      %4346 = vst.msk [vmem:[%s228 + $0x310] sm:$0xff] %vm4247, %v4087
      %4347 = vst.msk [vmem:[%s228 + $0x318] sm:$0xff] %vm4247, %v4088
      %4348 = vst.msk [vmem:[%s228 + $0x320] sm:$0xff] %vm4247, %v4089
      %4349 = vst.msk [vmem:[%s228 + $0x328] sm:$0xff] %vm4247, %v4090
      %4350 = vst.msk [vmem:[%s228 + $0x330] sm:$0xff] %vm4247, %v4091
      %4351 = vst.msk [vmem:[%s228 + $0x338] sm:$0xff] %vm4247, %v4092
      %4352 = vst.msk [vmem:[%s228 + $0x340] sm:$0xff] %vm4247, %v4093
      %4353 = vst.msk [vmem:[%s228 + $0x348] sm:$0xff] %vm4247, %v4094
      %4354 = vst.msk [vmem:[%s228 + $0x350] sm:$0xff] %vm4247, %v4095
      %4355 = vst.msk [vmem:[%s228 + $0x358] sm:$0xff] %vm4247, %v4096
      %4356 = vst.msk [vmem:[%s228 + $0x360] sm:$0xff] %vm4247, %v4097
      %4357 = vst.msk [vmem:[%s228 + $0x368] sm:$0xff] %vm4247, %v4098
      %4358 = vst.msk [vmem:[%s228 + $0x370] sm:$0xff] %vm4247, %v4099
      %4359 = vst.msk [vmem:[%s228 + $0x378] sm:$0xff] %vm4247, %v4100
      %4360 = vst.msk [vmem:[%s228 + $0x380] sm:$0xff] %vm4247, %v4101
      %4361 = vst.msk [vmem:[%s228 + $0x388] sm:$0xff] %vm4247, %v4102
      %4362 = vst.msk [vmem:[%s228 + $0x390] sm:$0xff] %vm4247, %v4103
      %4363 = vst.msk [vmem:[%s228 + $0x398] sm:$0xff] %vm4247, %v4104
      %4364 = vst.msk [vmem:[%s228 + $0x3a0] sm:$0xff] %vm4247, %v4105
      %4365 = vst.msk [vmem:[%s228 + $0x3a8] sm:$0xff] %vm4247, %v4106
      %4366 = vst.msk [vmem:[%s228 + $0x3b0] sm:$0xff] %vm4247, %v4107
      %4367 = vst.msk [vmem:[%s228 + $0x3b8] sm:$0xff] %vm4247, %v4108
      %4368 = vst.msk [vmem:[%s228 + $0x3c0] sm:$0xff] %vm4247, %v4109
      %4369 = vst.msk [vmem:[%s228 + $0x3c8] sm:$0xff] %vm4247, %v4110
      %4370 = vst.msk [vmem:[%s228 + $0x3d0] sm:$0xff] %vm4247, %v4111
      %4371 = vst.msk [vmem:[%s228 + $0x3d8] sm:$0xff] %vm4247, %v4112
      %4372 = vst.msk [vmem:[%s228 + $0x3e0] sm:$0xff] %vm4247, %v4113
      %4373 = vst.msk [vmem:[%s228 + $0x3e8] sm:$0xff] %vm4247, %v4114
      %4374 = vst.msk [vmem:[%s228 + $0x3f0] sm:$0xff] %vm4247, %v4115
      %4375 = vst.msk [vmem:[%s228 + $0x3f8] sm:$0xff] %vm4247, %v4116
      %s4376 = smul.u32 128, %s16
      %p4377 = scmp.lt.s32.totalorder %s4376, 511
      %s4378 = scalar_select %p4377, %s4376, 511
      %s4379 = smul.addr %s4378, 2
      %s4380 = smul.addr %s4379, 4
      %s4381 = scalar_lea.vmem %s5, %s4380
      // Predicated region
      $region41: #{tpu_custom_call.1} parent=39 // pred_check
        %p4382 = pneg %p144
      $region42: #{tpu_custom_call.1} parent=39 // pred_check_branch
        %4384 = sbr.rel (%p4382) target = $region44
      $region43: #{tpu_custom_call.1} parent=39 // pred_region
        %s4385 = smul.u32 128, %s16
      $region44: #{tpu_custom_call.1} parent=39 // pred_fallthru
        _
    $region40: #{tpu_custom_call.1} parent=5 // pred_fallthru
      _
    %p4386 = scmp.le.s32.totalorder 2, %s11
    // Predicated region
    $region45: #{tpu_custom_call.1} parent=5 // pred_check
      %p4387 = pneg %p4386
    $region46: #{tpu_custom_call.1} parent=5 // pred_check_branch
      %4389 = sbr.rel (%p4387) target = $region48
    $region47: #{tpu_custom_call.1} parent=5 // pred_region
      %s4390 = ssub.s32 %s11, 2
      // Predicated region
      $region49: #{tpu_custom_call.1} parent=47 // pred_check
        %p4391 = pneg %p150
      $region50: #{tpu_custom_call.1} parent=47 // pred_check_branch
        %4393 = sbr.rel (%p4391) target = $region52
      $region51: #{tpu_custom_call.1} parent=47 // pred_region
        %s4394 = smul.u32 128, %s17
        %p4395 = scmp.lt.s32.totalorder %s4394, 511
        %s4396 = scalar_select %p4395, %s4394, 511
        %s4397 = smul.addr %s4396, 2
        %s4398 = smul.addr %s4397, 4
        %s4399 = scalar_lea.vmem %s5, %s4398
      $region52: #{tpu_custom_call.1} parent=47 // pred_fallthru
        _
    $region48: #{tpu_custom_call.1} parent=5 // pred_fallthru
      _
  $region6: #{tpu_custom_call.1} parent=0 // loop_footer
    %s15 = sadd.s32 1, %s11
  $region7: #{tpu_custom_call.1} parent=0 // loop_footer_branch
    %10 = sbr.rel target = $region3
  $region8: #{tpu_custom_call.1} parent=0 // loop_exit
    _

</llo_original>
